<compile_context>
chip_gen: v7x
topology: tpu7x:2x2x1
jax: 0.10.0
libtpu: 0.0.40
codegen_flags: <defaults>
</compile_context>

<pallas_src>
import functools
import math

import jax
import jax.numpy as jnp
from jax.experimental import pallas as pl
from jax.experimental.pallas import tpu as pltpu

# ---- small, module-consistent hyper-parameters ----
BATCH = 2
SEQ = 8          # number of tokens
DIM = 32         # channel dim
DEPTH = 2
HEADS = 4
DIM_HEAD = 8
ALPHA = 0.5
BLOCK_NUM = 2
MLP_RATIO = 2

INNER = HEADS * DIM_HEAD          # 32
HIDDEN = DIM * MLP_RATIO          # 64
EPS = 1e-5


# ----------------------------- shared math helpers -----------------------------
def _layer_norm(x, g, b):
    mean = jnp.mean(x, axis=-1, keepdims=True)
    var = jnp.mean((x - mean) * (x - mean), axis=-1, keepdims=True)
    return (x - mean) * jax.lax.rsqrt(var + EPS) * g + b


def _softmax(x):
    m = jnp.max(x, axis=-1, keepdims=True)
    e = jnp.exp(x - m)
    return e / jnp.sum(e, axis=-1, keepdims=True)


def _gelu(x):
    # TODO(synk): PyTorch nn.GELU default uses exact erf; tanh approximation used here for EUP lowering.
    c = math.sqrt(2.0 / math.pi)
    return 0.5 * x * (1.0 + jnp.tanh(c * (x + 0.044715 * x * x * x)))


# ----------------------------- fused whole-model kernel -----------------------------
def scheme_transformer_kernel(x_ref, wqkv_ref, wo_ref, w1_ref, w2_ref, vec_ref,
                              o_ref, *, depth, alpha):
    x = x_ref[0]                                           # (N, D): one batch element per grid step

    for l in range(depth):                                 # depth fused: x stays resident across layers
        vec = vec_ref[l]                                   # (8, 128) packed LN/bias slab
        ln1_g, ln1_b = vec[0:1, :DIM], vec[1:2, :DIM]
        bo = vec[2:3, :DIM]
        ln2_g, ln2_b = vec[3:4, :DIM], vec[4:5, :DIM]
        b1 = vec[5:6, :HIDDEN]
        b2 = vec[6:7, :DIM]

        # ---- PreNorm + multi-head self-attention + residual ----
        xn = _layer_norm(x, ln1_g, ln1_b)                  # (N, D)
        xh = jnp.broadcast_to(xn, (HEADS,) + xn.shape)     # (H, N, D): cheap leading-dim broadcast
        wq = wqkv_ref[3 * l + 0]                           # (H, Dh, D)  (softmax scale folded in)
        wk = wqkv_ref[3 * l + 1]
        wv = wqkv_ref[3 * l + 2]
        q = jnp.einsum('hnd,hkd->hnk', xh, wq, preferred_element_type=jnp.float32)    # (H, N, Dh)
        k = jnp.einsum('hnd,hkd->hnk', xh, wk, preferred_element_type=jnp.float32)
        v = jnp.einsum('hnd,hkd->hnk', xh, wv, preferred_element_type=jnp.float32)
        scores = jnp.einsum('hnk,hmk->hnm', q, k, preferred_element_type=jnp.float32)  # (H, N, N)
        attn = _softmax(scores)
        ctx = jnp.einsum('hnm,hmk->hnk', attn, v, preferred_element_type=jnp.float32)  # (H, N, Dh)
        proj = jnp.einsum('hnk,hko->hno', ctx, wo_ref[l],
                          preferred_element_type=jnp.float32)                          # (H, N, D)
        attn_out = proj[0]
        for hh in range(1, HEADS):                         # head-sum == concat + dense out-projection
            attn_out = attn_out + proj[hh]
        x = x + attn_out + bo

        # ---- PreNorm + SCHEME channel mixer + residual ----
        xn2 = _layer_norm(x, ln2_g, ln2_b)
        # TODO(synk): w1/w2 are block-diagonal (grouped 1x1 conv); kept dense here (negligible at toy size).
        h = _gelu(jnp.dot(xn2, w1_ref[l], preferred_element_type=jnp.float32) + b1)    # (N, HID)

        # CCA branch: channel-covariance attention on the expanded features.
        inv_norm = jax.lax.rsqrt(jnp.sum(h * h, axis=0, keepdims=True) + 1e-6)         # (1, HID)
        hn = h * inv_norm                                                               # L2-normalized channels
        cov = jnp.dot(hn.T, hn, preferred_element_type=jnp.float32)                     # (HID, HID)
        ca = _softmax(cov)
        # h @ ca^T expressed via dimension_numbers (rhs-transposed contraction, no explicit .T).
        h_cca = jax.lax.dot_general(h, ca, (((1,), (1,)), ((), ())),
                                    preferred_element_type=jnp.float32)                 # (N, HID)
        h_mix = alpha * h + (1.0 - alpha) * h_cca
        y = jnp.dot(h_mix, w2_ref[l], preferred_element_type=jnp.float32) + b2
        x = x + y

    # TODO(synk): output store is 32-lane (masked vst); full lane-dense re-layout skipped at this size.
    o_ref[0] = x


# ----------------------------- wrapper / glue -----------------------------
def scheme_transformer(x, packed):
    """Single fused pallas_call over all layers. grid=(B,) -> one batch element per TC on v7x."""
    B, N, D = x.shape
    wqkv, wo, w1, w2, vecs = packed

    def const_spec(a):
        return pl.BlockSpec(a.shape, lambda b, nd=a.ndim: (0,) * nd)

    return pl.pallas_call(
        functools.partial(scheme_transformer_kernel, depth=DEPTH, alpha=ALPHA),
        out_shape=jax.ShapeDtypeStruct((B, N, D), jnp.float32),
        grid=(B,),
        in_specs=[pl.BlockSpec((1, N, D), lambda b: (b, 0, 0)),
                  const_spec(wqkv), const_spec(wo),
                  const_spec(w1), const_spec(w2), const_spec(vecs)],
        out_specs=pl.BlockSpec((1, N, D), lambda b: (b, 0, 0)),
        compiler_params=pltpu.CompilerParams(dimension_semantics=("parallel",)),
    )(x, wqkv, wo, w1, w2, vecs)


def init_layer_params(key):
    ks = jax.random.split(key, 4)

    def rn(k, shape, scale):
        return jax.random.normal(k, shape, jnp.float32) * scale

    p = {
        "ln1_g": jnp.ones((1, DIM), jnp.float32),
        "ln1_b": jnp.zeros((1, DIM), jnp.float32),
        "wqkv": rn(ks[0], (DIM, 3 * INNER), DIM ** -0.5),
        "wo": rn(ks[1], (INNER, DIM), INNER ** -0.5),
        "bo": jnp.zeros((1, DIM), jnp.float32),
        "ln2_g": jnp.ones((1, DIM), jnp.float32),
        "ln2_b": jnp.zeros((1, DIM), jnp.float32),
        "b1": jnp.zeros((1, HIDDEN), jnp.float32),
        "b2": jnp.zeros((1, DIM), jnp.float32),
    }
    # Block-diagonal grouped linears (Conv1d(k=1, groups=BLOCK_NUM)) materialized dense.
    din_g, hid_g = DIM // BLOCK_NUM, HIDDEN // BLOCK_NUM
    w1 = jnp.zeros((DIM, HIDDEN), jnp.float32)
    w2 = jnp.zeros((HIDDEN, DIM), jnp.float32)
    for g in range(BLOCK_NUM):
        blk1 = rn(jax.random.fold_in(ks[2], g), (din_g, hid_g), din_g ** -0.5)
        blk2 = rn(jax.random.fold_in(ks[3], g), (hid_g, din_g), hid_g ** -0.5)
        w1 = w1.at[g * din_g:(g + 1) * din_g, g * hid_g:(g + 1) * hid_g].set(blk1)
        w2 = w2.at[g * hid_g:(g + 1) * hid_g, g * din_g:(g + 1) * din_g].set(blk2)
    p["w1"] = w1
    p["w2"] = w2
    return p


def pack_params(layer_params):
    """Pack per-layer dicts into a few stacked, lane-dense arrays for the fused kernel."""
    scale = DIM_HEAD ** -0.5
    wqkv_l, wo_l, w1_l, w2_l, vec_l = [], [], [], [], []

    def to_heads(w):                      # (DIM, INNER) -> (HEADS, DIM_HEAD, DIM)
        return jnp.transpose(w.reshape(DIM, HEADS, DIM_HEAD), (1, 2, 0))

    for p in layer_params:
        wqkv = p["wqkv"]
        wqkv_l += [to_heads(wqkv[:, :INNER] * scale),          # 1/sqrt(dh) folded into Q weights
                   to_heads(wqkv[:, INNER:2 * INNER]),
                   to_heads(wqkv[:, 2 * INNER:])]
        wo_l.append(p["wo"].reshape(HEADS, DIM_HEAD, DIM))
        w1_l.append(p["w1"])
        w2_l.append(p["w2"])
        vec = jnp.zeros((8, 128), jnp.float32)
        vec = vec.at[0, :DIM].set(p["ln1_g"][0])
        vec = vec.at[1, :DIM].set(p["ln1_b"][0])
        vec = vec.at[2, :DIM].set(p["bo"][0])
        vec = vec.at[3, :DIM].set(p["ln2_g"][0])
        vec = vec.at[4, :DIM].set(p["ln2_b"][0])
        vec = vec.at[5, :HIDDEN].set(p["b1"][0])
        vec = vec.at[6, :DIM].set(p["b2"][0])
        vec_l.append(vec)

    return (jnp.stack(wqkv_l),   # (DEPTH*3, HEADS, DIM_HEAD, DIM)
            jnp.stack(wo_l),     # (DEPTH, HEADS, DIM_HEAD, DIM)
            jnp.stack(w1_l),     # (DEPTH, DIM, HIDDEN)
            jnp.stack(w2_l),     # (DEPTH, HIDDEN, DIM)
            jnp.stack(vec_l))    # (DEPTH, 8, 128)


# ----------------------------- pure-JAX reference (sanity only) -----------------------------
def reference_forward(x, layer_params):
    hp = jax.lax.Precision.HIGHEST
    scale = DIM_HEAD ** -0.5
    B = x.shape[0]
    for p in layer_params:
        xn = _layer_norm(x, p["ln1_g"], p["ln1_b"])
        qkv = jnp.einsum('bnd,de->bne', xn, p["wqkv"], precision=hp)
        q, k, v = qkv[..., :INNER], qkv[..., INNER:2 * INNER], qkv[..., 2 * INNER:]

        def split(t):
            return t.reshape(B, SEQ, HEADS, DIM_HEAD).transpose(0, 2, 1, 3)

        qh, kh, vh = split(q), split(k), split(v)
        dots = jnp.einsum('bhnd,bhmd->bhnm', qh, kh, precision=hp) * scale
        attn = _softmax(dots)
        ctx = jnp.einsum('bhnm,bhmd->bhnd', attn, vh, precision=hp)
        ctx = ctx.transpose(0, 2, 1, 3).reshape(B, SEQ, INNER)
        x = x + jnp.einsum('bni,io->bno', ctx, p["wo"], precision=hp) + p["bo"]

        xn2 = _layer_norm(x, p["ln2_g"], p["ln2_b"])
        h = _gelu(jnp.einsum('bnd,dh->bnh', xn2, p["w1"], precision=hp) + p["b1"])
        inv_norm = jax.lax.rsqrt(jnp.sum(h * h, axis=1, keepdims=True) + 1e-6)
        hn = h * inv_norm
        cov = jnp.einsum('bnh,bng->bhg', hn, hn, precision=hp)
        ca = _softmax(cov)
        h_cca = jnp.einsum('bnh,bgh->bng', h, ca, precision=hp)
        h_mix = ALPHA * h + (1.0 - ALPHA) * h_cca
        x = x + jnp.einsum('bnh,hd->bnd', h_mix, p["w2"], precision=hp) + p["b2"]
    return x


if __name__ == "__main__":
    key = jax.random.PRNGKey(0)
    x = jax.random.normal(jax.random.fold_in(key, 0), (BATCH, SEQ, DIM), jnp.float32)
    layer_params = [init_layer_params(jax.random.fold_in(key, i + 1)) for i in range(DEPTH)]
    packed = pack_params(layer_params)

    out = scheme_transformer(x, packed)
    jax.block_until_ready(out)
    assert out.shape == (BATCH, SEQ, DIM)

    # Loose sanity check only (MXU f32 accumulation order differs from XLA's reference matmuls).
    ref = reference_forward(x, layer_params)
    max_err = float(jnp.max(jnp.abs(out - ref)))
    assert max_err < 0.5, f"kernel diverges from reference: max abs err {max_err}"

    print("KERNEL_OK")
</pallas_src>

<mosaic_0001>
module attributes {stable_mosaic.version = 11 : i64} {
  func.func @scheme_transformer_kernel(%arg0: i32, %arg1: memref<1x8x32xf32, #tpu.memory_space<vmem>>, %arg2: memref<6x4x8x32xf32, #tpu.memory_space<vmem>>, %arg3: memref<2x4x8x32xf32, #tpu.memory_space<vmem>>, %arg4: memref<2x32x64xf32, #tpu.memory_space<vmem>>, %arg5: memref<2x64x32xf32, #tpu.memory_space<vmem>>, %arg6: memref<2x8x128xf32, #tpu.memory_space<vmem>>, %arg7: memref<1x8x32xf32, #tpu.memory_space<vmem>>) attributes {dimension_semantics = [#tpu.dimension_semantics<parallel>], iteration_bounds = array<i64: 2>, scalar_prefetch = 0 : i64, scratch_operands = 0 : i64, tpu.core_type = #tpu.core_type<tc>, window_params = [{transform_indices = @transform_0, window_bounds = array<i64: 1, 8, 32>}, {pipeline_mode = #tpu.pipeline_mode<synchronous>, transform_indices = @transform_1, window_bounds = array<i64: 6, 4, 8, 32>}, {pipeline_mode = #tpu.pipeline_mode<synchronous>, transform_indices = @transform_2, window_bounds = array<i64: 2, 4, 8, 32>}, {pipeline_mode = #tpu.pipeline_mode<synchronous>, transform_indices = @transform_3, window_bounds = array<i64: 2, 32, 64>}, {pipeline_mode = #tpu.pipeline_mode<synchronous>, transform_indices = @transform_4, window_bounds = array<i64: 2, 64, 32>}, {pipeline_mode = #tpu.pipeline_mode<synchronous>, transform_indices = @transform_5, window_bounds = array<i64: 2, 8, 128>}, {transform_indices = @transform_6, window_bounds = array<i64: 1, 8, 32>}]} {
    %c0 = arith.constant 0 : index
    %c0_0 = arith.constant 0 : index
    %c0_1 = arith.constant 0 : index
    %0 = vector.load %arg1[%c0, %c0_0, %c0_1] : memref<1x8x32xf32, #tpu.memory_space<vmem>>, vector<1x8x32xf32>
    %1 = vector.shape_cast %0 : vector<1x8x32xf32> to vector<8x32xf32>
    %c0_2 = arith.constant 0 : index
    %c0_3 = arith.constant 0 : index
    %c0_4 = arith.constant 0 : index
    %2 = vector.load %arg6[%c0_2, %c0_3, %c0_4] : memref<2x8x128xf32, #tpu.memory_space<vmem>>, vector<1x8x128xf32>
    %3 = vector.shape_cast %2 : vector<1x8x128xf32> to vector<8x128xf32>
    %4 = vector.extract_strided_slice %3 {offsets = [0, 0], sizes = [1, 32], strides = [1, 1]} : vector<8x128xf32> to vector<1x32xf32>
    %5 = vector.extract_strided_slice %3 {offsets = [1, 0], sizes = [1, 32], strides = [1, 1]} : vector<8x128xf32> to vector<1x32xf32>
    %6 = vector.extract_strided_slice %3 {offsets = [2, 0], sizes = [1, 32], strides = [1, 1]} : vector<8x128xf32> to vector<1x32xf32>
    %7 = vector.extract_strided_slice %3 {offsets = [3, 0], sizes = [1, 32], strides = [1, 1]} : vector<8x128xf32> to vector<1x32xf32>
    %8 = vector.extract_strided_slice %3 {offsets = [4, 0], sizes = [1, 32], strides = [1, 1]} : vector<8x128xf32> to vector<1x32xf32>
    %9 = vector.extract_strided_slice %3 {offsets = [5, 0], sizes = [1, 64], strides = [1, 1]} : vector<8x128xf32> to vector<1x64xf32>
    %10 = vector.extract_strided_slice %3 {offsets = [6, 0], sizes = [1, 32], strides = [1, 1]} : vector<8x128xf32> to vector<1x32xf32>
    %cst = arith.constant dense<0.000000e+00> : vector<8xf32>
    %11 = vector.multi_reduction <add>, %1, %cst [1] : vector<8x32xf32> to vector<8xf32>
    %12 = vector.shape_cast %11 : vector<8xf32> to vector<8x1xf32>
    %cst_5 = arith.constant 3.200000e+01 : f32
    %13 = vector.broadcast %cst_5 : f32 to vector<8x1xf32>
    %14 = arith.divf %12, %13 : vector<8x1xf32>
    %15 = vector.broadcast %14 : vector<8x1xf32> to vector<8x32xf32>
    %16 = arith.subf %1, %15 : vector<8x32xf32>
    %17 = vector.broadcast %14 : vector<8x1xf32> to vector<8x32xf32>
    %18 = arith.subf %1, %17 : vector<8x32xf32>
    %19 = arith.mulf %16, %18 : vector<8x32xf32>
    %cst_6 = arith.constant dense<0.000000e+00> : vector<8xf32>
    %20 = vector.multi_reduction <add>, %19, %cst_6 [1] : vector<8x32xf32> to vector<8xf32>
    %21 = vector.shape_cast %20 : vector<8xf32> to vector<8x1xf32>
    %cst_7 = arith.constant 3.200000e+01 : f32
    %22 = vector.broadcast %cst_7 : f32 to vector<8x1xf32>
    %23 = arith.divf %21, %22 : vector<8x1xf32>
    %24 = vector.broadcast %14 : vector<8x1xf32> to vector<8x32xf32>
    %25 = arith.subf %1, %24 : vector<8x32xf32>
    %cst_8 = arith.constant 9.99999974E-6 : f32
    %26 = vector.broadcast %cst_8 : f32 to vector<8x1xf32>
    %27 = arith.addf %23, %26 : vector<8x1xf32>
    %28 = math.rsqrt %27 : vector<8x1xf32>
    %29 = vector.broadcast %28 : vector<8x1xf32> to vector<8x32xf32>
    %30 = arith.mulf %25, %29 : vector<8x32xf32>
    %31 = vector.broadcast %4 : vector<1x32xf32> to vector<8x32xf32>
    %32 = arith.mulf %30, %31 : vector<8x32xf32>
    %33 = vector.broadcast %5 : vector<1x32xf32> to vector<8x32xf32>
    %34 = arith.addf %32, %33 : vector<8x32xf32>
    %35 = vector.shape_cast %34 : vector<8x32xf32> to vector<1x8x32xf32>
    %36 = vector.broadcast %35 : vector<1x8x32xf32> to vector<4x8x32xf32>
    %c0_9 = arith.constant 0 : index
    %c0_10 = arith.constant 0 : index
    %c0_11 = arith.constant 0 : index
    %c0_12 = arith.constant 0 : index
    %37 = vector.load %arg2[%c0_9, %c0_10, %c0_11, %c0_12] : memref<6x4x8x32xf32, #tpu.memory_space<vmem>>, vector<1x4x8x32xf32>
    %38 = vector.shape_cast %37 : vector<1x4x8x32xf32> to vector<4x8x32xf32>
    %c1 = arith.constant 1 : index
    %c0_13 = arith.constant 0 : index
    %c0_14 = arith.constant 0 : index
    %c0_15 = arith.constant 0 : index
    %39 = vector.load %arg2[%c1, %c0_13, %c0_14, %c0_15] : memref<6x4x8x32xf32, #tpu.memory_space<vmem>>, vector<1x4x8x32xf32>
    %40 = vector.shape_cast %39 : vector<1x4x8x32xf32> to vector<4x8x32xf32>
    %c2 = arith.constant 2 : index
    %c0_16 = arith.constant 0 : index
    %c0_17 = arith.constant 0 : index
    %c0_18 = arith.constant 0 : index
    %41 = vector.load %arg2[%c2, %c0_16, %c0_17, %c0_18] : memref<6x4x8x32xf32, #tpu.memory_space<vmem>>, vector<1x4x8x32xf32>
    %42 = vector.shape_cast %41 : vector<1x4x8x32xf32> to vector<4x8x32xf32>
    "tpu.trace_start"() <{level = 10 : i32, message = "hnd,hkd->hnk"}> : () -> ()
    %cst_19 = arith.constant dense<0.000000e+00> : vector<4x8x8xf32>
    %43 = tpu.matmul %36, %38, %cst_19 {dimension_numbers = #tpu.dot_dimension_numbers<[2], [2], [1], [1], [0, 0, 0, 1, 1, 1], [0], [0]>} : vector<4x8x32xf32>, vector<4x8x32xf32>, vector<4x8x8xf32> -> vector<4x8x8xf32>
    %cst_20 = arith.constant dense<0.000000e+00> : vector<4x8x8xf32>
    %44 = tpu.matmul %36, %40, %cst_20 {dimension_numbers = #tpu.dot_dimension_numbers<[2], [2], [1], [1], [0, 0, 0, 1, 1, 1], [0], [0]>} : vector<4x8x32xf32>, vector<4x8x32xf32>, vector<4x8x8xf32> -> vector<4x8x8xf32>
    %cst_21 = arith.constant dense<0.000000e+00> : vector<4x8x8xf32>
    %45 = tpu.matmul %36, %42, %cst_21 {dimension_numbers = #tpu.dot_dimension_numbers<[2], [2], [1], [1], [0, 0, 0, 1, 1, 1], [0], [0]>} : vector<4x8x32xf32>, vector<4x8x32xf32>, vector<4x8x8xf32> -> vector<4x8x8xf32>
    "tpu.trace_stop"() : () -> ()
    "tpu.trace_start"() <{level = 10 : i32, message = "hnk,hmk->hnm"}> : () -> ()
    %cst_22 = arith.constant dense<0.000000e+00> : vector<4x8x8xf32>
    %46 = tpu.matmul %43, %44, %cst_22 {dimension_numbers = #tpu.dot_dimension_numbers<[2], [2], [1], [1], [0, 0, 0, 1, 1, 1], [0], [0]>} : vector<4x8x8xf32>, vector<4x8x8xf32>, vector<4x8x8xf32> -> vector<4x8x8xf32>
    "tpu.trace_stop"() : () -> ()
    %cst_23 = arith.constant dense<0xFF800000> : vector<4x8xf32>
    %47 = vector.multi_reduction <maximumf>, %46, %cst_23 [2] : vector<4x8x8xf32> to vector<4x8xf32>
    %48 = vector.shape_cast %47 : vector<4x8xf32> to vector<4x8x1xf32>
    %49 = vector.broadcast %48 : vector<4x8x1xf32> to vector<4x8x8xf32>
    %50 = arith.subf %46, %49 : vector<4x8x8xf32>
    %51 = math.exp %50 : vector<4x8x8xf32>
    %cst_24 = arith.constant dense<0.000000e+00> : vector<4x8xf32>
    %52 = vector.multi_reduction <add>, %51, %cst_24 [2] : vector<4x8x8xf32> to vector<4x8xf32>
    %53 = vector.shape_cast %52 : vector<4x8xf32> to vector<4x8x1xf32>
    %54 = vector.broadcast %53 : vector<4x8x1xf32> to vector<4x8x8xf32>
    %55 = arith.divf %51, %54 : vector<4x8x8xf32>
    "tpu.trace_start"() <{level = 10 : i32, message = "hnm,hmk->hnk"}> : () -> ()
    %cst_25 = arith.constant dense<0.000000e+00> : vector<4x8x8xf32>
    %56 = tpu.matmul %55, %45, %cst_25 {dimension_numbers = #tpu.dot_dimension_numbers<[2], [1], [1], [2], [0, 0, 0, 1, 1, 2], [0], [0]>} : vector<4x8x8xf32>, vector<4x8x8xf32>, vector<4x8x8xf32> -> vector<4x8x8xf32>
    "tpu.trace_stop"() : () -> ()
    %c0_26 = arith.constant 0 : index
    %c0_27 = arith.constant 0 : index
    %c0_28 = arith.constant 0 : index
    %c0_29 = arith.constant 0 : index
    %57 = vector.load %arg3[%c0_26, %c0_27, %c0_28, %c0_29] : memref<2x4x8x32xf32, #tpu.memory_space<vmem>>, vector<1x4x8x32xf32>
    %58 = vector.shape_cast %57 : vector<1x4x8x32xf32> to vector<4x8x32xf32>
    "tpu.trace_start"() <{level = 10 : i32, message = "hnk,hko->hno"}> : () -> ()
    %cst_30 = arith.constant dense<0.000000e+00> : vector<4x8x32xf32>
    %59 = tpu.matmul %56, %58, %cst_30 {dimension_numbers = #tpu.dot_dimension_numbers<[2], [1], [1], [2], [0, 0, 0, 1, 1, 2], [0], [0]>} : vector<4x8x8xf32>, vector<4x8x32xf32>, vector<4x8x32xf32> -> vector<4x8x32xf32>
    "tpu.trace_stop"() : () -> ()
    %60 = vector.extract_strided_slice %59 {offsets = [0, 0, 0], sizes = [1, 8, 32], strides = [1, 1, 1]} : vector<4x8x32xf32> to vector<1x8x32xf32>
    %61 = vector.shape_cast %60 : vector<1x8x32xf32> to vector<8x32xf32>
    %62 = vector.extract_strided_slice %59 {offsets = [1, 0, 0], sizes = [1, 8, 32], strides = [1, 1, 1]} : vector<4x8x32xf32> to vector<1x8x32xf32>
    %63 = vector.shape_cast %62 : vector<1x8x32xf32> to vector<8x32xf32>
    %64 = arith.addf %61, %63 : vector<8x32xf32>
    %65 = vector.extract_strided_slice %59 {offsets = [2, 0, 0], sizes = [1, 8, 32], strides = [1, 1, 1]} : vector<4x8x32xf32> to vector<1x8x32xf32>
    %66 = vector.shape_cast %65 : vector<1x8x32xf32> to vector<8x32xf32>
    %67 = arith.addf %64, %66 : vector<8x32xf32>
    %68 = vector.extract_strided_slice %59 {offsets = [3, 0, 0], sizes = [1, 8, 32], strides = [1, 1, 1]} : vector<4x8x32xf32> to vector<1x8x32xf32>
    %69 = vector.shape_cast %68 : vector<1x8x32xf32> to vector<8x32xf32>
    %70 = arith.addf %67, %69 : vector<8x32xf32>
    %71 = arith.addf %1, %70 : vector<8x32xf32>
    %72 = vector.broadcast %6 : vector<1x32xf32> to vector<8x32xf32>
    %73 = arith.addf %71, %72 : vector<8x32xf32>
    %cst_31 = arith.constant dense<0.000000e+00> : vector<8xf32>
    %74 = vector.multi_reduction <add>, %73, %cst_31 [1] : vector<8x32xf32> to vector<8xf32>
    %75 = vector.shape_cast %74 : vector<8xf32> to vector<8x1xf32>
    %cst_32 = arith.constant 3.200000e+01 : f32
    %76 = vector.broadcast %cst_32 : f32 to vector<8x1xf32>
    %77 = arith.divf %75, %76 : vector<8x1xf32>
    %78 = vector.broadcast %77 : vector<8x1xf32> to vector<8x32xf32>
    %79 = arith.subf %73, %78 : vector<8x32xf32>
    %80 = vector.broadcast %77 : vector<8x1xf32> to vector<8x32xf32>
    %81 = arith.subf %73, %80 : vector<8x32xf32>
    %82 = arith.mulf %79, %81 : vector<8x32xf32>
    %cst_33 = arith.constant dense<0.000000e+00> : vector<8xf32>
    %83 = vector.multi_reduction <add>, %82, %cst_33 [1] : vector<8x32xf32> to vector<8xf32>
    %84 = vector.shape_cast %83 : vector<8xf32> to vector<8x1xf32>
    %cst_34 = arith.constant 3.200000e+01 : f32
    %85 = vector.broadcast %cst_34 : f32 to vector<8x1xf32>
    %86 = arith.divf %84, %85 : vector<8x1xf32>
    %87 = vector.broadcast %77 : vector<8x1xf32> to vector<8x32xf32>
    %88 = arith.subf %73, %87 : vector<8x32xf32>
    %cst_35 = arith.constant 9.99999974E-6 : f32
    %89 = vector.broadcast %cst_35 : f32 to vector<8x1xf32>
    %90 = arith.addf %86, %89 : vector<8x1xf32>
    %91 = math.rsqrt %90 : vector<8x1xf32>
    %92 = vector.broadcast %91 : vector<8x1xf32> to vector<8x32xf32>
    %93 = arith.mulf %88, %92 : vector<8x32xf32>
    %94 = vector.broadcast %7 : vector<1x32xf32> to vector<8x32xf32>
    %95 = arith.mulf %93, %94 : vector<8x32xf32>
    %96 = vector.broadcast %8 : vector<1x32xf32> to vector<8x32xf32>
    %97 = arith.addf %95, %96 : vector<8x32xf32>
    %c0_36 = arith.constant 0 : index
    %c0_37 = arith.constant 0 : index
    %c0_38 = arith.constant 0 : index
    %98 = vector.load %arg4[%c0_36, %c0_37, %c0_38] : memref<2x32x64xf32, #tpu.memory_space<vmem>>, vector<1x32x64xf32>
    %99 = vector.shape_cast %98 : vector<1x32x64xf32> to vector<32x64xf32>
    %cst_39 = arith.constant dense<0.000000e+00> : vector<8x64xf32>
    %100 = tpu.matmul %97, %99, %cst_39 {dimension_numbers = #tpu.dot_dimension_numbers<[1], [0], [0], [1], [0, 0, 1, 1], [], []>} : vector<8x32xf32>, vector<32x64xf32>, vector<8x64xf32> -> vector<8x64xf32>
    %101 = vector.broadcast %9 : vector<1x64xf32> to vector<8x64xf32>
    %102 = arith.addf %100, %101 : vector<8x64xf32>
    %cst_40 = arith.constant 5.000000e-01 : f32
    %103 = vector.broadcast %cst_40 : f32 to vector<8x64xf32>
    %104 = arith.mulf %103, %102 : vector<8x64xf32>
    %cst_41 = arith.constant 4.471500e-02 : f32
    %105 = vector.broadcast %cst_41 : f32 to vector<8x64xf32>
    %106 = arith.mulf %105, %102 : vector<8x64xf32>
    %107 = arith.mulf %106, %102 : vector<8x64xf32>
    %108 = arith.mulf %107, %102 : vector<8x64xf32>
    %109 = arith.addf %102, %108 : vector<8x64xf32>
    %cst_42 = arith.constant 0.797884583 : f32
    %110 = vector.broadcast %cst_42 : f32 to vector<8x64xf32>
    %111 = arith.mulf %110, %109 : vector<8x64xf32>
    %112 = math.tanh %111 : vector<8x64xf32>
    %cst_43 = arith.constant 1.000000e+00 : f32
    %113 = vector.broadcast %cst_43 : f32 to vector<8x64xf32>
    %114 = arith.addf %113, %112 : vector<8x64xf32>
    %115 = arith.mulf %104, %114 : vector<8x64xf32>
    %116 = arith.mulf %115, %115 : vector<8x64xf32>
    %cst_44 = arith.constant dense<0.000000e+00> : vector<64xf32>
    %117 = vector.multi_reduction <add>, %116, %cst_44 [0] : vector<8x64xf32> to vector<64xf32>
    %118 = vector.shape_cast %117 : vector<64xf32> to vector<1x64xf32>
    %cst_45 = arith.constant 9.99999997E-7 : f32
    %119 = vector.broadcast %cst_45 : f32 to vector<1x64xf32>
    %120 = arith.addf %118, %119 : vector<1x64xf32>
    %121 = math.rsqrt %120 : vector<1x64xf32>
    %122 = vector.broadcast %121 : vector<1x64xf32> to vector<8x64xf32>
    %123 = arith.mulf %115, %122 : vector<8x64xf32>
    %124 = tpu.transpose %123, [1, 0] : vector<8x64xf32> -> vector<64x8xf32>
    %cst_46 = arith.constant dense<0.000000e+00> : vector<64x64xf32>
    %125 = tpu.matmul %124, %123, %cst_46 {dimension_numbers = #tpu.dot_dimension_numbers<[1], [0], [0], [1], [0, 0, 1, 1], [], []>} : vector<64x8xf32>, vector<8x64xf32>, vector<64x64xf32> -> vector<64x64xf32>
    %cst_47 = arith.constant dense<0xFF800000> : vector<64xf32>
    %126 = vector.multi_reduction <maximumf>, %125, %cst_47 [1] : vector<64x64xf32> to vector<64xf32>
    %127 = vector.shape_cast %126 : vector<64xf32> to vector<64x1xf32>
    %128 = vector.broadcast %127 : vector<64x1xf32> to vector<64x64xf32>
    %129 = arith.subf %125, %128 : vector<64x64xf32>
    %130 = math.exp %129 : vector<64x64xf32>
    %cst_48 = arith.constant dense<0.000000e+00> : vector<64xf32>
    %131 = vector.multi_reduction <add>, %130, %cst_48 [1] : vector<64x64xf32> to vector<64xf32>
    %132 = vector.shape_cast %131 : vector<64xf32> to vector<64x1xf32>
    %133 = vector.broadcast %132 : vector<64x1xf32> to vector<64x64xf32>
    %134 = arith.divf %130, %133 : vector<64x64xf32>
    %cst_49 = arith.constant dense<0.000000e+00> : vector<8x64xf32>
    %135 = tpu.matmul %115, %134, %cst_49 {dimension_numbers = #tpu.dot_dimension_numbers<[1], [1], [0], [0], [0, 0, 1, 0], [], []>} : vector<8x64xf32>, vector<64x64xf32>, vector<8x64xf32> -> vector<8x64xf32>
    %cst_50 = arith.constant 5.000000e-01 : f32
    %136 = vector.broadcast %cst_50 : f32 to vector<8x64xf32>
    %137 = arith.mulf %136, %115 : vector<8x64xf32>
    %cst_51 = arith.constant 5.000000e-01 : f32
    %138 = vector.broadcast %cst_51 : f32 to vector<8x64xf32>
    %139 = arith.mulf %138, %135 : vector<8x64xf32>
    %140 = arith.addf %137, %139 : vector<8x64xf32>
    %c0_52 = arith.constant 0 : index
    %c0_53 = arith.constant 0 : index
    %c0_54 = arith.constant 0 : index
    %141 = vector.load %arg5[%c0_52, %c0_53, %c0_54] : memref<2x64x32xf32, #tpu.memory_space<vmem>>, vector<1x64x32xf32>
    %142 = vector.shape_cast %141 : vector<1x64x32xf32> to vector<64x32xf32>
    %cst_55 = arith.constant dense<0.000000e+00> : vector<8x32xf32>
    %143 = tpu.matmul %140, %142, %cst_55 {dimension_numbers = #tpu.dot_dimension_numbers<[1], [0], [0], [1], [0, 0, 1, 1], [], []>} : vector<8x64xf32>, vector<64x32xf32>, vector<8x32xf32> -> vector<8x32xf32>
    %144 = vector.broadcast %10 : vector<1x32xf32> to vector<8x32xf32>
    %145 = arith.addf %143, %144 : vector<8x32xf32>
    %146 = arith.addf %73, %145 : vector<8x32xf32>
    %c1_56 = arith.constant 1 : index
    %c0_57 = arith.constant 0 : index
    %c0_58 = arith.constant 0 : index
    %147 = vector.load %arg6[%c1_56, %c0_57, %c0_58] : memref<2x8x128xf32, #tpu.memory_space<vmem>>, vector<1x8x128xf32>
    %148 = vector.shape_cast %147 : vector<1x8x128xf32> to vector<8x128xf32>
    %149 = vector.extract_strided_slice %148 {offsets = [0, 0], sizes = [1, 32], strides = [1, 1]} : vector<8x128xf32> to vector<1x32xf32>
    %150 = vector.extract_strided_slice %148 {offsets = [1, 0], sizes = [1, 32], strides = [1, 1]} : vector<8x128xf32> to vector<1x32xf32>
    %151 = vector.extract_strided_slice %148 {offsets = [2, 0], sizes = [1, 32], strides = [1, 1]} : vector<8x128xf32> to vector<1x32xf32>
    %152 = vector.extract_strided_slice %148 {offsets = [3, 0], sizes = [1, 32], strides = [1, 1]} : vector<8x128xf32> to vector<1x32xf32>
    %153 = vector.extract_strided_slice %148 {offsets = [4, 0], sizes = [1, 32], strides = [1, 1]} : vector<8x128xf32> to vector<1x32xf32>
    %154 = vector.extract_strided_slice %148 {offsets = [5, 0], sizes = [1, 64], strides = [1, 1]} : vector<8x128xf32> to vector<1x64xf32>
    %155 = vector.extract_strided_slice %148 {offsets = [6, 0], sizes = [1, 32], strides = [1, 1]} : vector<8x128xf32> to vector<1x32xf32>
    %cst_59 = arith.constant dense<0.000000e+00> : vector<8xf32>
    %156 = vector.multi_reduction <add>, %146, %cst_59 [1] : vector<8x32xf32> to vector<8xf32>
    %157 = vector.shape_cast %156 : vector<8xf32> to vector<8x1xf32>
    %cst_60 = arith.constant 3.200000e+01 : f32
    %158 = vector.broadcast %cst_60 : f32 to vector<8x1xf32>
    %159 = arith.divf %157, %158 : vector<8x1xf32>
    %160 = vector.broadcast %159 : vector<8x1xf32> to vector<8x32xf32>
    %161 = arith.subf %146, %160 : vector<8x32xf32>
    %162 = vector.broadcast %159 : vector<8x1xf32> to vector<8x32xf32>
    %163 = arith.subf %146, %162 : vector<8x32xf32>
    %164 = arith.mulf %161, %163 : vector<8x32xf32>
    %cst_61 = arith.constant dense<0.000000e+00> : vector<8xf32>
    %165 = vector.multi_reduction <add>, %164, %cst_61 [1] : vector<8x32xf32> to vector<8xf32>
    %166 = vector.shape_cast %165 : vector<8xf32> to vector<8x1xf32>
    %cst_62 = arith.constant 3.200000e+01 : f32
    %167 = vector.broadcast %cst_62 : f32 to vector<8x1xf32>
    %168 = arith.divf %166, %167 : vector<8x1xf32>
    %169 = vector.broadcast %159 : vector<8x1xf32> to vector<8x32xf32>
    %170 = arith.subf %146, %169 : vector<8x32xf32>
    %cst_63 = arith.constant 9.99999974E-6 : f32
    %171 = vector.broadcast %cst_63 : f32 to vector<8x1xf32>
    %172 = arith.addf %168, %171 : vector<8x1xf32>
    %173 = math.rsqrt %172 : vector<8x1xf32>
    %174 = vector.broadcast %173 : vector<8x1xf32> to vector<8x32xf32>
    %175 = arith.mulf %170, %174 : vector<8x32xf32>
    %176 = vector.broadcast %149 : vector<1x32xf32> to vector<8x32xf32>
    %177 = arith.mulf %175, %176 : vector<8x32xf32>
    %178 = vector.broadcast %150 : vector<1x32xf32> to vector<8x32xf32>
    %179 = arith.addf %177, %178 : vector<8x32xf32>
    %180 = vector.shape_cast %179 : vector<8x32xf32> to vector<1x8x32xf32>
    %181 = vector.broadcast %180 : vector<1x8x32xf32> to vector<4x8x32xf32>
    %c3 = arith.constant 3 : index
    %c0_64 = arith.constant 0 : index
    %c0_65 = arith.constant 0 : index
    %c0_66 = arith.constant 0 : index
    %182 = vector.load %arg2[%c3, %c0_64, %c0_65, %c0_66] : memref<6x4x8x32xf32, #tpu.memory_space<vmem>>, vector<1x4x8x32xf32>
    %183 = vector.shape_cast %182 : vector<1x4x8x32xf32> to vector<4x8x32xf32>
    %c4 = arith.constant 4 : index
    %c0_67 = arith.constant 0 : index
    %c0_68 = arith.constant 0 : index
    %c0_69 = arith.constant 0 : index
    %184 = vector.load %arg2[%c4, %c0_67, %c0_68, %c0_69] : memref<6x4x8x32xf32, #tpu.memory_space<vmem>>, vector<1x4x8x32xf32>
    %185 = vector.shape_cast %184 : vector<1x4x8x32xf32> to vector<4x8x32xf32>
    %c5 = arith.constant 5 : index
    %c0_70 = arith.constant 0 : index
    %c0_71 = arith.constant 0 : index
    %c0_72 = arith.constant 0 : index
    %186 = vector.load %arg2[%c5, %c0_70, %c0_71, %c0_72] : memref<6x4x8x32xf32, #tpu.memory_space<vmem>>, vector<1x4x8x32xf32>
    %187 = vector.shape_cast %186 : vector<1x4x8x32xf32> to vector<4x8x32xf32>
    "tpu.trace_start"() <{level = 10 : i32, message = "hnd,hkd->hnk"}> : () -> ()
    %cst_73 = arith.constant dense<0.000000e+00> : vector<4x8x8xf32>
    %188 = tpu.matmul %181, %183, %cst_73 {dimension_numbers = #tpu.dot_dimension_numbers<[2], [2], [1], [1], [0, 0, 0, 1, 1, 1], [0], [0]>} : vector<4x8x32xf32>, vector<4x8x32xf32>, vector<4x8x8xf32> -> vector<4x8x8xf32>
    %cst_74 = arith.constant dense<0.000000e+00> : vector<4x8x8xf32>
    %189 = tpu.matmul %181, %185, %cst_74 {dimension_numbers = #tpu.dot_dimension_numbers<[2], [2], [1], [1], [0, 0, 0, 1, 1, 1], [0], [0]>} : vector<4x8x32xf32>, vector<4x8x32xf32>, vector<4x8x8xf32> -> vector<4x8x8xf32>
    %cst_75 = arith.constant dense<0.000000e+00> : vector<4x8x8xf32>
    %190 = tpu.matmul %181, %187, %cst_75 {dimension_numbers = #tpu.dot_dimension_numbers<[2], [2], [1], [1], [0, 0, 0, 1, 1, 1], [0], [0]>} : vector<4x8x32xf32>, vector<4x8x32xf32>, vector<4x8x8xf32> -> vector<4x8x8xf32>
    "tpu.trace_stop"() : () -> ()
    "tpu.trace_start"() <{level = 10 : i32, message = "hnk,hmk->hnm"}> : () -> ()
    %cst_76 = arith.constant dense<0.000000e+00> : vector<4x8x8xf32>
    %191 = tpu.matmul %188, %189, %cst_76 {dimension_numbers = #tpu.dot_dimension_numbers<[2], [2], [1], [1], [0, 0, 0, 1, 1, 1], [0], [0]>} : vector<4x8x8xf32>, vector<4x8x8xf32>, vector<4x8x8xf32> -> vector<4x8x8xf32>
    "tpu.trace_stop"() : () -> ()
    %cst_77 = arith.constant dense<0xFF800000> : vector<4x8xf32>
    %192 = vector.multi_reduction <maximumf>, %191, %cst_77 [2] : vector<4x8x8xf32> to vector<4x8xf32>
    %193 = vector.shape_cast %192 : vector<4x8xf32> to vector<4x8x1xf32>
    %194 = vector.broadcast %193 : vector<4x8x1xf32> to vector<4x8x8xf32>
    %195 = arith.subf %191, %194 : vector<4x8x8xf32>
    %196 = math.exp %195 : vector<4x8x8xf32>
    %cst_78 = arith.constant dense<0.000000e+00> : vector<4x8xf32>
    %197 = vector.multi_reduction <add>, %196, %cst_78 [2] : vector<4x8x8xf32> to vector<4x8xf32>
    %198 = vector.shape_cast %197 : vector<4x8xf32> to vector<4x8x1xf32>
    %199 = vector.broadcast %198 : vector<4x8x1xf32> to vector<4x8x8xf32>
    %200 = arith.divf %196, %199 : vector<4x8x8xf32>
    "tpu.trace_start"() <{level = 10 : i32, message = "hnm,hmk->hnk"}> : () -> ()
    %cst_79 = arith.constant dense<0.000000e+00> : vector<4x8x8xf32>
    %201 = tpu.matmul %200, %190, %cst_79 {dimension_numbers = #tpu.dot_dimension_numbers<[2], [1], [1], [2], [0, 0, 0, 1, 1, 2], [0], [0]>} : vector<4x8x8xf32>, vector<4x8x8xf32>, vector<4x8x8xf32> -> vector<4x8x8xf32>
    "tpu.trace_stop"() : () -> ()
    %c1_80 = arith.constant 1 : index
    %c0_81 = arith.constant 0 : index
    %c0_82 = arith.constant 0 : index
    %c0_83 = arith.constant 0 : index
    %202 = vector.load %arg3[%c1_80, %c0_81, %c0_82, %c0_83] : memref<2x4x8x32xf32, #tpu.memory_space<vmem>>, vector<1x4x8x32xf32>
    %203 = vector.shape_cast %202 : vector<1x4x8x32xf32> to vector<4x8x32xf32>
    "tpu.trace_start"() <{level = 10 : i32, message = "hnk,hko->hno"}> : () -> ()
    %cst_84 = arith.constant dense<0.000000e+00> : vector<4x8x32xf32>
    %204 = tpu.matmul %201, %203, %cst_84 {dimension_numbers = #tpu.dot_dimension_numbers<[2], [1], [1], [2], [0, 0, 0, 1, 1, 2], [0], [0]>} : vector<4x8x8xf32>, vector<4x8x32xf32>, vector<4x8x32xf32> -> vector<4x8x32xf32>
    "tpu.trace_stop"() : () -> ()
    %205 = vector.extract_strided_slice %204 {offsets = [0, 0, 0], sizes = [1, 8, 32], strides = [1, 1, 1]} : vector<4x8x32xf32> to vector<1x8x32xf32>
    %206 = vector.shape_cast %205 : vector<1x8x32xf32> to vector<8x32xf32>
    %207 = vector.extract_strided_slice %204 {offsets = [1, 0, 0], sizes = [1, 8, 32], strides = [1, 1, 1]} : vector<4x8x32xf32> to vector<1x8x32xf32>
    %208 = vector.shape_cast %207 : vector<1x8x32xf32> to vector<8x32xf32>
    %209 = arith.addf %206, %208 : vector<8x32xf32>
    %210 = vector.extract_strided_slice %204 {offsets = [2, 0, 0], sizes = [1, 8, 32], strides = [1, 1, 1]} : vector<4x8x32xf32> to vector<1x8x32xf32>
    %211 = vector.shape_cast %210 : vector<1x8x32xf32> to vector<8x32xf32>
    %212 = arith.addf %209, %211 : vector<8x32xf32>
    %213 = vector.extract_strided_slice %204 {offsets = [3, 0, 0], sizes = [1, 8, 32], strides = [1, 1, 1]} : vector<4x8x32xf32> to vector<1x8x32xf32>
    %214 = vector.shape_cast %213 : vector<1x8x32xf32> to vector<8x32xf32>
    %215 = arith.addf %212, %214 : vector<8x32xf32>
    %216 = arith.addf %146, %215 : vector<8x32xf32>
    %217 = vector.broadcast %151 : vector<1x32xf32> to vector<8x32xf32>
    %218 = arith.addf %216, %217 : vector<8x32xf32>
    %cst_85 = arith.constant dense<0.000000e+00> : vector<8xf32>
    %219 = vector.multi_reduction <add>, %218, %cst_85 [1] : vector<8x32xf32> to vector<8xf32>
    %220 = vector.shape_cast %219 : vector<8xf32> to vector<8x1xf32>
    %cst_86 = arith.constant 3.200000e+01 : f32
    %221 = vector.broadcast %cst_86 : f32 to vector<8x1xf32>
    %222 = arith.divf %220, %221 : vector<8x1xf32>
    %223 = vector.broadcast %222 : vector<8x1xf32> to vector<8x32xf32>
    %224 = arith.subf %218, %223 : vector<8x32xf32>
    %225 = vector.broadcast %222 : vector<8x1xf32> to vector<8x32xf32>
    %226 = arith.subf %218, %225 : vector<8x32xf32>
    %227 = arith.mulf %224, %226 : vector<8x32xf32>
    %cst_87 = arith.constant dense<0.000000e+00> : vector<8xf32>
    %228 = vector.multi_reduction <add>, %227, %cst_87 [1] : vector<8x32xf32> to vector<8xf32>
    %229 = vector.shape_cast %228 : vector<8xf32> to vector<8x1xf32>
    %cst_88 = arith.constant 3.200000e+01 : f32
    %230 = vector.broadcast %cst_88 : f32 to vector<8x1xf32>
    %231 = arith.divf %229, %230 : vector<8x1xf32>
    %232 = vector.broadcast %222 : vector<8x1xf32> to vector<8x32xf32>
    %233 = arith.subf %218, %232 : vector<8x32xf32>
    %cst_89 = arith.constant 9.99999974E-6 : f32
    %234 = vector.broadcast %cst_89 : f32 to vector<8x1xf32>
    %235 = arith.addf %231, %234 : vector<8x1xf32>
    %236 = math.rsqrt %235 : vector<8x1xf32>
    %237 = vector.broadcast %236 : vector<8x1xf32> to vector<8x32xf32>
    %238 = arith.mulf %233, %237 : vector<8x32xf32>
    %239 = vector.broadcast %152 : vector<1x32xf32> to vector<8x32xf32>
    %240 = arith.mulf %238, %239 : vector<8x32xf32>
    %241 = vector.broadcast %153 : vector<1x32xf32> to vector<8x32xf32>
    %242 = arith.addf %240, %241 : vector<8x32xf32>
    %c1_90 = arith.constant 1 : index
    %c0_91 = arith.constant 0 : index
    %c0_92 = arith.constant 0 : index
    %243 = vector.load %arg4[%c1_90, %c0_91, %c0_92] : memref<2x32x64xf32, #tpu.memory_space<vmem>>, vector<1x32x64xf32>
    %244 = vector.shape_cast %243 : vector<1x32x64xf32> to vector<32x64xf32>
    %cst_93 = arith.constant dense<0.000000e+00> : vector<8x64xf32>
    %245 = tpu.matmul %242, %244, %cst_93 {dimension_numbers = #tpu.dot_dimension_numbers<[1], [0], [0], [1], [0, 0, 1, 1], [], []>} : vector<8x32xf32>, vector<32x64xf32>, vector<8x64xf32> -> vector<8x64xf32>
    %246 = vector.broadcast %154 : vector<1x64xf32> to vector<8x64xf32>
    %247 = arith.addf %245, %246 : vector<8x64xf32>
    %cst_94 = arith.constant 5.000000e-01 : f32
    %248 = vector.broadcast %cst_94 : f32 to vector<8x64xf32>
    %249 = arith.mulf %248, %247 : vector<8x64xf32>
    %cst_95 = arith.constant 4.471500e-02 : f32
    %250 = vector.broadcast %cst_95 : f32 to vector<8x64xf32>
    %251 = arith.mulf %250, %247 : vector<8x64xf32>
    %252 = arith.mulf %251, %247 : vector<8x64xf32>
    %253 = arith.mulf %252, %247 : vector<8x64xf32>
    %254 = arith.addf %247, %253 : vector<8x64xf32>
    %cst_96 = arith.constant 0.797884583 : f32
    %255 = vector.broadcast %cst_96 : f32 to vector<8x64xf32>
    %256 = arith.mulf %255, %254 : vector<8x64xf32>
    %257 = math.tanh %256 : vector<8x64xf32>
    %cst_97 = arith.constant 1.000000e+00 : f32
    %258 = vector.broadcast %cst_97 : f32 to vector<8x64xf32>
    %259 = arith.addf %258, %257 : vector<8x64xf32>
    %260 = arith.mulf %249, %259 : vector<8x64xf32>
    %261 = arith.mulf %260, %260 : vector<8x64xf32>
    %cst_98 = arith.constant dense<0.000000e+00> : vector<64xf32>
    %262 = vector.multi_reduction <add>, %261, %cst_98 [0] : vector<8x64xf32> to vector<64xf32>
    %263 = vector.shape_cast %262 : vector<64xf32> to vector<1x64xf32>
    %cst_99 = arith.constant 9.99999997E-7 : f32
    %264 = vector.broadcast %cst_99 : f32 to vector<1x64xf32>
    %265 = arith.addf %263, %264 : vector<1x64xf32>
    %266 = math.rsqrt %265 : vector<1x64xf32>
    %267 = vector.broadcast %266 : vector<1x64xf32> to vector<8x64xf32>
    %268 = arith.mulf %260, %267 : vector<8x64xf32>
    %269 = tpu.transpose %268, [1, 0] : vector<8x64xf32> -> vector<64x8xf32>
    %cst_100 = arith.constant dense<0.000000e+00> : vector<64x64xf32>
    %270 = tpu.matmul %269, %268, %cst_100 {dimension_numbers = #tpu.dot_dimension_numbers<[1], [0], [0], [1], [0, 0, 1, 1], [], []>} : vector<64x8xf32>, vector<8x64xf32>, vector<64x64xf32> -> vector<64x64xf32>
    %cst_101 = arith.constant dense<0xFF800000> : vector<64xf32>
    %271 = vector.multi_reduction <maximumf>, %270, %cst_101 [1] : vector<64x64xf32> to vector<64xf32>
    %272 = vector.shape_cast %271 : vector<64xf32> to vector<64x1xf32>
    %273 = vector.broadcast %272 : vector<64x1xf32> to vector<64x64xf32>
    %274 = arith.subf %270, %273 : vector<64x64xf32>
    %275 = math.exp %274 : vector<64x64xf32>
    %cst_102 = arith.constant dense<0.000000e+00> : vector<64xf32>
    %276 = vector.multi_reduction <add>, %275, %cst_102 [1] : vector<64x64xf32> to vector<64xf32>
    %277 = vector.shape_cast %276 : vector<64xf32> to vector<64x1xf32>
    %278 = vector.broadcast %277 : vector<64x1xf32> to vector<64x64xf32>
    %279 = arith.divf %275, %278 : vector<64x64xf32>
    %cst_103 = arith.constant dense<0.000000e+00> : vector<8x64xf32>
    %280 = tpu.matmul %260, %279, %cst_103 {dimension_numbers = #tpu.dot_dimension_numbers<[1], [1], [0], [0], [0, 0, 1, 0], [], []>} : vector<8x64xf32>, vector<64x64xf32>, vector<8x64xf32> -> vector<8x64xf32>
    %cst_104 = arith.constant 5.000000e-01 : f32
    %281 = vector.broadcast %cst_104 : f32 to vector<8x64xf32>
    %282 = arith.mulf %281, %260 : vector<8x64xf32>
    %cst_105 = arith.constant 5.000000e-01 : f32
    %283 = vector.broadcast %cst_105 : f32 to vector<8x64xf32>
    %284 = arith.mulf %283, %280 : vector<8x64xf32>
    %285 = arith.addf %282, %284 : vector<8x64xf32>
    %c1_106 = arith.constant 1 : index
    %c0_107 = arith.constant 0 : index
    %c0_108 = arith.constant 0 : index
    %286 = vector.load %arg5[%c1_106, %c0_107, %c0_108] : memref<2x64x32xf32, #tpu.memory_space<vmem>>, vector<1x64x32xf32>
    %287 = vector.shape_cast %286 : vector<1x64x32xf32> to vector<64x32xf32>
    %cst_109 = arith.constant dense<0.000000e+00> : vector<8x32xf32>
    %288 = tpu.matmul %285, %287, %cst_109 {dimension_numbers = #tpu.dot_dimension_numbers<[1], [0], [0], [1], [0, 0, 1, 1], [], []>} : vector<8x64xf32>, vector<64x32xf32>, vector<8x32xf32> -> vector<8x32xf32>
    %289 = vector.broadcast %155 : vector<1x32xf32> to vector<8x32xf32>
    %290 = arith.addf %288, %289 : vector<8x32xf32>
    %291 = arith.addf %218, %290 : vector<8x32xf32>
    %c0_110 = arith.constant 0 : index
    %c0_111 = arith.constant 0 : index
    %c0_112 = arith.constant 0 : index
    %292 = vector.load %arg7[%c0_110, %c0_111, %c0_112] : memref<1x8x32xf32, #tpu.memory_space<vmem>>, vector<1x8x32xf32>
    %293 = vector.shape_cast %292 : vector<1x8x32xf32> to vector<8x32xf32>
    %294 = vector.shape_cast %291 : vector<8x32xf32> to vector<1x8x32xf32>
    tpu.vector_store %arg7[%c0_110, %c0_111, %c0_112], %294 {strides = array<i32>} : memref<1x8x32xf32, #tpu.memory_space<vmem>>, vector<1x8x32xf32>,
    return
  }
  func.func @transform_0(%arg0: i32) -> (i32, i32, i32) {
    %c0_i32 = arith.constant 0 : i32
    %c0_i32_0 = arith.constant 0 : i32
    %c0_i32_1 = arith.constant 0 : i32
    return %arg0, %c0_i32, %c0_i32_0 : i32, i32, i32
  }
  func.func @transform_1(%arg0: i32) -> (i32, i32, i32, i32) {
    %c0_i32 = arith.constant 0 : i32
    %c0_i32_0 = arith.constant 0 : i32
    %c0_i32_1 = arith.constant 0 : i32
    %c0_i32_2 = arith.constant 0 : i32
    %c0_i32_3 = arith.constant 0 : i32
    return %c0_i32, %c0_i32_0, %c0_i32_1, %c0_i32_2 : i32, i32, i32, i32
  }
  func.func @transform_2(%arg0: i32) -> (i32, i32, i32, i32) {
    %c0_i32 = arith.constant 0 : i32
    %c0_i32_0 = arith.constant 0 : i32
    %c0_i32_1 = arith.constant 0 : i32
    %c0_i32_2 = arith.constant 0 : i32
    %c0_i32_3 = arith.constant 0 : i32
    return %c0_i32, %c0_i32_0, %c0_i32_1, %c0_i32_2 : i32, i32, i32, i32
  }
  func.func @transform_3(%arg0: i32) -> (i32, i32, i32) {
    %c0_i32 = arith.constant 0 : i32
    %c0_i32_0 = arith.constant 0 : i32
    %c0_i32_1 = arith.constant 0 : i32
    %c0_i32_2 = arith.constant 0 : i32
    return %c0_i32, %c0_i32_0, %c0_i32_1 : i32, i32, i32
  }
  func.func @transform_4(%arg0: i32) -> (i32, i32, i32) {
    %c0_i32 = arith.constant 0 : i32
    %c0_i32_0 = arith.constant 0 : i32
    %c0_i32_1 = arith.constant 0 : i32
    %c0_i32_2 = arith.constant 0 : i32
    return %c0_i32, %c0_i32_0, %c0_i32_1 : i32, i32, i32
  }
  func.func @transform_5(%arg0: i32) -> (i32, i32, i32) {
    %c0_i32 = arith.constant 0 : i32
    %c0_i32_0 = arith.constant 0 : i32
    %c0_i32_1 = arith.constant 0 : i32
    %c0_i32_2 = arith.constant 0 : i32
    return %c0_i32, %c0_i32_0, %c0_i32_1 : i32, i32, i32
  }
  func.func @transform_6(%arg0: i32) -> (i32, i32, i32) {
    %c0_i32 = arith.constant 0 : i32
    %c0_i32_0 = arith.constant 0 : i32
    %c0_i32_1 = arith.constant 0 : i32
    return %arg0, %c0_i32, %c0_i32_0 : i32, i32, i32
  }
}

</mosaic_0001>

<llo_original>
// kernel: tpu_custom_call.1
$region0: #{tpu_custom_call.1}
  #allocation0 [shape = 'u32[]', space=smem, size = 0x4, offset = 0x4, fixed_abs, tag = 'smem constant byte address 0x4 - core index']
  #allocation1 [shape = 'u32[144,128]{1,0:T(1,128)}', space=vmem, size = 0x12000, scoped, tag = 'internal scratch']
  %s0 = inlined_call_operand.hbm [shape: f32[2,8,32], index: 0, kind: input, shape index: {}]
  %s1 = inlined_call_operand.vmem [shape: f32[6,4,8,32], index: 1, kind: input, shape index: {}]
  %s2 = inlined_call_operand.hbm [shape: f32[2,4,8,32], index: 2, kind: input, shape index: {}]
  %s3 = inlined_call_operand.hbm [shape: f32[2,32,64], index: 3, kind: input, shape index: {}]
  %s4 = inlined_call_operand.vmem [shape: f32[2,64,32], index: 4, kind: input, shape index: {}]
  %s5 = inlined_call_operand.vmem [shape: f32[2,8,128], index: 5, kind: input, shape index: {}]
  %s6 = inlined_call_operand.hbm [shape: f32[2,8,32], index: 6, kind: output, shape index: {}]
  %s7 = sld [smem:[#allocation0]]
  $region69: #{tpu_custom_call.1} parent=0
    _
  %s9 = ssub.s32 1, %s7
  %s10 = scalar_select 0, %s9, %s7
  $region1: #{tpu_custom_call.1} parent=0
    #allocation2 [shape = 'u8[8192]{0}', space=vmem, size = 0x2000, scoped, tag = 'input window, operand 0']
    #allocation3 [shape = 's32[2]{0}', space=sflag, size = 0x8, scoped, tag = 'scoped memory for tpu_custom_call.1']
    #allocation4 [shape = 's32[2]{0}', space=sflag, size = 0x8, scoped, tag = 'scoped memory for tpu_custom_call.1']
    #allocation5 [shape = 'u8[32768]{0}', space=vmem, size = 0x8000, scoped, tag = 'input window, operand 2, single buffered']
    #allocation6 [shape = 's32[1]{0}', space=sflag, size = 0x4, scoped, tag = 'scoped memory for tpu_custom_call.1']
    #allocation7 [shape = 'u8[32768]{0}', space=vmem, size = 0x8000, scoped, tag = 'input window, operand 3, single buffered']
    #allocation8 [shape = 'u8[8192]{0}', space=vmem, size = 0x2000, scoped, tag = 'output window, operand 0']
    %11 = vsyncpa [#allocation3], 0
    %s12 = scalar_lea.sflag [#allocation3], 1
    %13 = vsyncpa %s12, 0
    %14 = vsyncpa [#allocation6], 0
    %15 = vsyncpa [#allocation4], 0
    %s16 = scalar_lea.sflag [#allocation4], 1
    %17 = vsyncpa %s16, 0
    loop: start=0, step=1, limit=4
    $region2: #{tpu_custom_call.1} parent=1 // loop_pre_header
      _
    $region3: #{tpu_custom_call.1} parent=1 // loop_header
      %s19 = sphi 0, %s23
      %p20 = scmp.ge.s32.totalorder %s19, 4
      %s29 = sphi 0, %s31
      %s32 = sphi 0, %s29
      %s33 = sphi 0, %s32
      %s49 = sphi 0, %s33
      %s53 = sphi 0, %s53
      %s55 = sphi 0, %s53
      %s56 = sphi 0, %s55
      %s70 = sphi 0, %s56
      %s74 = sphi 0, %s74
      %s76 = sphi 0, %s74
      %s77 = sphi 0, %s76
      %s91 = sphi 0, %s77
      %s95 = sphi 0, %s95
      %s97 = sphi 0, %s95
      %s98 = sphi 0, %s97
      %s112 = sphi 0, %s98
      %s116 = sphi 0, %s116
      %s118 = sphi 0, %s116
      %s119 = sphi 0, %s118
      %s133 = sphi 0, %s119
      %s137 = sphi 0, %s137
      %s139 = sphi 0, %s137
      %s140 = sphi 0, %s139
      %s154 = sphi 0, %s140
      %s160 = sphi 0, %s162
      %s163 = sphi 0, %s160
      %s164 = sphi 0, %s163
      %s180 = sphi 0, %s164
    $region4: #{tpu_custom_call.1} parent=1 // loop_header_branch
      %22 = sbr.rel (%p20) target = $region8
    $region5: #{tpu_custom_call.1} parent=1 // loop_body
      %s24 = ssub.s32 %s19, 1
      %s25 = ssub.s32 %s19, 2
      %s26 = sadd.s32 %s19, 1
      %s27 = ssub.s32 %s19, %s26
      %p28 = scmp.eq.s32.totalorder %s27, 0
      %s30 = sadd.s32 %s29, 1
      %s31 = scalar_select %p28, %s29, %s30
      %p34 = pneg %p28
      %p35 = scmp.eq.s32.totalorder %s19, 1
      %p36 = por %p34, %p35
      %p37 = scmp.ne.s32.totalorder %s29, %s32
      %p38 = scmp.eq.s32.totalorder %s19, 0
      %p39 = por %p37, %p38
      %p40 = scmp.ne.s32.totalorder %s29, %s32
      %p41 = scmp.eq.s32.totalorder %s24, 1
      %p42 = por %p40, %p41
      %p43 = scmp.ne.s32.totalorder %s32, %s33
      %p44 = scmp.eq.s32.totalorder %s24, 0
      %p45 = por %p43, %p44
      %p46 = scmp.ne.s32.totalorder %s32, %s33
      %p47 = scmp.eq.s32.totalorder %s25, 1
      %p48 = por %p46, %p47
      %p50 = scmp.ne.s32.totalorder %s33, %s49
      %p51 = scmp.eq.s32.totalorder %s25, 0
      %p52 = por %p50, %p51
      %s54 = sadd.s32 %s53, 1
      %p57 = scmp.eq.s32.totalorder %s19, 1
      %p58 = scmp.ne.s32.totalorder %s53, %s55
      %p59 = scmp.eq.s32.totalorder %s19, 0
      %p60 = por %p58, %p59
      %p61 = scmp.ne.s32.totalorder %s53, %s55
      %p62 = scmp.eq.s32.totalorder %s24, 1
      %p63 = por %p61, %p62
      %p64 = scmp.ne.s32.totalorder %s55, %s56
      %p65 = scmp.eq.s32.totalorder %s24, 0
      %p66 = por %p64, %p65
      %p67 = scmp.ne.s32.totalorder %s55, %s56
      %p68 = scmp.eq.s32.totalorder %s25, 1
      %p69 = por %p67, %p68
      %p71 = scmp.ne.s32.totalorder %s56, %s70
      %p72 = scmp.eq.s32.totalorder %s25, 0
      %p73 = por %p71, %p72
      %s75 = sadd.s32 %s74, 1
      %p78 = scmp.eq.s32.totalorder %s19, 1
      %p79 = scmp.ne.s32.totalorder %s74, %s76
      %p80 = scmp.eq.s32.totalorder %s19, 0
      %p81 = por %p79, %p80
      %p82 = scmp.ne.s32.totalorder %s74, %s76
      %p83 = scmp.eq.s32.totalorder %s24, 1
      %p84 = por %p82, %p83
      %p85 = scmp.ne.s32.totalorder %s76, %s77
      %p86 = scmp.eq.s32.totalorder %s24, 0
      %p87 = por %p85, %p86
      %p88 = scmp.ne.s32.totalorder %s76, %s77
      %p89 = scmp.eq.s32.totalorder %s25, 1
      %p90 = por %p88, %p89
      %p92 = scmp.ne.s32.totalorder %s77, %s91
      %p93 = scmp.eq.s32.totalorder %s25, 0
      %p94 = por %p92, %p93
      %s96 = sadd.s32 %s95, 1
      %p99 = scmp.eq.s32.totalorder %s19, 1
      %p100 = scmp.ne.s32.totalorder %s95, %s97
      %p101 = scmp.eq.s32.totalorder %s19, 0
      %p102 = por %p100, %p101
      %p103 = scmp.ne.s32.totalorder %s95, %s97
      %p104 = scmp.eq.s32.totalorder %s24, 1
      %p105 = por %p103, %p104
      %p106 = scmp.ne.s32.totalorder %s97, %s98
      %p107 = scmp.eq.s32.totalorder %s24, 0
      %p108 = por %p106, %p107
      %p109 = scmp.ne.s32.totalorder %s97, %s98
      %p110 = scmp.eq.s32.totalorder %s25, 1
      %p111 = por %p109, %p110
      %p113 = scmp.ne.s32.totalorder %s98, %s112
      %p114 = scmp.eq.s32.totalorder %s25, 0
      %p115 = por %p113, %p114
      %s117 = sadd.s32 %s116, 1
      %p120 = scmp.eq.s32.totalorder %s19, 1
      %p121 = scmp.ne.s32.totalorder %s116, %s118
      %p122 = scmp.eq.s32.totalorder %s19, 0
      %p123 = por %p121, %p122
      %p124 = scmp.ne.s32.totalorder %s116, %s118
      %p125 = scmp.eq.s32.totalorder %s24, 1
      %p126 = por %p124, %p125
      %p127 = scmp.ne.s32.totalorder %s118, %s119
      %p128 = scmp.eq.s32.totalorder %s24, 0
      %p129 = por %p127, %p128
      %p130 = scmp.ne.s32.totalorder %s118, %s119
      %p131 = scmp.eq.s32.totalorder %s25, 1
      %p132 = por %p130, %p131
      %p134 = scmp.ne.s32.totalorder %s119, %s133
      %p135 = scmp.eq.s32.totalorder %s25, 0
      %p136 = por %p134, %p135
      %s138 = sadd.s32 %s137, 1
      %p141 = scmp.eq.s32.totalorder %s19, 1
      %p142 = scmp.ne.s32.totalorder %s137, %s139
      %p143 = scmp.eq.s32.totalorder %s19, 0
      %p144 = por %p142, %p143
      %p145 = scmp.ne.s32.totalorder %s137, %s139
      %p146 = scmp.eq.s32.totalorder %s24, 1
      %p147 = por %p145, %p146
      %p148 = scmp.ne.s32.totalorder %s139, %s140
      %p149 = scmp.eq.s32.totalorder %s24, 0
      %p150 = por %p148, %p149
      %p151 = scmp.ne.s32.totalorder %s139, %s140
      %p152 = scmp.eq.s32.totalorder %s25, 1
      %p153 = por %p151, %p152
      %p155 = scmp.ne.s32.totalorder %s140, %s154
      %p156 = scmp.eq.s32.totalorder %s25, 0
      %p157 = por %p155, %p156
      %s158 = ssub.s32 %s19, %s26
      %p159 = scmp.eq.s32.totalorder %s158, 0
      %s161 = sadd.s32 %s160, 1
      %s162 = scalar_select %p159, %s160, %s161
      %p165 = pneg %p159
      %p166 = scmp.eq.s32.totalorder %s19, 1
      %p167 = por %p165, %p166
      %p168 = scmp.ne.s32.totalorder %s160, %s163
      %p169 = scmp.eq.s32.totalorder %s19, 0
      %p170 = por %p168, %p169
      %p171 = scmp.ne.s32.totalorder %s160, %s163
      %p172 = scmp.eq.s32.totalorder %s24, 1
      %p173 = por %p171, %p172
      %p174 = scmp.ne.s32.totalorder %s163, %s164
      %p175 = scmp.eq.s32.totalorder %s24, 0
      %p176 = por %p174, %p175
      %p177 = scmp.ne.s32.totalorder %s163, %s164
      %p178 = scmp.eq.s32.totalorder %s25, 1
      %p179 = por %p177, %p178
      %p181 = scmp.ne.s32.totalorder %s164, %s180
      %p182 = scmp.eq.s32.totalorder %s25, 0
      %p183 = por %p181, %p182
      %p184 = scmp.le.s32.totalorder 1, %s19
      %p185 = scmp.lt.s32.totalorder %s19, 3
      %p186 = pnand %p184, %p185
      %p187 = pneg %p186
      // Predicated region
      $region9: #{tpu_custom_call.1} parent=5 // pred_check
        _
      $region10: #{tpu_custom_call.1} parent=5 // pred_check_branch
        %189 = sbr.rel (%p186) target = $region12
      $region11: #{tpu_custom_call.1} parent=5 // pred_region
        %s190 = ssub.s32 %s19, 1
        // Predicated region
        $region13: #{tpu_custom_call.1} parent=11 // pred_check
          %p191 = pneg %p66
        $region14: #{tpu_custom_call.1} parent=11 // pred_check_branch
          %193 = sbr.rel (%p191) target = $region16
        $region15: #{tpu_custom_call.1} parent=11 // pred_region
          _
        $region16: #{tpu_custom_call.1} parent=11 // pred_fallthru
          _
        // Predicated region
        $region17: #{tpu_custom_call.1} parent=11 // pred_check
          %p194 = pneg %p87
        $region18: #{tpu_custom_call.1} parent=11 // pred_check_branch
          %196 = sbr.rel (%p194) target = $region20
        $region19: #{tpu_custom_call.1} parent=11 // pred_region
          %s198 = ssub.s32 1024, 1024
          %199 = vsyncadd [#allocation6], %s198
          %s200 = sshll.u32 [#allocation5], 4
          %s201 = int_to_ptr.vmem [resolvable:$true] %s200
          %206 = dma.hbm_to_vmem [thread:$0]  %s2, 1024, %s201, [#allocation6], 128, 128, 8
        $region20: #{tpu_custom_call.1} parent=11 // pred_fallthru
          _
        // Predicated region
        $region21: #{tpu_custom_call.1} parent=11 // pred_check
          %p207 = pneg %p108
        $region22: #{tpu_custom_call.1} parent=11 // pred_check_branch
          %209 = sbr.rel (%p207) target = $region24
        $region23: #{tpu_custom_call.1} parent=11 // pred_region
          %s211 = ssub.s32 1024, 1024
          %212 = vsyncadd [#allocation6], %s211
          %s213 = sshll.u32 [#allocation7], 4
          %s214 = int_to_ptr.vmem [resolvable:$true] %s213
          %219 = dma.hbm_to_vmem [thread:$0]  %s3, 1024, %s214, [#allocation6], 128, 128, 8
        $region24: #{tpu_custom_call.1} parent=11 // pred_fallthru
          _
        // Predicated region
        $region25: #{tpu_custom_call.1} parent=11 // pred_check
          %p220 = pneg %p129
        $region26: #{tpu_custom_call.1} parent=11 // pred_check_branch
          %222 = sbr.rel (%p220) target = $region28
        $region27: #{tpu_custom_call.1} parent=11 // pred_region
          _
        $region28: #{tpu_custom_call.1} parent=11 // pred_fallthru
          _
        // Predicated region
        $region29: #{tpu_custom_call.1} parent=11 // pred_check
          %p223 = pneg %p150
        $region30: #{tpu_custom_call.1} parent=11 // pred_check_branch
          %225 = sbr.rel (%p223) target = $region32
        $region31: #{tpu_custom_call.1} parent=11 // pred_region
          _
        $region32: #{tpu_custom_call.1} parent=11 // pred_fallthru
          _
      $region12: #{tpu_custom_call.1} parent=5 // pred_fallthru
        _
      %p226 = scmp.lt.s32.totalorder %s19, 2
      // Predicated region
      $region33: #{tpu_custom_call.1} parent=5 // pred_check
        %p227 = pneg %p226
      $region34: #{tpu_custom_call.1} parent=5 // pred_check_branch
        %229 = sbr.rel (%p227) target = $region36
      $region35: #{tpu_custom_call.1} parent=5 // pred_region
        // Predicated region
        $region37: #{tpu_custom_call.1} parent=35 // pred_check
          %p230 = pneg %p39
        $region38: #{tpu_custom_call.1} parent=35 // pred_check_branch
          %232 = sbr.rel (%p230) target = $region40
        $region39: #{tpu_custom_call.1} parent=35 // pred_region
          %s233 = sand.u32 %s29, 1
          %s234 = scalar_lea.sflag [#allocation3], %s233
          %s235 = sand.u32 %s29, 1
          %s236 = smul.addr %s235, 8
          %s237 = scalar_lea.vmem [#allocation2], %s236
          %s239 = ssub.s32 128, 128
          %240 = vsyncadd %s234, %s239
          %s241 = smul.addr %s19, 128
          %s242 = scalar_lea.hbm %s0, %s241
          %s244 = sshll.u32 %s237, 4
          %s245 = int_to_ptr.vmem [resolvable:$true] %s244
          %247 = dma.hbm_to_vmem [thread:$0]  %s242, 128, %s245, %s234
        $region40: #{tpu_custom_call.1} parent=35 // pred_fallthru
          _
      $region36: #{tpu_custom_call.1} parent=5 // pred_fallthru
        _
      %p248 = scmp.le.s32.totalorder 1, %s19
      %p249 = scmp.lt.s32.totalorder %s19, 3
      %p250 = pnand %p248, %p249
      %p251 = pneg %p250
      // Predicated region
      $region41: #{tpu_custom_call.1} parent=5 // pred_check
        _
      $region42: #{tpu_custom_call.1} parent=5 // pred_check_branch
        %253 = sbr.rel (%p250) target = $region44
      $region43: #{tpu_custom_call.1} parent=5 // pred_region
        %s254 = ssub.s32 %s19, 1
        %s255 = sand.u32 %s32, 1
        %s256 = scalar_lea.sflag [#allocation3], %s255
        %s257 = sand.u32 %s32, 1
        %s258 = smul.addr %s257, 8
        %s259 = scalar_lea.vmem [#allocation2], %s258
        // Predicated region
        $region45: #{tpu_custom_call.1} parent=43 // pred_check
          %p260 = pneg %p45
        $region46: #{tpu_custom_call.1} parent=43 // pred_check_branch
          %262 = sbr.rel (%p260) target = $region48
        $region47: #{tpu_custom_call.1} parent=43 // pred_region
          %263 = dma.done %s256, 128
        $region48: #{tpu_custom_call.1} parent=43 // pred_fallthru
          _
        // Predicated region
        $region49: #{tpu_custom_call.1} parent=43 // pred_check
          %p264 = pneg %p87
        $region50: #{tpu_custom_call.1} parent=43 // pred_check_branch
          %266 = sbr.rel (%p264) target = $region52
        $region51: #{tpu_custom_call.1} parent=43 // pred_region
          %267 = dma.done [#allocation6], 1024
        $region52: #{tpu_custom_call.1} parent=43 // pred_fallthru
          _
        // Predicated region
        $region53: #{tpu_custom_call.1} parent=43 // pred_check
          %p268 = pneg %p108
        $region54: #{tpu_custom_call.1} parent=43 // pred_check_branch
          %270 = sbr.rel (%p268) target = $region56
        $region55: #{tpu_custom_call.1} parent=43 // pred_region
          %271 = dma.done [#allocation6], 1024
        $region56: #{tpu_custom_call.1} parent=43 // pred_fallthru
          _
        %s272 = sand.u32 %s32, 1
        %s273 = scalar_lea.sflag [#allocation3], %s272
        %s274 = sand.u32 %s32, 1
        %s275 = smul.addr %s274, 8
        %s276 = scalar_lea.vmem [#allocation2], %s275
        %p277 = pneg %p45
        %p278 = pneg %p42
        %p279 = pneg %p66
        %p280 = pneg %p63
        %p281 = pneg %p87
        %p282 = pneg %p84
        %p283 = pneg %p108
        %p284 = pneg %p105
        %p285 = pneg %p129
        %p286 = pneg %p126
        %p287 = pneg %p150
        %p288 = pneg %p147
        %p289 = pneg %p176
        %p290 = pneg %p173
        %s291 = sand.u32 %s163, 1
        %s292 = scalar_lea.sflag [#allocation4], %s291
        %s293 = sand.u32 %s163, 1
        %s294 = smul.addr %s293, 8
        %s295 = scalar_lea.vmem [#allocation8], %s294
        %v296 = vld [vmem:[%s259] sm:$0xff]
        %v297 = vld [vmem:[%s5] sm:$0xff]
        %vm298 = vcmask 261120
        %v299 = vsel %vm298, %v296, 0.0
        %300 = vadd.xlane.f32.xlu0 %v299
        %v301 = vpop.xlane.xlu0 %300
        %v302 = vrcp.pop 32.0
        %v303 = vmul.f32 %v301, %v302
        %v304 = vsub.f32 %v296, %v303
        %v305 = vmul.f32 %v304, %v304
        %v306 = vsel %vm298, %v305, 0.0
        %307 = vadd.xlane.f32.xlu0 %v306
        %v308 = vpop.xlane.xlu0 %307
        %v309 = vmul.f32 %v308, %v302
        %v310 = vadd.f32 %v309, 1e-05
        %v311 = vrsqrt.pop %v310
        %v312 = vmul.f32 %v304, %v311
        %v313 = vlaneseq
        %v314 = vshrl.u32 %v313, 7
        %v315 = vsub.s32 0, %v314
        %v316 = vrot.slane %v297, %v315
        %v317 = vmul.f32 %v312, %v316
        %v318 = vlaneseq
        %v319 = vshrl.u32 %v318, 7
        %v320 = vsub.s32 1, %v319
        %v321 = vrot.slane %v297, %v320
        %v322 = vadd.f32 %v317, %v321
        %v323 = vld [vmem:[%s1] sm:$0xff]
        %v324 = vld [vmem:[%s1 + $0x8] sm:$0xff]
        %v325 = vld [vmem:[%s1 + $0x10] sm:$0xff]
        %v326 = vld [vmem:[%s1 + $0x18] sm:$0xff]
        %s327 = scalar_lea.vmem %s1, 32
        %v328 = vld [vmem:[%s327] sm:$0xff]
        %v329 = vld [vmem:[%s327 + $0x8] sm:$0xff]
        %v330 = vld [vmem:[%s327 + $0x10] sm:$0xff]
        %v331 = vld [vmem:[%s327 + $0x18] sm:$0xff]
        %s332 = scalar_lea.vmem %s1, 64
        %v333 = vld [vmem:[%s332] sm:$0xff]
        %v334 = vld [vmem:[%s332 + $0x8] sm:$0xff]
        %v335 = vld [vmem:[%s332 + $0x10] sm:$0xff]
        %v336 = vld [vmem:[%s332 + $0x18] sm:$0xff]
        %v338 = vsel %vm298, %v322, 0
        %v341 = vsel %vm298, %v323, 0
        %343 = vmatprep.subr.mxu0 0.0
        %344 = vmatpush1.xpose.msra.mxu0 %v341
        %345 = vmatprep.subr.mxu0 0.0
        %346 = vmatpush1.xpose.msra.mxu0 0.0
        %347 = vmatprep.subr.mxu0 0.0
        %348 = vmatpush1.xpose.msra.mxu0 0.0
        %349 = vmatprep.subr.mxu0 0.0
        %350 = vmatpush1.xpose.msra.mxu0 0.0
        %351 = vmatprep.subr.mxu0 0.0
        %352 = vmatpush1.xpose.msra.mxu0 0.0
        %353 = vmatprep.subr.mxu0 0.0
        %354 = vmatpush1.xpose.msra.mxu0 0.0
        %355 = vmatprep.subr.mxu0 0.0
        %356 = vmatpush1.xpose.msra.mxu0 0.0
        %357 = vmatprep.subr.mxu0 0.0
        %358 = vmatpush1.xpose.msra.mxu0 0.0
        %359 = vmatprep.subr.mxu0 0.0
        %360 = vmatpush1.xpose.msra.mxu0 0.0
        %361 = vmatprep.subr.mxu0 0.0
        %362 = vmatpush1.xpose.msra.mxu0 0.0
        %363 = vmatprep.subr.mxu0 0.0
        %364 = vmatpush1.xpose.msra.mxu0 0.0
        %365 = vmatprep.subr.mxu0 0.0
        %366 = vmatpush1.xpose.msra.mxu0 0.0
        %367 = vmatprep.subr.mxu0 0.0
        %368 = vmatpush1.xpose.msra.mxu0 0.0
        %369 = vmatprep.subr.mxu0 0.0
        %370 = vmatpush1.xpose.msra.mxu0 0.0
        %371 = vmatprep.subr.mxu0 0.0
        %372 = vmatpush1.xpose.msra.mxu0 0.0
        %373 = vmatprep.subr.mxu0 0.0
        %374 = vmatpush1.xpose.msra.mxu0 0.0
        %375 = vmatprep.subr.mxu0 0.0
        %376 = vmatpush1.xpose.msra.mxu0 0.0
        %377 = vmatprep.subr.mxu0 0.0
        %378 = vmatpush1.xpose.msra.mxu0 0.0
        %379 = vmatprep.subr.mxu0 0.0
        %380 = vmatpush1.xpose.msra.mxu0 0.0
        %381 = vmatprep.subr.mxu0 0.0
        %382 = vmatpush1.xpose.msra.mxu0 0.0
        %383 = vmatprep.subr.mxu0 0.0
        %384 = vmatpush1.xpose.msra.mxu0 0.0
        %385 = vmatprep.subr.mxu0 0.0
        %386 = vmatpush1.xpose.msra.mxu0 0.0
        %387 = vmatprep.subr.mxu0 0.0
        %388 = vmatpush1.xpose.msra.mxu0 0.0
        %389 = vmatprep.subr.mxu0 0.0
        %390 = vmatpush1.xpose.msra.mxu0 0.0
        %391 = vmatprep.subr.mxu0 0.0
        %392 = vmatpush1.xpose.msra.mxu0 0.0
        %393 = vmatprep.subr.mxu0 0.0
        %394 = vmatpush1.xpose.msra.mxu0 0.0
        %395 = vmatprep.subr.mxu0 0.0
        %396 = vmatpush1.xpose.msra.mxu0 0.0
        %397 = vmatprep.subr.mxu0 0.0
        %398 = vmatpush1.xpose.msra.mxu0 0.0
        %399 = vmatprep.subr.mxu0 0.0
        %400 = vmatpush1.xpose.msra.mxu0 0.0
        %401 = vmatprep.subr.mxu0 0.0
        %402 = vmatpush1.xpose.msra.mxu0 0.0
        %403 = vmatprep.subr.mxu0 0.0
        %404 = vmatpush1.xpose.msra.mxu0 0.0
        %405 = vmatprep.subr.mxu0 0.0
        %406 = vmatpush1.xpose.msra.mxu0 0.0
        %407 = vmatprep.mubr.f32.mxu0 0.0
        %408 = vmatmul.mubr.f32.gmra.mrb[0].mxu0 %v338
        %v409 = vpop.f32.mrb[0].mxu0
        %v410 = vadd.f32 0.0, %v409
        %v411 = vpop.f32.mrb[0].mxu0
        %412 = vdwg.mxu0
        %v414 = vsel %vm298, %v324, 0
        %416 = vmatprep.subr.mxu0 0.0
        %417 = vmatpush1.xpose.msra.mxu0 %v414
        %418 = vmatprep.subr.mxu0 0.0
        %419 = vmatpush1.xpose.msra.mxu0 0.0
        %420 = vmatprep.subr.mxu0 0.0
        %421 = vmatpush1.xpose.msra.mxu0 0.0
        %422 = vmatprep.subr.mxu0 0.0
        %423 = vmatpush1.xpose.msra.mxu0 0.0
        %424 = vmatprep.subr.mxu0 0.0
        %425 = vmatpush1.xpose.msra.mxu0 0.0
        %426 = vmatprep.subr.mxu0 0.0
        %427 = vmatpush1.xpose.msra.mxu0 0.0
        %428 = vmatprep.subr.mxu0 0.0
        %429 = vmatpush1.xpose.msra.mxu0 0.0
        %430 = vmatprep.subr.mxu0 0.0
        %431 = vmatpush1.xpose.msra.mxu0 0.0
        %432 = vmatprep.subr.mxu0 0.0
        %433 = vmatpush1.xpose.msra.mxu0 0.0
        %434 = vmatprep.subr.mxu0 0.0
        %435 = vmatpush1.xpose.msra.mxu0 0.0
        %436 = vmatprep.subr.mxu0 0.0
        %437 = vmatpush1.xpose.msra.mxu0 0.0
        %438 = vmatprep.subr.mxu0 0.0
        %439 = vmatpush1.xpose.msra.mxu0 0.0
        %440 = vmatprep.subr.mxu0 0.0
        %441 = vmatpush1.xpose.msra.mxu0 0.0
        %442 = vmatprep.subr.mxu0 0.0
        %443 = vmatpush1.xpose.msra.mxu0 0.0
        %444 = vmatprep.subr.mxu0 0.0
        %445 = vmatpush1.xpose.msra.mxu0 0.0
        %446 = vmatprep.subr.mxu0 0.0
        %447 = vmatpush1.xpose.msra.mxu0 0.0
        %448 = vmatprep.subr.mxu0 0.0
        %449 = vmatpush1.xpose.msra.mxu0 0.0
        %450 = vmatprep.subr.mxu0 0.0
        %451 = vmatpush1.xpose.msra.mxu0 0.0
        %452 = vmatprep.subr.mxu0 0.0
        %453 = vmatpush1.xpose.msra.mxu0 0.0
        %454 = vmatprep.subr.mxu0 0.0
        %455 = vmatpush1.xpose.msra.mxu0 0.0
        %456 = vmatprep.subr.mxu0 0.0
        %457 = vmatpush1.xpose.msra.mxu0 0.0
        %458 = vmatprep.subr.mxu0 0.0
        %459 = vmatpush1.xpose.msra.mxu0 0.0
        %460 = vmatprep.subr.mxu0 0.0
        %461 = vmatpush1.xpose.msra.mxu0 0.0
        %462 = vmatprep.subr.mxu0 0.0
        %463 = vmatpush1.xpose.msra.mxu0 0.0
        %464 = vmatprep.subr.mxu0 0.0
        %465 = vmatpush1.xpose.msra.mxu0 0.0
        %466 = vmatprep.subr.mxu0 0.0
        %467 = vmatpush1.xpose.msra.mxu0 0.0
        %468 = vmatprep.subr.mxu0 0.0
        %469 = vmatpush1.xpose.msra.mxu0 0.0
        %470 = vmatprep.subr.mxu0 0.0
        %471 = vmatpush1.xpose.msra.mxu0 0.0
        %472 = vmatprep.subr.mxu0 0.0
        %473 = vmatpush1.xpose.msra.mxu0 0.0
        %474 = vmatprep.subr.mxu0 0.0
        %475 = vmatpush1.xpose.msra.mxu0 0.0
        %476 = vmatprep.subr.mxu0 0.0
        %477 = vmatpush1.xpose.msra.mxu0 0.0
        %478 = vmatprep.subr.mxu0 0.0
        %479 = vmatpush1.xpose.msra.mxu0 0.0
        %480 = vmatprep.mubr.f32.mxu0 0.0
        %481 = vmatmul.mubr.f32.gmra.mrb[0].mxu0 %v338
        %v482 = vpop.f32.mrb[0].mxu0
        %v483 = vadd.f32 0.0, %v482
        %v484 = vpop.f32.mrb[0].mxu0
        %485 = vdwg.mxu0
        %v487 = vsel %vm298, %v325, 0
        %489 = vmatprep.subr.mxu0 0.0
        %490 = vmatpush1.xpose.msra.mxu0 %v487
        %491 = vmatprep.subr.mxu0 0.0
        %492 = vmatpush1.xpose.msra.mxu0 0.0
        %493 = vmatprep.subr.mxu0 0.0
        %494 = vmatpush1.xpose.msra.mxu0 0.0
        %495 = vmatprep.subr.mxu0 0.0
        %496 = vmatpush1.xpose.msra.mxu0 0.0
        %497 = vmatprep.subr.mxu0 0.0
        %498 = vmatpush1.xpose.msra.mxu0 0.0
        %499 = vmatprep.subr.mxu0 0.0
        %500 = vmatpush1.xpose.msra.mxu0 0.0
        %501 = vmatprep.subr.mxu0 0.0
        %502 = vmatpush1.xpose.msra.mxu0 0.0
        %503 = vmatprep.subr.mxu0 0.0
        %504 = vmatpush1.xpose.msra.mxu0 0.0
        %505 = vmatprep.subr.mxu0 0.0
        %506 = vmatpush1.xpose.msra.mxu0 0.0
        %507 = vmatprep.subr.mxu0 0.0
        %508 = vmatpush1.xpose.msra.mxu0 0.0
        %509 = vmatprep.subr.mxu0 0.0
        %510 = vmatpush1.xpose.msra.mxu0 0.0
        %511 = vmatprep.subr.mxu0 0.0
        %512 = vmatpush1.xpose.msra.mxu0 0.0
        %513 = vmatprep.subr.mxu0 0.0
        %514 = vmatpush1.xpose.msra.mxu0 0.0
        %515 = vmatprep.subr.mxu0 0.0
        %516 = vmatpush1.xpose.msra.mxu0 0.0
        %517 = vmatprep.subr.mxu0 0.0
        %518 = vmatpush1.xpose.msra.mxu0 0.0
        %519 = vmatprep.subr.mxu0 0.0
        %520 = vmatpush1.xpose.msra.mxu0 0.0
        %521 = vmatprep.subr.mxu0 0.0
        %522 = vmatpush1.xpose.msra.mxu0 0.0
        %523 = vmatprep.subr.mxu0 0.0
        %524 = vmatpush1.xpose.msra.mxu0 0.0
        %525 = vmatprep.subr.mxu0 0.0
        %526 = vmatpush1.xpose.msra.mxu0 0.0
        %527 = vmatprep.subr.mxu0 0.0
        %528 = vmatpush1.xpose.msra.mxu0 0.0
        %529 = vmatprep.subr.mxu0 0.0
        %530 = vmatpush1.xpose.msra.mxu0 0.0
        %531 = vmatprep.subr.mxu0 0.0
        %532 = vmatpush1.xpose.msra.mxu0 0.0
        %533 = vmatprep.subr.mxu0 0.0
        %534 = vmatpush1.xpose.msra.mxu0 0.0
        %535 = vmatprep.subr.mxu0 0.0
        %536 = vmatpush1.xpose.msra.mxu0 0.0
        %537 = vmatprep.subr.mxu0 0.0
        %538 = vmatpush1.xpose.msra.mxu0 0.0
        %539 = vmatprep.subr.mxu0 0.0
        %540 = vmatpush1.xpose.msra.mxu0 0.0
        %541 = vmatprep.subr.mxu0 0.0
        %542 = vmatpush1.xpose.msra.mxu0 0.0
        %543 = vmatprep.subr.mxu0 0.0
        %544 = vmatpush1.xpose.msra.mxu0 0.0
        %545 = vmatprep.subr.mxu0 0.0
        %546 = vmatpush1.xpose.msra.mxu0 0.0
        %547 = vmatprep.subr.mxu0 0.0
        %548 = vmatpush1.xpose.msra.mxu0 0.0
        %549 = vmatprep.subr.mxu0 0.0
        %550 = vmatpush1.xpose.msra.mxu0 0.0
        %551 = vmatprep.subr.mxu0 0.0
        %552 = vmatpush1.xpose.msra.mxu0 0.0
        %553 = vmatprep.mubr.f32.mxu0 0.0
        %554 = vmatmul.mubr.f32.gmra.mrb[0].mxu0 %v338
        %v555 = vpop.f32.mrb[0].mxu0
        %v556 = vadd.f32 0.0, %v555
        %v557 = vpop.f32.mrb[0].mxu0
        %558 = vdwg.mxu0
        %v560 = vsel %vm298, %v326, 0
        %562 = vmatprep.subr.mxu0 0.0
        %563 = vmatpush1.xpose.msra.mxu0 %v560
        %564 = vmatprep.subr.mxu0 0.0
        %565 = vmatpush1.xpose.msra.mxu0 0.0
        %566 = vmatprep.subr.mxu0 0.0
        %567 = vmatpush1.xpose.msra.mxu0 0.0
        %568 = vmatprep.subr.mxu0 0.0
        %569 = vmatpush1.xpose.msra.mxu0 0.0
        %570 = vmatprep.subr.mxu0 0.0
        %571 = vmatpush1.xpose.msra.mxu0 0.0
        %572 = vmatprep.subr.mxu0 0.0
        %573 = vmatpush1.xpose.msra.mxu0 0.0
        %574 = vmatprep.subr.mxu0 0.0
        %575 = vmatpush1.xpose.msra.mxu0 0.0
        %576 = vmatprep.subr.mxu0 0.0
        %577 = vmatpush1.xpose.msra.mxu0 0.0
        %578 = vmatprep.subr.mxu0 0.0
        %579 = vmatpush1.xpose.msra.mxu0 0.0
        %580 = vmatprep.subr.mxu0 0.0
        %581 = vmatpush1.xpose.msra.mxu0 0.0
        %582 = vmatprep.subr.mxu0 0.0
        %583 = vmatpush1.xpose.msra.mxu0 0.0
        %584 = vmatprep.subr.mxu0 0.0
        %585 = vmatpush1.xpose.msra.mxu0 0.0
        %586 = vmatprep.subr.mxu0 0.0
        %587 = vmatpush1.xpose.msra.mxu0 0.0
        %588 = vmatprep.subr.mxu0 0.0
        %589 = vmatpush1.xpose.msra.mxu0 0.0
        %590 = vmatprep.subr.mxu0 0.0
        %591 = vmatpush1.xpose.msra.mxu0 0.0
        %592 = vmatprep.subr.mxu0 0.0
        %593 = vmatpush1.xpose.msra.mxu0 0.0
        %594 = vmatprep.subr.mxu0 0.0
        %595 = vmatpush1.xpose.msra.mxu0 0.0
        %596 = vmatprep.subr.mxu0 0.0
        %597 = vmatpush1.xpose.msra.mxu0 0.0
        %598 = vmatprep.subr.mxu0 0.0
        %599 = vmatpush1.xpose.msra.mxu0 0.0
        %600 = vmatprep.subr.mxu0 0.0
        %601 = vmatpush1.xpose.msra.mxu0 0.0
        %602 = vmatprep.subr.mxu0 0.0
        %603 = vmatpush1.xpose.msra.mxu0 0.0
        %604 = vmatprep.subr.mxu0 0.0
        %605 = vmatpush1.xpose.msra.mxu0 0.0
        %606 = vmatprep.subr.mxu0 0.0
        %607 = vmatpush1.xpose.msra.mxu0 0.0
        %608 = vmatprep.subr.mxu0 0.0
        %609 = vmatpush1.xpose.msra.mxu0 0.0
        %610 = vmatprep.subr.mxu0 0.0
        %611 = vmatpush1.xpose.msra.mxu0 0.0
        %612 = vmatprep.subr.mxu0 0.0
        %613 = vmatpush1.xpose.msra.mxu0 0.0
        %614 = vmatprep.subr.mxu0 0.0
        %615 = vmatpush1.xpose.msra.mxu0 0.0
        %616 = vmatprep.subr.mxu0 0.0
        %617 = vmatpush1.xpose.msra.mxu0 0.0
        %618 = vmatprep.subr.mxu0 0.0
        %619 = vmatpush1.xpose.msra.mxu0 0.0
        %620 = vmatprep.subr.mxu0 0.0
        %621 = vmatpush1.xpose.msra.mxu0 0.0
        %622 = vmatprep.subr.mxu0 0.0
        %623 = vmatpush1.xpose.msra.mxu0 0.0
        %624 = vmatprep.subr.mxu0 0.0
        %625 = vmatpush1.xpose.msra.mxu0 0.0
        %626 = vmatprep.mubr.f32.mxu0 0.0
        %627 = vmatmul.mubr.f32.gmra.mrb[0].mxu0 %v338
        %v628 = vpop.f32.mrb[0].mxu0
        %v629 = vadd.f32 0.0, %v628
        %v630 = vpop.f32.mrb[0].mxu0
        %631 = vdwg.mxu0
        %v633 = vsel %vm298, %v328, 0
        %635 = vmatprep.subr.mxu0 0.0
        %636 = vmatpush1.xpose.msra.mxu0 %v633
        %637 = vmatprep.subr.mxu0 0.0
        %638 = vmatpush1.xpose.msra.mxu0 0.0
        %639 = vmatprep.subr.mxu0 0.0
        %640 = vmatpush1.xpose.msra.mxu0 0.0
        %641 = vmatprep.subr.mxu0 0.0
        %642 = vmatpush1.xpose.msra.mxu0 0.0
        %643 = vmatprep.subr.mxu0 0.0
        %644 = vmatpush1.xpose.msra.mxu0 0.0
        %645 = vmatprep.subr.mxu0 0.0
        %646 = vmatpush1.xpose.msra.mxu0 0.0
        %647 = vmatprep.subr.mxu0 0.0
        %648 = vmatpush1.xpose.msra.mxu0 0.0
        %649 = vmatprep.subr.mxu0 0.0
        %650 = vmatpush1.xpose.msra.mxu0 0.0
        %651 = vmatprep.subr.mxu0 0.0
        %652 = vmatpush1.xpose.msra.mxu0 0.0
        %653 = vmatprep.subr.mxu0 0.0
        %654 = vmatpush1.xpose.msra.mxu0 0.0
        %655 = vmatprep.subr.mxu0 0.0
        %656 = vmatpush1.xpose.msra.mxu0 0.0
        %657 = vmatprep.subr.mxu0 0.0
        %658 = vmatpush1.xpose.msra.mxu0 0.0
        %659 = vmatprep.subr.mxu0 0.0
        %660 = vmatpush1.xpose.msra.mxu0 0.0
        %661 = vmatprep.subr.mxu0 0.0
        %662 = vmatpush1.xpose.msra.mxu0 0.0
        %663 = vmatprep.subr.mxu0 0.0
        %664 = vmatpush1.xpose.msra.mxu0 0.0
        %665 = vmatprep.subr.mxu0 0.0
        %666 = vmatpush1.xpose.msra.mxu0 0.0
        %667 = vmatprep.subr.mxu0 0.0
        %668 = vmatpush1.xpose.msra.mxu0 0.0
        %669 = vmatprep.subr.mxu0 0.0
        %670 = vmatpush1.xpose.msra.mxu0 0.0
        %671 = vmatprep.subr.mxu0 0.0
        %672 = vmatpush1.xpose.msra.mxu0 0.0
        %673 = vmatprep.subr.mxu0 0.0
        %674 = vmatpush1.xpose.msra.mxu0 0.0
        %675 = vmatprep.subr.mxu0 0.0
        %676 = vmatpush1.xpose.msra.mxu0 0.0
        %677 = vmatprep.subr.mxu0 0.0
        %678 = vmatpush1.xpose.msra.mxu0 0.0
        %679 = vmatprep.subr.mxu0 0.0
        %680 = vmatpush1.xpose.msra.mxu0 0.0
        %681 = vmatprep.subr.mxu0 0.0
        %682 = vmatpush1.xpose.msra.mxu0 0.0
        %683 = vmatprep.subr.mxu0 0.0
        %684 = vmatpush1.xpose.msra.mxu0 0.0
        %685 = vmatprep.subr.mxu0 0.0
        %686 = vmatpush1.xpose.msra.mxu0 0.0
        %687 = vmatprep.subr.mxu0 0.0
        %688 = vmatpush1.xpose.msra.mxu0 0.0
        %689 = vmatprep.subr.mxu0 0.0
        %690 = vmatpush1.xpose.msra.mxu0 0.0
        %691 = vmatprep.subr.mxu0 0.0
        %692 = vmatpush1.xpose.msra.mxu0 0.0
        %693 = vmatprep.subr.mxu0 0.0
        %694 = vmatpush1.xpose.msra.mxu0 0.0
        %695 = vmatprep.subr.mxu0 0.0
        %696 = vmatpush1.xpose.msra.mxu0 0.0
        %697 = vmatprep.subr.mxu0 0.0
        %698 = vmatpush1.xpose.msra.mxu0 0.0
        %699 = vmatprep.mubr.f32.mxu0 0.0
        %700 = vmatmul.mubr.f32.gmra.mrb[0].mxu0 %v338
        %v701 = vpop.f32.mrb[0].mxu0
        %v702 = vadd.f32 0.0, %v701
        %v703 = vpop.f32.mrb[0].mxu0
        %704 = vdwg.mxu0
        %v706 = vsel %vm298, %v329, 0
        %708 = vmatprep.subr.mxu0 0.0
        %709 = vmatpush1.xpose.msra.mxu0 %v706
        %710 = vmatprep.subr.mxu0 0.0
        %711 = vmatpush1.xpose.msra.mxu0 0.0
        %712 = vmatprep.subr.mxu0 0.0
        %713 = vmatpush1.xpose.msra.mxu0 0.0
        %714 = vmatprep.subr.mxu0 0.0
        %715 = vmatpush1.xpose.msra.mxu0 0.0
        %716 = vmatprep.subr.mxu0 0.0
        %717 = vmatpush1.xpose.msra.mxu0 0.0
        %718 = vmatprep.subr.mxu0 0.0
        %719 = vmatpush1.xpose.msra.mxu0 0.0
        %720 = vmatprep.subr.mxu0 0.0
        %721 = vmatpush1.xpose.msra.mxu0 0.0
        %722 = vmatprep.subr.mxu0 0.0
        %723 = vmatpush1.xpose.msra.mxu0 0.0
        %724 = vmatprep.subr.mxu0 0.0
        %725 = vmatpush1.xpose.msra.mxu0 0.0
        %726 = vmatprep.subr.mxu0 0.0
        %727 = vmatpush1.xpose.msra.mxu0 0.0
        %728 = vmatprep.subr.mxu0 0.0
        %729 = vmatpush1.xpose.msra.mxu0 0.0
        %730 = vmatprep.subr.mxu0 0.0
        %731 = vmatpush1.xpose.msra.mxu0 0.0
        %732 = vmatprep.subr.mxu0 0.0
        %733 = vmatpush1.xpose.msra.mxu0 0.0
        %734 = vmatprep.subr.mxu0 0.0
        %735 = vmatpush1.xpose.msra.mxu0 0.0
        %736 = vmatprep.subr.mxu0 0.0
        %737 = vmatpush1.xpose.msra.mxu0 0.0
        %738 = vmatprep.subr.mxu0 0.0
        %739 = vmatpush1.xpose.msra.mxu0 0.0
        %740 = vmatprep.subr.mxu0 0.0
        %741 = vmatpush1.xpose.msra.mxu0 0.0
        %742 = vmatprep.subr.mxu0 0.0
        %743 = vmatpush1.xpose.msra.mxu0 0.0
        %744 = vmatprep.subr.mxu0 0.0
        %745 = vmatpush1.xpose.msra.mxu0 0.0
        %746 = vmatprep.subr.mxu0 0.0
        %747 = vmatpush1.xpose.msra.mxu0 0.0
        %748 = vmatprep.subr.mxu0 0.0
        %749 = vmatpush1.xpose.msra.mxu0 0.0
        %750 = vmatprep.subr.mxu0 0.0
        %751 = vmatpush1.xpose.msra.mxu0 0.0
        %752 = vmatprep.subr.mxu0 0.0
        %753 = vmatpush1.xpose.msra.mxu0 0.0
        %754 = vmatprep.subr.mxu0 0.0
        %755 = vmatpush1.xpose.msra.mxu0 0.0
        %756 = vmatprep.subr.mxu0 0.0
        %757 = vmatpush1.xpose.msra.mxu0 0.0
        %758 = vmatprep.subr.mxu0 0.0
        %759 = vmatpush1.xpose.msra.mxu0 0.0
        %760 = vmatprep.subr.mxu0 0.0
        %761 = vmatpush1.xpose.msra.mxu0 0.0
        %762 = vmatprep.subr.mxu0 0.0
        %763 = vmatpush1.xpose.msra.mxu0 0.0
        %764 = vmatprep.subr.mxu0 0.0
        %765 = vmatpush1.xpose.msra.mxu0 0.0
        %766 = vmatprep.subr.mxu0 0.0
        %767 = vmatpush1.xpose.msra.mxu0 0.0
        %768 = vmatprep.subr.mxu0 0.0
        %769 = vmatpush1.xpose.msra.mxu0 0.0
        %770 = vmatprep.subr.mxu0 0.0
        %771 = vmatpush1.xpose.msra.mxu0 0.0
        %772 = vmatprep.mubr.f32.mxu0 0.0
        %773 = vmatmul.mubr.f32.gmra.mrb[0].mxu0 %v338
        %v774 = vpop.f32.mrb[0].mxu0
        %v775 = vadd.f32 0.0, %v774
        %v776 = vpop.f32.mrb[0].mxu0
        %777 = vdwg.mxu0
        %v779 = vsel %vm298, %v330, 0
        %781 = vmatprep.subr.mxu0 0.0
        %782 = vmatpush1.xpose.msra.mxu0 %v779
        %783 = vmatprep.subr.mxu0 0.0
        %784 = vmatpush1.xpose.msra.mxu0 0.0
        %785 = vmatprep.subr.mxu0 0.0
        %786 = vmatpush1.xpose.msra.mxu0 0.0
        %787 = vmatprep.subr.mxu0 0.0
        %788 = vmatpush1.xpose.msra.mxu0 0.0
        %789 = vmatprep.subr.mxu0 0.0
        %790 = vmatpush1.xpose.msra.mxu0 0.0
        %791 = vmatprep.subr.mxu0 0.0
        %792 = vmatpush1.xpose.msra.mxu0 0.0
        %793 = vmatprep.subr.mxu0 0.0
        %794 = vmatpush1.xpose.msra.mxu0 0.0
        %795 = vmatprep.subr.mxu0 0.0
        %796 = vmatpush1.xpose.msra.mxu0 0.0
        %797 = vmatprep.subr.mxu0 0.0
        %798 = vmatpush1.xpose.msra.mxu0 0.0
        %799 = vmatprep.subr.mxu0 0.0
        %800 = vmatpush1.xpose.msra.mxu0 0.0
        %801 = vmatprep.subr.mxu0 0.0
        %802 = vmatpush1.xpose.msra.mxu0 0.0
        %803 = vmatprep.subr.mxu0 0.0
        %804 = vmatpush1.xpose.msra.mxu0 0.0
        %805 = vmatprep.subr.mxu0 0.0
        %806 = vmatpush1.xpose.msra.mxu0 0.0
        %807 = vmatprep.subr.mxu0 0.0
        %808 = vmatpush1.xpose.msra.mxu0 0.0
        %809 = vmatprep.subr.mxu0 0.0
        %810 = vmatpush1.xpose.msra.mxu0 0.0
        %811 = vmatprep.subr.mxu0 0.0
        %812 = vmatpush1.xpose.msra.mxu0 0.0
        %813 = vmatprep.subr.mxu0 0.0
        %814 = vmatpush1.xpose.msra.mxu0 0.0
        %815 = vmatprep.subr.mxu0 0.0
        %816 = vmatpush1.xpose.msra.mxu0 0.0
        %817 = vmatprep.subr.mxu0 0.0
        %818 = vmatpush1.xpose.msra.mxu0 0.0
        %819 = vmatprep.subr.mxu0 0.0
        %820 = vmatpush1.xpose.msra.mxu0 0.0
        %821 = vmatprep.subr.mxu0 0.0
        %822 = vmatpush1.xpose.msra.mxu0 0.0
        %823 = vmatprep.subr.mxu0 0.0
        %824 = vmatpush1.xpose.msra.mxu0 0.0
        %825 = vmatprep.subr.mxu0 0.0
        %826 = vmatpush1.xpose.msra.mxu0 0.0
        %827 = vmatprep.subr.mxu0 0.0
        %828 = vmatpush1.xpose.msra.mxu0 0.0
        %829 = vmatprep.subr.mxu0 0.0
        %830 = vmatpush1.xpose.msra.mxu0 0.0
        %831 = vmatprep.subr.mxu0 0.0
        %832 = vmatpush1.xpose.msra.mxu0 0.0
        %833 = vmatprep.subr.mxu0 0.0
        %834 = vmatpush1.xpose.msra.mxu0 0.0
        %835 = vmatprep.subr.mxu0 0.0
        %836 = vmatpush1.xpose.msra.mxu0 0.0
        %837 = vmatprep.subr.mxu0 0.0
        %838 = vmatpush1.xpose.msra.mxu0 0.0
        %839 = vmatprep.subr.mxu0 0.0
        %840 = vmatpush1.xpose.msra.mxu0 0.0
        %841 = vmatprep.subr.mxu0 0.0
        %842 = vmatpush1.xpose.msra.mxu0 0.0
        %843 = vmatprep.subr.mxu0 0.0
        %844 = vmatpush1.xpose.msra.mxu0 0.0
        %845 = vmatprep.mubr.f32.mxu0 0.0
        %846 = vmatmul.mubr.f32.gmra.mrb[0].mxu0 %v338
        %v847 = vpop.f32.mrb[0].mxu0
        %v848 = vadd.f32 0.0, %v847
        %v849 = vpop.f32.mrb[0].mxu0
        %850 = vdwg.mxu0
        %v852 = vsel %vm298, %v331, 0
        %854 = vmatprep.subr.mxu0 0.0
        %855 = vmatpush1.xpose.msra.mxu0 %v852
        %856 = vmatprep.subr.mxu0 0.0
        %857 = vmatpush1.xpose.msra.mxu0 0.0
        %858 = vmatprep.subr.mxu0 0.0
        %859 = vmatpush1.xpose.msra.mxu0 0.0
        %860 = vmatprep.subr.mxu0 0.0
        %861 = vmatpush1.xpose.msra.mxu0 0.0
        %862 = vmatprep.subr.mxu0 0.0
        %863 = vmatpush1.xpose.msra.mxu0 0.0
        %864 = vmatprep.subr.mxu0 0.0
        %865 = vmatpush1.xpose.msra.mxu0 0.0
        %866 = vmatprep.subr.mxu0 0.0
        %867 = vmatpush1.xpose.msra.mxu0 0.0
        %868 = vmatprep.subr.mxu0 0.0
        %869 = vmatpush1.xpose.msra.mxu0 0.0
        %870 = vmatprep.subr.mxu0 0.0
        %871 = vmatpush1.xpose.msra.mxu0 0.0
        %872 = vmatprep.subr.mxu0 0.0
        %873 = vmatpush1.xpose.msra.mxu0 0.0
        %874 = vmatprep.subr.mxu0 0.0
        %875 = vmatpush1.xpose.msra.mxu0 0.0
        %876 = vmatprep.subr.mxu0 0.0
        %877 = vmatpush1.xpose.msra.mxu0 0.0
        %878 = vmatprep.subr.mxu0 0.0
        %879 = vmatpush1.xpose.msra.mxu0 0.0
        %880 = vmatprep.subr.mxu0 0.0
        %881 = vmatpush1.xpose.msra.mxu0 0.0
        %882 = vmatprep.subr.mxu0 0.0
        %883 = vmatpush1.xpose.msra.mxu0 0.0
        %884 = vmatprep.subr.mxu0 0.0
        %885 = vmatpush1.xpose.msra.mxu0 0.0
        %886 = vmatprep.subr.mxu0 0.0
        %887 = vmatpush1.xpose.msra.mxu0 0.0
        %888 = vmatprep.subr.mxu0 0.0
        %889 = vmatpush1.xpose.msra.mxu0 0.0
        %890 = vmatprep.subr.mxu0 0.0
        %891 = vmatpush1.xpose.msra.mxu0 0.0
        %892 = vmatprep.subr.mxu0 0.0
        %893 = vmatpush1.xpose.msra.mxu0 0.0
        %894 = vmatprep.subr.mxu0 0.0
        %895 = vmatpush1.xpose.msra.mxu0 0.0
        %896 = vmatprep.subr.mxu0 0.0
        %897 = vmatpush1.xpose.msra.mxu0 0.0
        %898 = vmatprep.subr.mxu0 0.0
        %899 = vmatpush1.xpose.msra.mxu0 0.0
        %900 = vmatprep.subr.mxu0 0.0
        %901 = vmatpush1.xpose.msra.mxu0 0.0
        %902 = vmatprep.subr.mxu0 0.0
        %903 = vmatpush1.xpose.msra.mxu0 0.0
        %904 = vmatprep.subr.mxu0 0.0
        %905 = vmatpush1.xpose.msra.mxu0 0.0
        %906 = vmatprep.subr.mxu0 0.0
        %907 = vmatpush1.xpose.msra.mxu0 0.0
        %908 = vmatprep.subr.mxu0 0.0
        %909 = vmatpush1.xpose.msra.mxu0 0.0
        %910 = vmatprep.subr.mxu0 0.0
        %911 = vmatpush1.xpose.msra.mxu0 0.0
        %912 = vmatprep.subr.mxu0 0.0
        %913 = vmatpush1.xpose.msra.mxu0 0.0
        %914 = vmatprep.subr.mxu0 0.0
        %915 = vmatpush1.xpose.msra.mxu0 0.0
        %916 = vmatprep.subr.mxu0 0.0
        %917 = vmatpush1.xpose.msra.mxu0 0.0
        %918 = vmatprep.mubr.f32.mxu0 0.0
        %919 = vmatmul.mubr.f32.gmra.mrb[0].mxu0 %v338
        %v920 = vpop.f32.mrb[0].mxu0
        %v921 = vadd.f32 0.0, %v920
        %v922 = vpop.f32.mrb[0].mxu0
        %923 = vdwg.mxu0
        %v925 = vsel %vm298, %v333, 0
        %927 = vmatprep.subr.mxu0 0.0
        %928 = vmatpush1.xpose.msra.mxu0 %v925
        %929 = vmatprep.subr.mxu0 0.0
        %930 = vmatpush1.xpose.msra.mxu0 0.0
        %931 = vmatprep.subr.mxu0 0.0
        %932 = vmatpush1.xpose.msra.mxu0 0.0
        %933 = vmatprep.subr.mxu0 0.0
        %934 = vmatpush1.xpose.msra.mxu0 0.0
        %935 = vmatprep.subr.mxu0 0.0
        %936 = vmatpush1.xpose.msra.mxu0 0.0
        %937 = vmatprep.subr.mxu0 0.0
        %938 = vmatpush1.xpose.msra.mxu0 0.0
        %939 = vmatprep.subr.mxu0 0.0
        %940 = vmatpush1.xpose.msra.mxu0 0.0
        %941 = vmatprep.subr.mxu0 0.0
        %942 = vmatpush1.xpose.msra.mxu0 0.0
        %943 = vmatprep.subr.mxu0 0.0
        %944 = vmatpush1.xpose.msra.mxu0 0.0
        %945 = vmatprep.subr.mxu0 0.0
        %946 = vmatpush1.xpose.msra.mxu0 0.0
        %947 = vmatprep.subr.mxu0 0.0
        %948 = vmatpush1.xpose.msra.mxu0 0.0
        %949 = vmatprep.subr.mxu0 0.0
        %950 = vmatpush1.xpose.msra.mxu0 0.0
        %951 = vmatprep.subr.mxu0 0.0
        %952 = vmatpush1.xpose.msra.mxu0 0.0
        %953 = vmatprep.subr.mxu0 0.0
        %954 = vmatpush1.xpose.msra.mxu0 0.0
        %955 = vmatprep.subr.mxu0 0.0
        %956 = vmatpush1.xpose.msra.mxu0 0.0
        %957 = vmatprep.subr.mxu0 0.0
        %958 = vmatpush1.xpose.msra.mxu0 0.0
        %959 = vmatprep.subr.mxu0 0.0
        %960 = vmatpush1.xpose.msra.mxu0 0.0
        %961 = vmatprep.subr.mxu0 0.0
        %962 = vmatpush1.xpose.msra.mxu0 0.0
        %963 = vmatprep.subr.mxu0 0.0
        %964 = vmatpush1.xpose.msra.mxu0 0.0
        %965 = vmatprep.subr.mxu0 0.0
        %966 = vmatpush1.xpose.msra.mxu0 0.0
        %967 = vmatprep.subr.mxu0 0.0
        %968 = vmatpush1.xpose.msra.mxu0 0.0
        %969 = vmatprep.subr.mxu0 0.0
        %970 = vmatpush1.xpose.msra.mxu0 0.0
        %971 = vmatprep.subr.mxu0 0.0
        %972 = vmatpush1.xpose.msra.mxu0 0.0
        %973 = vmatprep.subr.mxu0 0.0
        %974 = vmatpush1.xpose.msra.mxu0 0.0
        %975 = vmatprep.subr.mxu0 0.0
        %976 = vmatpush1.xpose.msra.mxu0 0.0
        %977 = vmatprep.subr.mxu0 0.0
        %978 = vmatpush1.xpose.msra.mxu0 0.0
        %979 = vmatprep.subr.mxu0 0.0
        %980 = vmatpush1.xpose.msra.mxu0 0.0
        %981 = vmatprep.subr.mxu0 0.0
        %982 = vmatpush1.xpose.msra.mxu0 0.0
        %983 = vmatprep.subr.mxu0 0.0
        %984 = vmatpush1.xpose.msra.mxu0 0.0
        %985 = vmatprep.subr.mxu0 0.0
        %986 = vmatpush1.xpose.msra.mxu0 0.0
        %987 = vmatprep.subr.mxu0 0.0
        %988 = vmatpush1.xpose.msra.mxu0 0.0
        %989 = vmatprep.subr.mxu0 0.0
        %990 = vmatpush1.xpose.msra.mxu0 0.0
        %991 = vmatprep.mubr.f32.mxu0 0.0
        %992 = vmatmul.mubr.f32.gmra.mrb[0].mxu0 %v338
        %v993 = vpop.f32.mrb[0].mxu0
        %v994 = vadd.f32 0.0, %v993
        %v995 = vpop.f32.mrb[0].mxu0
        %996 = vdwg.mxu0
        %v998 = vsel %vm298, %v334, 0
        %1000 = vmatprep.subr.mxu0 0.0
        %1001 = vmatpush1.xpose.msra.mxu0 %v998
        %1002 = vmatprep.subr.mxu0 0.0
        %1003 = vmatpush1.xpose.msra.mxu0 0.0
        %1004 = vmatprep.subr.mxu0 0.0
        %1005 = vmatpush1.xpose.msra.mxu0 0.0
        %1006 = vmatprep.subr.mxu0 0.0
        %1007 = vmatpush1.xpose.msra.mxu0 0.0
        %1008 = vmatprep.subr.mxu0 0.0
        %1009 = vmatpush1.xpose.msra.mxu0 0.0
        %1010 = vmatprep.subr.mxu0 0.0
        %1011 = vmatpush1.xpose.msra.mxu0 0.0
        %1012 = vmatprep.subr.mxu0 0.0
        %1013 = vmatpush1.xpose.msra.mxu0 0.0
        %1014 = vmatprep.subr.mxu0 0.0
        %1015 = vmatpush1.xpose.msra.mxu0 0.0
        %1016 = vmatprep.subr.mxu0 0.0
        %1017 = vmatpush1.xpose.msra.mxu0 0.0
        %1018 = vmatprep.subr.mxu0 0.0
        %1019 = vmatpush1.xpose.msra.mxu0 0.0
        %1020 = vmatprep.subr.mxu0 0.0
        %1021 = vmatpush1.xpose.msra.mxu0 0.0
        %1022 = vmatprep.subr.mxu0 0.0
        %1023 = vmatpush1.xpose.msra.mxu0 0.0
        %1024 = vmatprep.subr.mxu0 0.0
        %1025 = vmatpush1.xpose.msra.mxu0 0.0
        %1026 = vmatprep.subr.mxu0 0.0
        %1027 = vmatpush1.xpose.msra.mxu0 0.0
        %1028 = vmatprep.subr.mxu0 0.0
        %1029 = vmatpush1.xpose.msra.mxu0 0.0
        %1030 = vmatprep.subr.mxu0 0.0
        %1031 = vmatpush1.xpose.msra.mxu0 0.0
        %1032 = vmatprep.subr.mxu0 0.0
        %1033 = vmatpush1.xpose.msra.mxu0 0.0
        %1034 = vmatprep.subr.mxu0 0.0
        %1035 = vmatpush1.xpose.msra.mxu0 0.0
        %1036 = vmatprep.subr.mxu0 0.0
        %1037 = vmatpush1.xpose.msra.mxu0 0.0
        %1038 = vmatprep.subr.mxu0 0.0
        %1039 = vmatpush1.xpose.msra.mxu0 0.0
        %1040 = vmatprep.subr.mxu0 0.0
        %1041 = vmatpush1.xpose.msra.mxu0 0.0
        %1042 = vmatprep.subr.mxu0 0.0
        %1043 = vmatpush1.xpose.msra.mxu0 0.0
        %1044 = vmatprep.subr.mxu0 0.0
        %1045 = vmatpush1.xpose.msra.mxu0 0.0
        %1046 = vmatprep.subr.mxu0 0.0
        %1047 = vmatpush1.xpose.msra.mxu0 0.0
        %1048 = vmatprep.subr.mxu0 0.0
        %1049 = vmatpush1.xpose.msra.mxu0 0.0
        %1050 = vmatprep.subr.mxu0 0.0
        %1051 = vmatpush1.xpose.msra.mxu0 0.0
        %1052 = vmatprep.subr.mxu0 0.0
        %1053 = vmatpush1.xpose.msra.mxu0 0.0
        %1054 = vmatprep.subr.mxu0 0.0
        %1055 = vmatpush1.xpose.msra.mxu0 0.0
        %1056 = vmatprep.subr.mxu0 0.0
        %1057 = vmatpush1.xpose.msra.mxu0 0.0
        %1058 = vmatprep.subr.mxu0 0.0
        %1059 = vmatpush1.xpose.msra.mxu0 0.0
        %1060 = vmatprep.subr.mxu0 0.0
        %1061 = vmatpush1.xpose.msra.mxu0 0.0
        %1062 = vmatprep.subr.mxu0 0.0
        %1063 = vmatpush1.xpose.msra.mxu0 0.0
        %1064 = vmatprep.mubr.f32.mxu0 0.0
        %1065 = vmatmul.mubr.f32.gmra.mrb[0].mxu0 %v338
        %v1066 = vpop.f32.mrb[0].mxu0
        %v1067 = vadd.f32 0.0, %v1066
        %v1068 = vpop.f32.mrb[0].mxu0
        %1069 = vdwg.mxu0
        %v1071 = vsel %vm298, %v335, 0
        %1073 = vmatprep.subr.mxu0 0.0
        %1074 = vmatpush1.xpose.msra.mxu0 %v1071
        %1075 = vmatprep.subr.mxu0 0.0
        %1076 = vmatpush1.xpose.msra.mxu0 0.0
        %1077 = vmatprep.subr.mxu0 0.0
        %1078 = vmatpush1.xpose.msra.mxu0 0.0
        %1079 = vmatprep.subr.mxu0 0.0
        %1080 = vmatpush1.xpose.msra.mxu0 0.0
        %1081 = vmatprep.subr.mxu0 0.0
        %1082 = vmatpush1.xpose.msra.mxu0 0.0
        %1083 = vmatprep.subr.mxu0 0.0
        %1084 = vmatpush1.xpose.msra.mxu0 0.0
        %1085 = vmatprep.subr.mxu0 0.0
        %1086 = vmatpush1.xpose.msra.mxu0 0.0
        %1087 = vmatprep.subr.mxu0 0.0
        %1088 = vmatpush1.xpose.msra.mxu0 0.0
        %1089 = vmatprep.subr.mxu0 0.0
        %1090 = vmatpush1.xpose.msra.mxu0 0.0
        %1091 = vmatprep.subr.mxu0 0.0
        %1092 = vmatpush1.xpose.msra.mxu0 0.0
        %1093 = vmatprep.subr.mxu0 0.0
        %1094 = vmatpush1.xpose.msra.mxu0 0.0
        %1095 = vmatprep.subr.mxu0 0.0
        %1096 = vmatpush1.xpose.msra.mxu0 0.0
        %1097 = vmatprep.subr.mxu0 0.0
        %1098 = vmatpush1.xpose.msra.mxu0 0.0
        %1099 = vmatprep.subr.mxu0 0.0
        %1100 = vmatpush1.xpose.msra.mxu0 0.0
        %1101 = vmatprep.subr.mxu0 0.0
        %1102 = vmatpush1.xpose.msra.mxu0 0.0
        %1103 = vmatprep.subr.mxu0 0.0
        %1104 = vmatpush1.xpose.msra.mxu0 0.0
        %1105 = vmatprep.subr.mxu0 0.0
        %1106 = vmatpush1.xpose.msra.mxu0 0.0
        %1107 = vmatprep.subr.mxu0 0.0
        %1108 = vmatpush1.xpose.msra.mxu0 0.0
        %1109 = vmatprep.subr.mxu0 0.0
        %1110 = vmatpush1.xpose.msra.mxu0 0.0
        %1111 = vmatprep.subr.mxu0 0.0
        %1112 = vmatpush1.xpose.msra.mxu0 0.0
        %1113 = vmatprep.subr.mxu0 0.0
        %1114 = vmatpush1.xpose.msra.mxu0 0.0
        %1115 = vmatprep.subr.mxu0 0.0
        %1116 = vmatpush1.xpose.msra.mxu0 0.0
        %1117 = vmatprep.subr.mxu0 0.0
        %1118 = vmatpush1.xpose.msra.mxu0 0.0
        %1119 = vmatprep.subr.mxu0 0.0
        %1120 = vmatpush1.xpose.msra.mxu0 0.0
        %1121 = vmatprep.subr.mxu0 0.0
        %1122 = vmatpush1.xpose.msra.mxu0 0.0
        %1123 = vmatprep.subr.mxu0 0.0
        %1124 = vmatpush1.xpose.msra.mxu0 0.0
        %1125 = vmatprep.subr.mxu0 0.0
        %1126 = vmatpush1.xpose.msra.mxu0 0.0
        %1127 = vmatprep.subr.mxu0 0.0
        %1128 = vmatpush1.xpose.msra.mxu0 0.0
        %1129 = vmatprep.subr.mxu0 0.0
        %1130 = vmatpush1.xpose.msra.mxu0 0.0
        %1131 = vmatprep.subr.mxu0 0.0
        %1132 = vmatpush1.xpose.msra.mxu0 0.0
        %1133 = vmatprep.subr.mxu0 0.0
        %1134 = vmatpush1.xpose.msra.mxu0 0.0
        %1135 = vmatprep.subr.mxu0 0.0
        %1136 = vmatpush1.xpose.msra.mxu0 0.0
        %1137 = vmatprep.mubr.f32.mxu0 0.0
        %1138 = vmatmul.mubr.f32.gmra.mrb[0].mxu0 %v338
        %v1139 = vpop.f32.mrb[0].mxu0
        %v1140 = vadd.f32 0.0, %v1139
        %v1141 = vpop.f32.mrb[0].mxu0
        %1142 = vdwg.mxu0
        %v1144 = vsel %vm298, %v336, 0
        %1146 = vmatprep.subr.mxu0 0.0
        %1147 = vmatpush1.xpose.msra.mxu0 %v1144
        %1148 = vmatprep.subr.mxu0 0.0
        %1149 = vmatpush1.xpose.msra.mxu0 0.0
        %1150 = vmatprep.subr.mxu0 0.0
        %1151 = vmatpush1.xpose.msra.mxu0 0.0
        %1152 = vmatprep.subr.mxu0 0.0
        %1153 = vmatpush1.xpose.msra.mxu0 0.0
        %1154 = vmatprep.subr.mxu0 0.0
        %1155 = vmatpush1.xpose.msra.mxu0 0.0
        %1156 = vmatprep.subr.mxu0 0.0
        %1157 = vmatpush1.xpose.msra.mxu0 0.0
        %1158 = vmatprep.subr.mxu0 0.0
        %1159 = vmatpush1.xpose.msra.mxu0 0.0
        %1160 = vmatprep.subr.mxu0 0.0
        %1161 = vmatpush1.xpose.msra.mxu0 0.0
        %1162 = vmatprep.subr.mxu0 0.0
        %1163 = vmatpush1.xpose.msra.mxu0 0.0
        %1164 = vmatprep.subr.mxu0 0.0
        %1165 = vmatpush1.xpose.msra.mxu0 0.0
        %1166 = vmatprep.subr.mxu0 0.0
        %1167 = vmatpush1.xpose.msra.mxu0 0.0
        %1168 = vmatprep.subr.mxu0 0.0
        %1169 = vmatpush1.xpose.msra.mxu0 0.0
        %1170 = vmatprep.subr.mxu0 0.0
        %1171 = vmatpush1.xpose.msra.mxu0 0.0
        %1172 = vmatprep.subr.mxu0 0.0
        %1173 = vmatpush1.xpose.msra.mxu0 0.0
        %1174 = vmatprep.subr.mxu0 0.0
        %1175 = vmatpush1.xpose.msra.mxu0 0.0
        %1176 = vmatprep.subr.mxu0 0.0
        %1177 = vmatpush1.xpose.msra.mxu0 0.0
        %1178 = vmatprep.subr.mxu0 0.0
        %1179 = vmatpush1.xpose.msra.mxu0 0.0
        %1180 = vmatprep.subr.mxu0 0.0
        %1181 = vmatpush1.xpose.msra.mxu0 0.0
        %1182 = vmatprep.subr.mxu0 0.0
        %1183 = vmatpush1.xpose.msra.mxu0 0.0
        %1184 = vmatprep.subr.mxu0 0.0
        %1185 = vmatpush1.xpose.msra.mxu0 0.0
        %1186 = vmatprep.subr.mxu0 0.0
        %1187 = vmatpush1.xpose.msra.mxu0 0.0
        %1188 = vmatprep.subr.mxu0 0.0
        %1189 = vmatpush1.xpose.msra.mxu0 0.0
        %1190 = vmatprep.subr.mxu0 0.0
        %1191 = vmatpush1.xpose.msra.mxu0 0.0
        %1192 = vmatprep.subr.mxu0 0.0
        %1193 = vmatpush1.xpose.msra.mxu0 0.0
        %1194 = vmatprep.subr.mxu0 0.0
        %1195 = vmatpush1.xpose.msra.mxu0 0.0
        %1196 = vmatprep.subr.mxu0 0.0
        %1197 = vmatpush1.xpose.msra.mxu0 0.0
        %1198 = vmatprep.subr.mxu0 0.0
        %1199 = vmatpush1.xpose.msra.mxu0 0.0
        %1200 = vmatprep.subr.mxu0 0.0
        %1201 = vmatpush1.xpose.msra.mxu0 0.0
        %1202 = vmatprep.subr.mxu0 0.0
        %1203 = vmatpush1.xpose.msra.mxu0 0.0
        %1204 = vmatprep.subr.mxu0 0.0
        %1205 = vmatpush1.xpose.msra.mxu0 0.0
        %1206 = vmatprep.subr.mxu0 0.0
        %1207 = vmatpush1.xpose.msra.mxu0 0.0
        %1208 = vmatprep.subr.mxu0 0.0
        %1209 = vmatpush1.xpose.msra.mxu0 0.0
        %1210 = vmatprep.mubr.f32.mxu0 0.0
        %1211 = vmatmul.mubr.f32.gmra.mrb[0].mxu0 %v338
        %v1212 = vpop.f32.mrb[0].mxu0
        %v1213 = vadd.f32 0.0, %v1212
        %v1214 = vpop.f32.mrb[0].mxu0
        %1215 = vdwg.mxu0
        %vm1216 = vcmask 64512
        %v1218 = vsel %vm1216, %v410, 0
        %v1221 = vsel %vm1216, %v702, 0
        %1223 = vmatprep.subr.mxu0 0.0
        %1224 = vmatpush1.xpose.msra.mxu0 %v1221
        %1225 = vmatprep.subr.mxu0 0.0
        %1226 = vmatpush1.xpose.msra.mxu0 0.0
        %1227 = vmatprep.subr.mxu0 0.0
        %1228 = vmatpush1.xpose.msra.mxu0 0.0
        %1229 = vmatprep.subr.mxu0 0.0
        %1230 = vmatpush1.xpose.msra.mxu0 0.0
        %1231 = vmatprep.subr.mxu0 0.0
        %1232 = vmatpush1.xpose.msra.mxu0 0.0
        %1233 = vmatprep.subr.mxu0 0.0
        %1234 = vmatpush1.xpose.msra.mxu0 0.0
        %1235 = vmatprep.subr.mxu0 0.0
        %1236 = vmatpush1.xpose.msra.mxu0 0.0
        %1237 = vmatprep.subr.mxu0 0.0
        %1238 = vmatpush1.xpose.msra.mxu0 0.0
        %1239 = vmatprep.subr.mxu0 0.0
        %1240 = vmatpush1.xpose.msra.mxu0 0.0
        %1241 = vmatprep.subr.mxu0 0.0
        %1242 = vmatpush1.xpose.msra.mxu0 0.0
        %1243 = vmatprep.subr.mxu0 0.0
        %1244 = vmatpush1.xpose.msra.mxu0 0.0
        %1245 = vmatprep.subr.mxu0 0.0
        %1246 = vmatpush1.xpose.msra.mxu0 0.0
        %1247 = vmatprep.subr.mxu0 0.0
        %1248 = vmatpush1.xpose.msra.mxu0 0.0
        %1249 = vmatprep.subr.mxu0 0.0
        %1250 = vmatpush1.xpose.msra.mxu0 0.0
        %1251 = vmatprep.subr.mxu0 0.0
        %1252 = vmatpush1.xpose.msra.mxu0 0.0
        %1253 = vmatprep.subr.mxu0 0.0
        %1254 = vmatpush1.xpose.msra.mxu0 0.0
        %1255 = vmatprep.subr.mxu0 0.0
        %1256 = vmatpush1.xpose.msra.mxu0 0.0
        %1257 = vmatprep.subr.mxu0 0.0
        %1258 = vmatpush1.xpose.msra.mxu0 0.0
        %1259 = vmatprep.subr.mxu0 0.0
        %1260 = vmatpush1.xpose.msra.mxu0 0.0
        %1261 = vmatprep.subr.mxu0 0.0
        %1262 = vmatpush1.xpose.msra.mxu0 0.0
        %1263 = vmatprep.subr.mxu0 0.0
        %1264 = vmatpush1.xpose.msra.mxu0 0.0
        %1265 = vmatprep.subr.mxu0 0.0
        %1266 = vmatpush1.xpose.msra.mxu0 0.0
        %1267 = vmatprep.subr.mxu0 0.0
        %1268 = vmatpush1.xpose.msra.mxu0 0.0
        %1269 = vmatprep.subr.mxu0 0.0
        %1270 = vmatpush1.xpose.msra.mxu0 0.0
        %1271 = vmatprep.subr.mxu0 0.0
        %1272 = vmatpush1.xpose.msra.mxu0 0.0
        %1273 = vmatprep.subr.mxu0 0.0
        %1274 = vmatpush1.xpose.msra.mxu0 0.0
        %1275 = vmatprep.subr.mxu0 0.0
        %1276 = vmatpush1.xpose.msra.mxu0 0.0
        %1277 = vmatprep.subr.mxu0 0.0
        %1278 = vmatpush1.xpose.msra.mxu0 0.0
        %1279 = vmatprep.subr.mxu0 0.0
        %1280 = vmatpush1.xpose.msra.mxu0 0.0
        %1281 = vmatprep.subr.mxu0 0.0
        %1282 = vmatpush1.xpose.msra.mxu0 0.0
        %1283 = vmatprep.subr.mxu0 0.0
        %1284 = vmatpush1.xpose.msra.mxu0 0.0
        %1285 = vmatprep.subr.mxu0 0.0
        %1286 = vmatpush1.xpose.msra.mxu0 0.0
        %1287 = vmatprep.mubr.f32.mxu0 0.0
        %1288 = vmatmul.mubr.f32.gmra.mrb[0].mxu0 %v1218
        %v1289 = vpop.f32.mrb[0].mxu0
        %v1290 = vadd.f32 0.0, %v1289
        %v1291 = vpop.f32.mrb[0].mxu0
        %1292 = vdwg.mxu0
        %v1294 = vsel %vm1216, %v483, 0
        %v1297 = vsel %vm1216, %v775, 0
        %1299 = vmatprep.subr.mxu0 0.0
        %1300 = vmatpush1.xpose.msra.mxu0 %v1297
        %1301 = vmatprep.subr.mxu0 0.0
        %1302 = vmatpush1.xpose.msra.mxu0 0.0
        %1303 = vmatprep.subr.mxu0 0.0
        %1304 = vmatpush1.xpose.msra.mxu0 0.0
        %1305 = vmatprep.subr.mxu0 0.0
        %1306 = vmatpush1.xpose.msra.mxu0 0.0
        %1307 = vmatprep.subr.mxu0 0.0
        %1308 = vmatpush1.xpose.msra.mxu0 0.0
        %1309 = vmatprep.subr.mxu0 0.0
        %1310 = vmatpush1.xpose.msra.mxu0 0.0
        %1311 = vmatprep.subr.mxu0 0.0
        %1312 = vmatpush1.xpose.msra.mxu0 0.0
        %1313 = vmatprep.subr.mxu0 0.0
        %1314 = vmatpush1.xpose.msra.mxu0 0.0
        %1315 = vmatprep.subr.mxu0 0.0
        %1316 = vmatpush1.xpose.msra.mxu0 0.0
        %1317 = vmatprep.subr.mxu0 0.0
        %1318 = vmatpush1.xpose.msra.mxu0 0.0
        %1319 = vmatprep.subr.mxu0 0.0
        %1320 = vmatpush1.xpose.msra.mxu0 0.0
        %1321 = vmatprep.subr.mxu0 0.0
        %1322 = vmatpush1.xpose.msra.mxu0 0.0
        %1323 = vmatprep.subr.mxu0 0.0
        %1324 = vmatpush1.xpose.msra.mxu0 0.0
        %1325 = vmatprep.subr.mxu0 0.0
        %1326 = vmatpush1.xpose.msra.mxu0 0.0
        %1327 = vmatprep.subr.mxu0 0.0
        %1328 = vmatpush1.xpose.msra.mxu0 0.0
        %1329 = vmatprep.subr.mxu0 0.0
        %1330 = vmatpush1.xpose.msra.mxu0 0.0
        %1331 = vmatprep.subr.mxu0 0.0
        %1332 = vmatpush1.xpose.msra.mxu0 0.0
        %1333 = vmatprep.subr.mxu0 0.0
        %1334 = vmatpush1.xpose.msra.mxu0 0.0
        %1335 = vmatprep.subr.mxu0 0.0
        %1336 = vmatpush1.xpose.msra.mxu0 0.0
        %1337 = vmatprep.subr.mxu0 0.0
        %1338 = vmatpush1.xpose.msra.mxu0 0.0
        %1339 = vmatprep.subr.mxu0 0.0
        %1340 = vmatpush1.xpose.msra.mxu0 0.0
        %1341 = vmatprep.subr.mxu0 0.0
        %1342 = vmatpush1.xpose.msra.mxu0 0.0
        %1343 = vmatprep.subr.mxu0 0.0
        %1344 = vmatpush1.xpose.msra.mxu0 0.0
        %1345 = vmatprep.subr.mxu0 0.0
        %1346 = vmatpush1.xpose.msra.mxu0 0.0
        %1347 = vmatprep.subr.mxu0 0.0
        %1348 = vmatpush1.xpose.msra.mxu0 0.0
        %1349 = vmatprep.subr.mxu0 0.0
        %1350 = vmatpush1.xpose.msra.mxu0 0.0
        %1351 = vmatprep.subr.mxu0 0.0
        %1352 = vmatpush1.xpose.msra.mxu0 0.0
        %1353 = vmatprep.subr.mxu0 0.0
        %1354 = vmatpush1.xpose.msra.mxu0 0.0
        %1355 = vmatprep.subr.mxu0 0.0
        %1356 = vmatpush1.xpose.msra.mxu0 0.0
        %1357 = vmatprep.subr.mxu0 0.0
        %1358 = vmatpush1.xpose.msra.mxu0 0.0
        %1359 = vmatprep.subr.mxu0 0.0
        %1360 = vmatpush1.xpose.msra.mxu0 0.0
        %1361 = vmatprep.subr.mxu0 0.0
        %1362 = vmatpush1.xpose.msra.mxu0 0.0
        %1363 = vmatprep.mubr.f32.mxu0 0.0
        %1364 = vmatmul.mubr.f32.gmra.mrb[0].mxu0 %v1294
        %v1365 = vpop.f32.mrb[0].mxu0
        %v1366 = vadd.f32 0.0, %v1365
        %v1367 = vpop.f32.mrb[0].mxu0
        %1368 = vdwg.mxu0
        %v1370 = vsel %vm1216, %v556, 0
        %v1373 = vsel %vm1216, %v848, 0
        %1375 = vmatprep.subr.mxu0 0.0
        %1376 = vmatpush1.xpose.msra.mxu0 %v1373
        %1377 = vmatprep.subr.mxu0 0.0
        %1378 = vmatpush1.xpose.msra.mxu0 0.0
        %1379 = vmatprep.subr.mxu0 0.0
        %1380 = vmatpush1.xpose.msra.mxu0 0.0
        %1381 = vmatprep.subr.mxu0 0.0
        %1382 = vmatpush1.xpose.msra.mxu0 0.0
        %1383 = vmatprep.subr.mxu0 0.0
        %1384 = vmatpush1.xpose.msra.mxu0 0.0
        %1385 = vmatprep.subr.mxu0 0.0
        %1386 = vmatpush1.xpose.msra.mxu0 0.0
        %1387 = vmatprep.subr.mxu0 0.0
        %1388 = vmatpush1.xpose.msra.mxu0 0.0
        %1389 = vmatprep.subr.mxu0 0.0
        %1390 = vmatpush1.xpose.msra.mxu0 0.0
        %1391 = vmatprep.subr.mxu0 0.0
        %1392 = vmatpush1.xpose.msra.mxu0 0.0
        %1393 = vmatprep.subr.mxu0 0.0
        %1394 = vmatpush1.xpose.msra.mxu0 0.0
        %1395 = vmatprep.subr.mxu0 0.0
        %1396 = vmatpush1.xpose.msra.mxu0 0.0
        %1397 = vmatprep.subr.mxu0 0.0
        %1398 = vmatpush1.xpose.msra.mxu0 0.0
        %1399 = vmatprep.subr.mxu0 0.0
        %1400 = vmatpush1.xpose.msra.mxu0 0.0
        %1401 = vmatprep.subr.mxu0 0.0
        %1402 = vmatpush1.xpose.msra.mxu0 0.0
        %1403 = vmatprep.subr.mxu0 0.0
        %1404 = vmatpush1.xpose.msra.mxu0 0.0
        %1405 = vmatprep.subr.mxu0 0.0
        %1406 = vmatpush1.xpose.msra.mxu0 0.0
        %1407 = vmatprep.subr.mxu0 0.0
        %1408 = vmatpush1.xpose.msra.mxu0 0.0
        %1409 = vmatprep.subr.mxu0 0.0
        %1410 = vmatpush1.xpose.msra.mxu0 0.0
        %1411 = vmatprep.subr.mxu0 0.0
        %1412 = vmatpush1.xpose.msra.mxu0 0.0
        %1413 = vmatprep.subr.mxu0 0.0
        %1414 = vmatpush1.xpose.msra.mxu0 0.0
        %1415 = vmatprep.subr.mxu0 0.0
        %1416 = vmatpush1.xpose.msra.mxu0 0.0
        %1417 = vmatprep.subr.mxu0 0.0
        %1418 = vmatpush1.xpose.msra.mxu0 0.0
        %1419 = vmatprep.subr.mxu0 0.0
        %1420 = vmatpush1.xpose.msra.mxu0 0.0
        %1421 = vmatprep.subr.mxu0 0.0
        %1422 = vmatpush1.xpose.msra.mxu0 0.0
        %1423 = vmatprep.subr.mxu0 0.0
        %1424 = vmatpush1.xpose.msra.mxu0 0.0
        %1425 = vmatprep.subr.mxu0 0.0
        %1426 = vmatpush1.xpose.msra.mxu0 0.0
        %1427 = vmatprep.subr.mxu0 0.0
        %1428 = vmatpush1.xpose.msra.mxu0 0.0
        %1429 = vmatprep.subr.mxu0 0.0
        %1430 = vmatpush1.xpose.msra.mxu0 0.0
        %1431 = vmatprep.subr.mxu0 0.0
        %1432 = vmatpush1.xpose.msra.mxu0 0.0
        %1433 = vmatprep.subr.mxu0 0.0
        %1434 = vmatpush1.xpose.msra.mxu0 0.0
        %1435 = vmatprep.subr.mxu0 0.0
        %1436 = vmatpush1.xpose.msra.mxu0 0.0
        %1437 = vmatprep.subr.mxu0 0.0
        %1438 = vmatpush1.xpose.msra.mxu0 0.0
        %1439 = vmatprep.mubr.f32.mxu0 0.0
        %1440 = vmatmul.mubr.f32.gmra.mrb[0].mxu0 %v1370
        %v1441 = vpop.f32.mrb[0].mxu0
        %v1442 = vadd.f32 0.0, %v1441
        %v1443 = vpop.f32.mrb[0].mxu0
        %1444 = vdwg.mxu0
        %v1446 = vsel %vm1216, %v629, 0
        %v1449 = vsel %vm1216, %v921, 0
        %1451 = vmatprep.subr.mxu0 0.0
        %1452 = vmatpush1.xpose.msra.mxu0 %v1449
        %1453 = vmatprep.subr.mxu0 0.0
        %1454 = vmatpush1.xpose.msra.mxu0 0.0
        %1455 = vmatprep.subr.mxu0 0.0
        %1456 = vmatpush1.xpose.msra.mxu0 0.0
        %1457 = vmatprep.subr.mxu0 0.0
        %1458 = vmatpush1.xpose.msra.mxu0 0.0
        %1459 = vmatprep.subr.mxu0 0.0
        %1460 = vmatpush1.xpose.msra.mxu0 0.0
        %1461 = vmatprep.subr.mxu0 0.0
        %1462 = vmatpush1.xpose.msra.mxu0 0.0
        %1463 = vmatprep.subr.mxu0 0.0
        %1464 = vmatpush1.xpose.msra.mxu0 0.0
        %1465 = vmatprep.subr.mxu0 0.0
        %1466 = vmatpush1.xpose.msra.mxu0 0.0
        %1467 = vmatprep.subr.mxu0 0.0
        %1468 = vmatpush1.xpose.msra.mxu0 0.0
        %1469 = vmatprep.subr.mxu0 0.0
        %1470 = vmatpush1.xpose.msra.mxu0 0.0
        %1471 = vmatprep.subr.mxu0 0.0
        %1472 = vmatpush1.xpose.msra.mxu0 0.0
        %1473 = vmatprep.subr.mxu0 0.0
        %1474 = vmatpush1.xpose.msra.mxu0 0.0
        %1475 = vmatprep.subr.mxu0 0.0
        %1476 = vmatpush1.xpose.msra.mxu0 0.0
        %1477 = vmatprep.subr.mxu0 0.0
        %1478 = vmatpush1.xpose.msra.mxu0 0.0
        %1479 = vmatprep.subr.mxu0 0.0
        %1480 = vmatpush1.xpose.msra.mxu0 0.0
        %1481 = vmatprep.subr.mxu0 0.0
        %1482 = vmatpush1.xpose.msra.mxu0 0.0
        %1483 = vmatprep.subr.mxu0 0.0
        %1484 = vmatpush1.xpose.msra.mxu0 0.0
        %1485 = vmatprep.subr.mxu0 0.0
        %1486 = vmatpush1.xpose.msra.mxu0 0.0
        %1487 = vmatprep.subr.mxu0 0.0
        %1488 = vmatpush1.xpose.msra.mxu0 0.0
        %1489 = vmatprep.subr.mxu0 0.0
        %1490 = vmatpush1.xpose.msra.mxu0 0.0
        %1491 = vmatprep.subr.mxu0 0.0
        %1492 = vmatpush1.xpose.msra.mxu0 0.0
        %1493 = vmatprep.subr.mxu0 0.0
        %1494 = vmatpush1.xpose.msra.mxu0 0.0
        %1495 = vmatprep.subr.mxu0 0.0
        %1496 = vmatpush1.xpose.msra.mxu0 0.0
        %1497 = vmatprep.subr.mxu0 0.0
        %1498 = vmatpush1.xpose.msra.mxu0 0.0
        %1499 = vmatprep.subr.mxu0 0.0
        %1500 = vmatpush1.xpose.msra.mxu0 0.0
        %1501 = vmatprep.subr.mxu0 0.0
        %1502 = vmatpush1.xpose.msra.mxu0 0.0
        %1503 = vmatprep.subr.mxu0 0.0
        %1504 = vmatpush1.xpose.msra.mxu0 0.0
        %1505 = vmatprep.subr.mxu0 0.0
        %1506 = vmatpush1.xpose.msra.mxu0 0.0
        %1507 = vmatprep.subr.mxu0 0.0
        %1508 = vmatpush1.xpose.msra.mxu0 0.0
        %1509 = vmatprep.subr.mxu0 0.0
        %1510 = vmatpush1.xpose.msra.mxu0 0.0
        %1511 = vmatprep.subr.mxu0 0.0
        %1512 = vmatpush1.xpose.msra.mxu0 0.0
        %1513 = vmatprep.subr.mxu0 0.0
        %1514 = vmatpush1.xpose.msra.mxu0 0.0
        %1515 = vmatprep.mubr.f32.mxu0 0.0
        %1516 = vmatmul.mubr.f32.gmra.mrb[0].mxu0 %v1446
        %v1517 = vpop.f32.mrb[0].mxu0
        %v1518 = vadd.f32 0.0, %v1517
        %v1519 = vpop.f32.mrb[0].mxu0
        %1520 = vdwg.mxu0
        %v1521 = vsel %vm1216, %v1290, -inf
        %1522 = vmax.xlane.f32.xlu0 %v1521
        %v1523 = vpop.xlane.xlu0 %1522
        %v1524 = vsel %vm1216, %v1366, -inf
        %1525 = vmax.xlane.f32.xlu0 %v1524
        %v1526 = vpop.xlane.xlu0 %1525
        %v1527 = vsel %vm1216, %v1442, -inf
        %1528 = vmax.xlane.f32.xlu0 %v1527
        %v1529 = vpop.xlane.xlu0 %1528
        %v1530 = vsel %vm1216, %v1518, -inf
        %1531 = vmax.xlane.f32.xlu0 %v1530
        %v1532 = vpop.xlane.xlu0 %1531
        %v1533 = vsub.f32 %v1290, %v1523
        %v1534 = vsub.f32 %v1366, %v1526
        %v1535 = vsub.f32 %v1442, %v1529
        %v1536 = vsub.f32 %v1518, %v1532
        %v1537 = vmul.f32 %v1533, 1.442695
        %v1538 = vpow.pop %v1537
        %v1539 = vmul.f32 %v1534, 1.442695
        %v1540 = vpow.pop %v1539
        %v1541 = vmul.f32 %v1535, 1.442695
        %v1542 = vpow.pop %v1541
        %v1543 = vmul.f32 %v1536, 1.442695
        %v1544 = vpow.pop %v1543
        %v1545 = vsel %vm1216, %v1538, 0.0
        %1546 = vadd.xlane.f32.xlu0 %v1545
        %v1547 = vpop.xlane.xlu0 %1546
        %v1548 = vsel %vm1216, %v1540, 0.0
        %1549 = vadd.xlane.f32.xlu0 %v1548
        %v1550 = vpop.xlane.xlu0 %1549
        %v1551 = vsel %vm1216, %v1542, 0.0
        %1552 = vadd.xlane.f32.xlu0 %v1551
        %v1553 = vpop.xlane.xlu0 %1552
        %v1554 = vsel %vm1216, %v1544, 0.0
        %1555 = vadd.xlane.f32.xlu0 %v1554
        %v1556 = vpop.xlane.xlu0 %1555
        %v1557 = vrcp.pop %v1547
        %v1558 = vmul.f32 %v1538, %v1557
        %v1559 = vrcp.pop %v1550
        %v1560 = vmul.f32 %v1540, %v1559
        %v1561 = vrcp.pop %v1553
        %v1562 = vmul.f32 %v1542, %v1561
        %v1563 = vrcp.pop %v1556
        %v1564 = vmul.f32 %v1544, %v1563
        %v1566 = vsel %vm1216, %v1558, 0
        %1568 = vmatprep.subr.mxu0 0.0
        %1569 = vmatpush1.msra.mxu0 %v994
        %1570 = vmatprep.subr.mxu0 0.0
        %1571 = vmatpush1.msra.mxu0 0.0
        %1572 = vmatprep.subr.mxu0 0.0
        %1573 = vmatpush1.msra.mxu0 0.0
        %1574 = vmatprep.subr.mxu0 0.0
        %1575 = vmatpush1.msra.mxu0 0.0
        %1576 = vmatprep.subr.mxu0 0.0
        %1577 = vmatpush1.msra.mxu0 0.0
        %1578 = vmatprep.subr.mxu0 0.0
        %1579 = vmatpush1.msra.mxu0 0.0
        %1580 = vmatprep.subr.mxu0 0.0
        %1581 = vmatpush1.msra.mxu0 0.0
        %1582 = vmatprep.subr.mxu0 0.0
        %1583 = vmatpush1.msra.mxu0 0.0
        %1584 = vmatprep.subr.mxu0 0.0
        %1585 = vmatpush1.msra.mxu0 0.0
        %1586 = vmatprep.subr.mxu0 0.0
        %1587 = vmatpush1.msra.mxu0 0.0
        %1588 = vmatprep.subr.mxu0 0.0
        %1589 = vmatpush1.msra.mxu0 0.0
        %1590 = vmatprep.subr.mxu0 0.0
        %1591 = vmatpush1.msra.mxu0 0.0
        %1592 = vmatprep.subr.mxu0 0.0
        %1593 = vmatpush1.msra.mxu0 0.0
        %1594 = vmatprep.subr.mxu0 0.0
        %1595 = vmatpush1.msra.mxu0 0.0
        %1596 = vmatprep.subr.mxu0 0.0
        %1597 = vmatpush1.msra.mxu0 0.0
        %1598 = vmatprep.subr.mxu0 0.0
        %1599 = vmatpush1.msra.mxu0 0.0
        %1600 = vmatprep.subr.mxu0 0.0
        %1601 = vmatpush1.msra.mxu0 0.0
        %1602 = vmatprep.subr.mxu0 0.0
        %1603 = vmatpush1.msra.mxu0 0.0
        %1604 = vmatprep.subr.mxu0 0.0
        %1605 = vmatpush1.msra.mxu0 0.0
        %1606 = vmatprep.subr.mxu0 0.0
        %1607 = vmatpush1.msra.mxu0 0.0
        %1608 = vmatprep.subr.mxu0 0.0
        %1609 = vmatpush1.msra.mxu0 0.0
        %1610 = vmatprep.subr.mxu0 0.0
        %1611 = vmatpush1.msra.mxu0 0.0
        %1612 = vmatprep.subr.mxu0 0.0
        %1613 = vmatpush1.msra.mxu0 0.0
        %1614 = vmatprep.subr.mxu0 0.0
        %1615 = vmatpush1.msra.mxu0 0.0
        %1616 = vmatprep.subr.mxu0 0.0
        %1617 = vmatpush1.msra.mxu0 0.0
        %1618 = vmatprep.subr.mxu0 0.0
        %1619 = vmatpush1.msra.mxu0 0.0
        %1620 = vmatprep.subr.mxu0 0.0
        %1621 = vmatpush1.msra.mxu0 0.0
        %1622 = vmatprep.subr.mxu0 0.0
        %1623 = vmatpush1.msra.mxu0 0.0
        %1624 = vmatprep.subr.mxu0 0.0
        %1625 = vmatpush1.msra.mxu0 0.0
        %1626 = vmatprep.subr.mxu0 0.0
        %1627 = vmatpush1.msra.mxu0 0.0
        %1628 = vmatprep.subr.mxu0 0.0
        %1629 = vmatpush1.msra.mxu0 0.0
        %1630 = vmatprep.subr.mxu0 0.0
        %1631 = vmatpush1.msra.mxu0 0.0
        %1632 = vmatprep.mubr.f32.mxu0 0.0
        %1633 = vmatmul.mubr.f32.gmra.mrb[0].mxu0 %v1566
        %v1634 = vpop.f32.mrb[0].mxu0
        %v1635 = vadd.f32 0.0, %v1634
        %v1636 = vpop.f32.mrb[0].mxu0
        %1637 = vdwg.mxu0
        %v1639 = vsel %vm1216, %v1560, 0
        %1641 = vmatprep.subr.mxu0 0.0
        %1642 = vmatpush1.msra.mxu0 %v1067
        %1643 = vmatprep.subr.mxu0 0.0
        %1644 = vmatpush1.msra.mxu0 0.0
        %1645 = vmatprep.subr.mxu0 0.0
        %1646 = vmatpush1.msra.mxu0 0.0
        %1647 = vmatprep.subr.mxu0 0.0
        %1648 = vmatpush1.msra.mxu0 0.0
        %1649 = vmatprep.subr.mxu0 0.0
        %1650 = vmatpush1.msra.mxu0 0.0
        %1651 = vmatprep.subr.mxu0 0.0
        %1652 = vmatpush1.msra.mxu0 0.0
        %1653 = vmatprep.subr.mxu0 0.0
        %1654 = vmatpush1.msra.mxu0 0.0
        %1655 = vmatprep.subr.mxu0 0.0
        %1656 = vmatpush1.msra.mxu0 0.0
        %1657 = vmatprep.subr.mxu0 0.0
        %1658 = vmatpush1.msra.mxu0 0.0
        %1659 = vmatprep.subr.mxu0 0.0
        %1660 = vmatpush1.msra.mxu0 0.0
        %1661 = vmatprep.subr.mxu0 0.0
        %1662 = vmatpush1.msra.mxu0 0.0
        %1663 = vmatprep.subr.mxu0 0.0
        %1664 = vmatpush1.msra.mxu0 0.0
        %1665 = vmatprep.subr.mxu0 0.0
        %1666 = vmatpush1.msra.mxu0 0.0
        %1667 = vmatprep.subr.mxu0 0.0
        %1668 = vmatpush1.msra.mxu0 0.0
        %1669 = vmatprep.subr.mxu0 0.0
        %1670 = vmatpush1.msra.mxu0 0.0
        %1671 = vmatprep.subr.mxu0 0.0
        %1672 = vmatpush1.msra.mxu0 0.0
        %1673 = vmatprep.subr.mxu0 0.0
        %1674 = vmatpush1.msra.mxu0 0.0
        %1675 = vmatprep.subr.mxu0 0.0
        %1676 = vmatpush1.msra.mxu0 0.0
        %1677 = vmatprep.subr.mxu0 0.0
        %1678 = vmatpush1.msra.mxu0 0.0
        %1679 = vmatprep.subr.mxu0 0.0
        %1680 = vmatpush1.msra.mxu0 0.0
        %1681 = vmatprep.subr.mxu0 0.0
        %1682 = vmatpush1.msra.mxu0 0.0
        %1683 = vmatprep.subr.mxu0 0.0
        %1684 = vmatpush1.msra.mxu0 0.0
        %1685 = vmatprep.subr.mxu0 0.0
        %1686 = vmatpush1.msra.mxu0 0.0
        %1687 = vmatprep.subr.mxu0 0.0
        %1688 = vmatpush1.msra.mxu0 0.0
        %1689 = vmatprep.subr.mxu0 0.0
        %1690 = vmatpush1.msra.mxu0 0.0
        %1691 = vmatprep.subr.mxu0 0.0
        %1692 = vmatpush1.msra.mxu0 0.0
        %1693 = vmatprep.subr.mxu0 0.0
        %1694 = vmatpush1.msra.mxu0 0.0
        %1695 = vmatprep.subr.mxu0 0.0
        %1696 = vmatpush1.msra.mxu0 0.0
        %1697 = vmatprep.subr.mxu0 0.0
        %1698 = vmatpush1.msra.mxu0 0.0
        %1699 = vmatprep.subr.mxu0 0.0
        %1700 = vmatpush1.msra.mxu0 0.0
        %1701 = vmatprep.subr.mxu0 0.0
        %1702 = vmatpush1.msra.mxu0 0.0
        %1703 = vmatprep.subr.mxu0 0.0
        %1704 = vmatpush1.msra.mxu0 0.0
        %1705 = vmatprep.mubr.f32.mxu0 0.0
        %1706 = vmatmul.mubr.f32.gmra.mrb[0].mxu0 %v1639
        %v1707 = vpop.f32.mrb[0].mxu0
        %v1708 = vadd.f32 0.0, %v1707
        %v1709 = vpop.f32.mrb[0].mxu0
        %1710 = vdwg.mxu0
        %v1712 = vsel %vm1216, %v1562, 0
        %1714 = vmatprep.subr.mxu0 0.0
        %1715 = vmatpush1.msra.mxu0 %v1140
        %1716 = vmatprep.subr.mxu0 0.0
        %1717 = vmatpush1.msra.mxu0 0.0
        %1718 = vmatprep.subr.mxu0 0.0
        %1719 = vmatpush1.msra.mxu0 0.0
        %1720 = vmatprep.subr.mxu0 0.0
        %1721 = vmatpush1.msra.mxu0 0.0
        %1722 = vmatprep.subr.mxu0 0.0
        %1723 = vmatpush1.msra.mxu0 0.0
        %1724 = vmatprep.subr.mxu0 0.0
        %1725 = vmatpush1.msra.mxu0 0.0
        %1726 = vmatprep.subr.mxu0 0.0
        %1727 = vmatpush1.msra.mxu0 0.0
        %1728 = vmatprep.subr.mxu0 0.0
        %1729 = vmatpush1.msra.mxu0 0.0
        %1730 = vmatprep.subr.mxu0 0.0
        %1731 = vmatpush1.msra.mxu0 0.0
        %1732 = vmatprep.subr.mxu0 0.0
        %1733 = vmatpush1.msra.mxu0 0.0
        %1734 = vmatprep.subr.mxu0 0.0
        %1735 = vmatpush1.msra.mxu0 0.0
        %1736 = vmatprep.subr.mxu0 0.0
        %1737 = vmatpush1.msra.mxu0 0.0
        %1738 = vmatprep.subr.mxu0 0.0
        %1739 = vmatpush1.msra.mxu0 0.0
        %1740 = vmatprep.subr.mxu0 0.0
        %1741 = vmatpush1.msra.mxu0 0.0
        %1742 = vmatprep.subr.mxu0 0.0
        %1743 = vmatpush1.msra.mxu0 0.0
        %1744 = vmatprep.subr.mxu0 0.0
        %1745 = vmatpush1.msra.mxu0 0.0
        %1746 = vmatprep.subr.mxu0 0.0
        %1747 = vmatpush1.msra.mxu0 0.0
        %1748 = vmatprep.subr.mxu0 0.0
        %1749 = vmatpush1.msra.mxu0 0.0
        %1750 = vmatprep.subr.mxu0 0.0
        %1751 = vmatpush1.msra.mxu0 0.0
        %1752 = vmatprep.subr.mxu0 0.0
        %1753 = vmatpush1.msra.mxu0 0.0
        %1754 = vmatprep.subr.mxu0 0.0
        %1755 = vmatpush1.msra.mxu0 0.0
        %1756 = vmatprep.subr.mxu0 0.0
        %1757 = vmatpush1.msra.mxu0 0.0
        %1758 = vmatprep.subr.mxu0 0.0
        %1759 = vmatpush1.msra.mxu0 0.0
        %1760 = vmatprep.subr.mxu0 0.0
        %1761 = vmatpush1.msra.mxu0 0.0
        %1762 = vmatprep.subr.mxu0 0.0
        %1763 = vmatpush1.msra.mxu0 0.0
        %1764 = vmatprep.subr.mxu0 0.0
        %1765 = vmatpush1.msra.mxu0 0.0
        %1766 = vmatprep.subr.mxu0 0.0
        %1767 = vmatpush1.msra.mxu0 0.0
        %1768 = vmatprep.subr.mxu0 0.0
        %1769 = vmatpush1.msra.mxu0 0.0
        %1770 = vmatprep.subr.mxu0 0.0
        %1771 = vmatpush1.msra.mxu0 0.0
        %1772 = vmatprep.subr.mxu0 0.0
        %1773 = vmatpush1.msra.mxu0 0.0
        %1774 = vmatprep.subr.mxu0 0.0
        %1775 = vmatpush1.msra.mxu0 0.0
        %1776 = vmatprep.subr.mxu0 0.0
        %1777 = vmatpush1.msra.mxu0 0.0
        %1778 = vmatprep.mubr.f32.mxu0 0.0
        %1779 = vmatmul.mubr.f32.gmra.mrb[0].mxu0 %v1712
        %v1780 = vpop.f32.mrb[0].mxu0
        %v1781 = vadd.f32 0.0, %v1780
        %v1782 = vpop.f32.mrb[0].mxu0
        %1783 = vdwg.mxu0
        %v1785 = vsel %vm1216, %v1564, 0
        %1787 = vmatprep.subr.mxu0 0.0
        %1788 = vmatpush1.msra.mxu0 %v1213
        %1789 = vmatprep.subr.mxu0 0.0
        %1790 = vmatpush1.msra.mxu0 0.0
        %1791 = vmatprep.subr.mxu0 0.0
        %1792 = vmatpush1.msra.mxu0 0.0
        %1793 = vmatprep.subr.mxu0 0.0
        %1794 = vmatpush1.msra.mxu0 0.0
        %1795 = vmatprep.subr.mxu0 0.0
        %1796 = vmatpush1.msra.mxu0 0.0
        %1797 = vmatprep.subr.mxu0 0.0
        %1798 = vmatpush1.msra.mxu0 0.0
        %1799 = vmatprep.subr.mxu0 0.0
        %1800 = vmatpush1.msra.mxu0 0.0
        %1801 = vmatprep.subr.mxu0 0.0
        %1802 = vmatpush1.msra.mxu0 0.0
        %1803 = vmatprep.subr.mxu0 0.0
        %1804 = vmatpush1.msra.mxu0 0.0
        %1805 = vmatprep.subr.mxu0 0.0
        %1806 = vmatpush1.msra.mxu0 0.0
        %1807 = vmatprep.subr.mxu0 0.0
        %1808 = vmatpush1.msra.mxu0 0.0
        %1809 = vmatprep.subr.mxu0 0.0
        %1810 = vmatpush1.msra.mxu0 0.0
        %1811 = vmatprep.subr.mxu0 0.0
        %1812 = vmatpush1.msra.mxu0 0.0
        %1813 = vmatprep.subr.mxu0 0.0
        %1814 = vmatpush1.msra.mxu0 0.0
        %1815 = vmatprep.subr.mxu0 0.0
        %1816 = vmatpush1.msra.mxu0 0.0
        %1817 = vmatprep.subr.mxu0 0.0
        %1818 = vmatpush1.msra.mxu0 0.0
        %1819 = vmatprep.subr.mxu0 0.0
        %1820 = vmatpush1.msra.mxu0 0.0
        %1821 = vmatprep.subr.mxu0 0.0
        %1822 = vmatpush1.msra.mxu0 0.0
        %1823 = vmatprep.subr.mxu0 0.0
        %1824 = vmatpush1.msra.mxu0 0.0
        %1825 = vmatprep.subr.mxu0 0.0
        %1826 = vmatpush1.msra.mxu0 0.0
        %1827 = vmatprep.subr.mxu0 0.0
        %1828 = vmatpush1.msra.mxu0 0.0
        %1829 = vmatprep.subr.mxu0 0.0
        %1830 = vmatpush1.msra.mxu0 0.0
        %1831 = vmatprep.subr.mxu0 0.0
        %1832 = vmatpush1.msra.mxu0 0.0
        %1833 = vmatprep.subr.mxu0 0.0
        %1834 = vmatpush1.msra.mxu0 0.0
        %1835 = vmatprep.subr.mxu0 0.0
        %1836 = vmatpush1.msra.mxu0 0.0
        %1837 = vmatprep.subr.mxu0 0.0
        %1838 = vmatpush1.msra.mxu0 0.0
        %1839 = vmatprep.subr.mxu0 0.0
        %1840 = vmatpush1.msra.mxu0 0.0
        %1841 = vmatprep.subr.mxu0 0.0
        %1842 = vmatpush1.msra.mxu0 0.0
        %1843 = vmatprep.subr.mxu0 0.0
        %1844 = vmatpush1.msra.mxu0 0.0
        %1845 = vmatprep.subr.mxu0 0.0
        %1846 = vmatpush1.msra.mxu0 0.0
        %1847 = vmatprep.subr.mxu0 0.0
        %1848 = vmatpush1.msra.mxu0 0.0
        %1849 = vmatprep.subr.mxu0 0.0
        %1850 = vmatpush1.msra.mxu0 0.0
        %1851 = vmatprep.mubr.f32.mxu0 0.0
        %1852 = vmatmul.mubr.f32.gmra.mrb[0].mxu0 %v1785
        %v1853 = vpop.f32.mrb[0].mxu0
        %v1854 = vadd.f32 0.0, %v1853
        %v1855 = vpop.f32.mrb[0].mxu0
        %1856 = vdwg.mxu0
        %v1857 = vld [vmem:[#allocation5] sm:$0xff]
        %v1858 = vld [vmem:[#allocation5 + $0x8] sm:$0xff]
        %v1859 = vld [vmem:[#allocation5 + $0x10] sm:$0xff]
        %v1860 = vld [vmem:[#allocation5 + $0x18] sm:$0xff]
        %v1862 = vsel %vm1216, %v1635, 0
        %1864 = vmatprep.subr.mxu0 0.0
        %1865 = vmatpush1.msra.mxu0 %v1857
        %1866 = vmatprep.subr.mxu0 0.0
        %1867 = vmatpush1.msra.mxu0 0.0
        %1868 = vmatprep.subr.mxu0 0.0
        %1869 = vmatpush1.msra.mxu0 0.0
        %1870 = vmatprep.subr.mxu0 0.0
        %1871 = vmatpush1.msra.mxu0 0.0
        %1872 = vmatprep.subr.mxu0 0.0
        %1873 = vmatpush1.msra.mxu0 0.0
        %1874 = vmatprep.subr.mxu0 0.0
        %1875 = vmatpush1.msra.mxu0 0.0
        %1876 = vmatprep.subr.mxu0 0.0
        %1877 = vmatpush1.msra.mxu0 0.0
        %1878 = vmatprep.subr.mxu0 0.0
        %1879 = vmatpush1.msra.mxu0 0.0
        %1880 = vmatprep.subr.mxu0 0.0
        %1881 = vmatpush1.msra.mxu0 0.0
        %1882 = vmatprep.subr.mxu0 0.0
        %1883 = vmatpush1.msra.mxu0 0.0
        %1884 = vmatprep.subr.mxu0 0.0
        %1885 = vmatpush1.msra.mxu0 0.0
        %1886 = vmatprep.subr.mxu0 0.0
        %1887 = vmatpush1.msra.mxu0 0.0
        %1888 = vmatprep.subr.mxu0 0.0
        %1889 = vmatpush1.msra.mxu0 0.0
        %1890 = vmatprep.subr.mxu0 0.0
        %1891 = vmatpush1.msra.mxu0 0.0
        %1892 = vmatprep.subr.mxu0 0.0
        %1893 = vmatpush1.msra.mxu0 0.0
        %1894 = vmatprep.subr.mxu0 0.0
        %1895 = vmatpush1.msra.mxu0 0.0
        %1896 = vmatprep.subr.mxu0 0.0
        %1897 = vmatpush1.msra.mxu0 0.0
        %1898 = vmatprep.subr.mxu0 0.0
        %1899 = vmatpush1.msra.mxu0 0.0
        %1900 = vmatprep.subr.mxu0 0.0
        %1901 = vmatpush1.msra.mxu0 0.0
        %1902 = vmatprep.subr.mxu0 0.0
        %1903 = vmatpush1.msra.mxu0 0.0
        %1904 = vmatprep.subr.mxu0 0.0
        %1905 = vmatpush1.msra.mxu0 0.0
        %1906 = vmatprep.subr.mxu0 0.0
        %1907 = vmatpush1.msra.mxu0 0.0
        %1908 = vmatprep.subr.mxu0 0.0
        %1909 = vmatpush1.msra.mxu0 0.0
        %1910 = vmatprep.subr.mxu0 0.0
        %1911 = vmatpush1.msra.mxu0 0.0
        %1912 = vmatprep.subr.mxu0 0.0
        %1913 = vmatpush1.msra.mxu0 0.0
        %1914 = vmatprep.subr.mxu0 0.0
        %1915 = vmatpush1.msra.mxu0 0.0
        %1916 = vmatprep.subr.mxu0 0.0
        %1917 = vmatpush1.msra.mxu0 0.0
        %1918 = vmatprep.subr.mxu0 0.0
        %1919 = vmatpush1.msra.mxu0 0.0
        %1920 = vmatprep.subr.mxu0 0.0
        %1921 = vmatpush1.msra.mxu0 0.0
        %1922 = vmatprep.subr.mxu0 0.0
        %1923 = vmatpush1.msra.mxu0 0.0
        %1924 = vmatprep.subr.mxu0 0.0
        %1925 = vmatpush1.msra.mxu0 0.0
        %1926 = vmatprep.subr.mxu0 0.0
        %1927 = vmatpush1.msra.mxu0 0.0
        %1928 = vmatprep.mubr.f32.mxu0 0.0
        %1929 = vmatmul.mubr.f32.gmra.mrb[0].mxu0 %v1862
        %v1930 = vpop.f32.mrb[0].mxu0
        %v1931 = vadd.f32 0.0, %v1930
        %v1932 = vpop.f32.mrb[0].mxu0
        %1933 = vdwg.mxu0
        %v1935 = vsel %vm1216, %v1708, 0
        %1937 = vmatprep.subr.mxu0 0.0
        %1938 = vmatpush1.msra.mxu0 %v1858
        %1939 = vmatprep.subr.mxu0 0.0
        %1940 = vmatpush1.msra.mxu0 0.0
        %1941 = vmatprep.subr.mxu0 0.0
        %1942 = vmatpush1.msra.mxu0 0.0
        %1943 = vmatprep.subr.mxu0 0.0
        %1944 = vmatpush1.msra.mxu0 0.0
        %1945 = vmatprep.subr.mxu0 0.0
        %1946 = vmatpush1.msra.mxu0 0.0
        %1947 = vmatprep.subr.mxu0 0.0
        %1948 = vmatpush1.msra.mxu0 0.0
        %1949 = vmatprep.subr.mxu0 0.0
        %1950 = vmatpush1.msra.mxu0 0.0
        %1951 = vmatprep.subr.mxu0 0.0
        %1952 = vmatpush1.msra.mxu0 0.0
        %1953 = vmatprep.subr.mxu0 0.0
        %1954 = vmatpush1.msra.mxu0 0.0
        %1955 = vmatprep.subr.mxu0 0.0
        %1956 = vmatpush1.msra.mxu0 0.0
        %1957 = vmatprep.subr.mxu0 0.0
        %1958 = vmatpush1.msra.mxu0 0.0
        %1959 = vmatprep.subr.mxu0 0.0
        %1960 = vmatpush1.msra.mxu0 0.0
        %1961 = vmatprep.subr.mxu0 0.0
        %1962 = vmatpush1.msra.mxu0 0.0
        %1963 = vmatprep.subr.mxu0 0.0
        %1964 = vmatpush1.msra.mxu0 0.0
        %1965 = vmatprep.subr.mxu0 0.0
        %1966 = vmatpush1.msra.mxu0 0.0
        %1967 = vmatprep.subr.mxu0 0.0
        %1968 = vmatpush1.msra.mxu0 0.0
        %1969 = vmatprep.subr.mxu0 0.0
        %1970 = vmatpush1.msra.mxu0 0.0
        %1971 = vmatprep.subr.mxu0 0.0
        %1972 = vmatpush1.msra.mxu0 0.0
        %1973 = vmatprep.subr.mxu0 0.0
        %1974 = vmatpush1.msra.mxu0 0.0
        %1975 = vmatprep.subr.mxu0 0.0
        %1976 = vmatpush1.msra.mxu0 0.0
        %1977 = vmatprep.subr.mxu0 0.0
        %1978 = vmatpush1.msra.mxu0 0.0
        %1979 = vmatprep.subr.mxu0 0.0
        %1980 = vmatpush1.msra.mxu0 0.0
        %1981 = vmatprep.subr.mxu0 0.0
        %1982 = vmatpush1.msra.mxu0 0.0
        %1983 = vmatprep.subr.mxu0 0.0
        %1984 = vmatpush1.msra.mxu0 0.0
        %1985 = vmatprep.subr.mxu0 0.0
        %1986 = vmatpush1.msra.mxu0 0.0
        %1987 = vmatprep.subr.mxu0 0.0
        %1988 = vmatpush1.msra.mxu0 0.0
        %1989 = vmatprep.subr.mxu0 0.0
        %1990 = vmatpush1.msra.mxu0 0.0
        %1991 = vmatprep.subr.mxu0 0.0
        %1992 = vmatpush1.msra.mxu0 0.0
        %1993 = vmatprep.subr.mxu0 0.0
        %1994 = vmatpush1.msra.mxu0 0.0
        %1995 = vmatprep.subr.mxu0 0.0
        %1996 = vmatpush1.msra.mxu0 0.0
        %1997 = vmatprep.subr.mxu0 0.0
        %1998 = vmatpush1.msra.mxu0 0.0
        %1999 = vmatprep.subr.mxu0 0.0
        %2000 = vmatpush1.msra.mxu0 0.0
        %2001 = vmatprep.mubr.f32.mxu0 0.0
        %2002 = vmatmul.mubr.f32.gmra.mrb[0].mxu0 %v1935
        %v2003 = vpop.f32.mrb[0].mxu0
        %v2004 = vadd.f32 0.0, %v2003
        %v2005 = vpop.f32.mrb[0].mxu0
        %2006 = vdwg.mxu0
        %v2008 = vsel %vm1216, %v1781, 0
        %2010 = vmatprep.subr.mxu0 0.0
        %2011 = vmatpush1.msra.mxu0 %v1859
        %2012 = vmatprep.subr.mxu0 0.0
        %2013 = vmatpush1.msra.mxu0 0.0
        %2014 = vmatprep.subr.mxu0 0.0
        %2015 = vmatpush1.msra.mxu0 0.0
        %2016 = vmatprep.subr.mxu0 0.0
        %2017 = vmatpush1.msra.mxu0 0.0
        %2018 = vmatprep.subr.mxu0 0.0
        %2019 = vmatpush1.msra.mxu0 0.0
        %2020 = vmatprep.subr.mxu0 0.0
        %2021 = vmatpush1.msra.mxu0 0.0
        %2022 = vmatprep.subr.mxu0 0.0
        %2023 = vmatpush1.msra.mxu0 0.0
        %2024 = vmatprep.subr.mxu0 0.0
        %2025 = vmatpush1.msra.mxu0 0.0
        %2026 = vmatprep.subr.mxu0 0.0
        %2027 = vmatpush1.msra.mxu0 0.0
        %2028 = vmatprep.subr.mxu0 0.0
        %2029 = vmatpush1.msra.mxu0 0.0
        %2030 = vmatprep.subr.mxu0 0.0
        %2031 = vmatpush1.msra.mxu0 0.0
        %2032 = vmatprep.subr.mxu0 0.0
        %2033 = vmatpush1.msra.mxu0 0.0
        %2034 = vmatprep.subr.mxu0 0.0
        %2035 = vmatpush1.msra.mxu0 0.0
        %2036 = vmatprep.subr.mxu0 0.0
        %2037 = vmatpush1.msra.mxu0 0.0
        %2038 = vmatprep.subr.mxu0 0.0
        %2039 = vmatpush1.msra.mxu0 0.0
        %2040 = vmatprep.subr.mxu0 0.0
        %2041 = vmatpush1.msra.mxu0 0.0
        %2042 = vmatprep.subr.mxu0 0.0
        %2043 = vmatpush1.msra.mxu0 0.0
        %2044 = vmatprep.subr.mxu0 0.0
        %2045 = vmatpush1.msra.mxu0 0.0
        %2046 = vmatprep.subr.mxu0 0.0
        %2047 = vmatpush1.msra.mxu0 0.0
        %2048 = vmatprep.subr.mxu0 0.0
        %2049 = vmatpush1.msra.mxu0 0.0
        %2050 = vmatprep.subr.mxu0 0.0
        %2051 = vmatpush1.msra.mxu0 0.0
        %2052 = vmatprep.subr.mxu0 0.0
        %2053 = vmatpush1.msra.mxu0 0.0
        %2054 = vmatprep.subr.mxu0 0.0
        %2055 = vmatpush1.msra.mxu0 0.0
        %2056 = vmatprep.subr.mxu0 0.0
        %2057 = vmatpush1.msra.mxu0 0.0
        %2058 = vmatprep.subr.mxu0 0.0
        %2059 = vmatpush1.msra.mxu0 0.0
        %2060 = vmatprep.subr.mxu0 0.0
        %2061 = vmatpush1.msra.mxu0 0.0
        %2062 = vmatprep.subr.mxu0 0.0
        %2063 = vmatpush1.msra.mxu0 0.0
        %2064 = vmatprep.subr.mxu0 0.0
        %2065 = vmatpush1.msra.mxu0 0.0
        %2066 = vmatprep.subr.mxu0 0.0
        %2067 = vmatpush1.msra.mxu0 0.0
        %2068 = vmatprep.subr.mxu0 0.0
        %2069 = vmatpush1.msra.mxu0 0.0
        %2070 = vmatprep.subr.mxu0 0.0
        %2071 = vmatpush1.msra.mxu0 0.0
        %2072 = vmatprep.subr.mxu0 0.0
        %2073 = vmatpush1.msra.mxu0 0.0
        %2074 = vmatprep.mubr.f32.mxu0 0.0
        %2075 = vmatmul.mubr.f32.gmra.mrb[0].mxu0 %v2008
        %v2076 = vpop.f32.mrb[0].mxu0
        %v2077 = vadd.f32 0.0, %v2076
        %v2078 = vpop.f32.mrb[0].mxu0
        %2079 = vdwg.mxu0
        %v2081 = vsel %vm1216, %v1854, 0
        %2083 = vmatprep.subr.mxu0 0.0
        %2084 = vmatpush1.msra.mxu0 %v1860
        %2085 = vmatprep.subr.mxu0 0.0
        %2086 = vmatpush1.msra.mxu0 0.0
        %2087 = vmatprep.subr.mxu0 0.0
        %2088 = vmatpush1.msra.mxu0 0.0
        %2089 = vmatprep.subr.mxu0 0.0
        %2090 = vmatpush1.msra.mxu0 0.0
        %2091 = vmatprep.subr.mxu0 0.0
        %2092 = vmatpush1.msra.mxu0 0.0
        %2093 = vmatprep.subr.mxu0 0.0
        %2094 = vmatpush1.msra.mxu0 0.0
        %2095 = vmatprep.subr.mxu0 0.0
        %2096 = vmatpush1.msra.mxu0 0.0
        %2097 = vmatprep.subr.mxu0 0.0
        %2098 = vmatpush1.msra.mxu0 0.0
        %2099 = vmatprep.subr.mxu0 0.0
        %2100 = vmatpush1.msra.mxu0 0.0
        %2101 = vmatprep.subr.mxu0 0.0
        %2102 = vmatpush1.msra.mxu0 0.0
        %2103 = vmatprep.subr.mxu0 0.0
        %2104 = vmatpush1.msra.mxu0 0.0
        %2105 = vmatprep.subr.mxu0 0.0
        %2106 = vmatpush1.msra.mxu0 0.0
        %2107 = vmatprep.subr.mxu0 0.0
        %2108 = vmatpush1.msra.mxu0 0.0
        %2109 = vmatprep.subr.mxu0 0.0
        %2110 = vmatpush1.msra.mxu0 0.0
        %2111 = vmatprep.subr.mxu0 0.0
        %2112 = vmatpush1.msra.mxu0 0.0
        %2113 = vmatprep.subr.mxu0 0.0
        %2114 = vmatpush1.msra.mxu0 0.0
        %2115 = vmatprep.subr.mxu0 0.0
        %2116 = vmatpush1.msra.mxu0 0.0
        %2117 = vmatprep.subr.mxu0 0.0
        %2118 = vmatpush1.msra.mxu0 0.0
        %2119 = vmatprep.subr.mxu0 0.0
        %2120 = vmatpush1.msra.mxu0 0.0
        %2121 = vmatprep.subr.mxu0 0.0
        %2122 = vmatpush1.msra.mxu0 0.0
        %2123 = vmatprep.subr.mxu0 0.0
        %2124 = vmatpush1.msra.mxu0 0.0
        %2125 = vmatprep.subr.mxu0 0.0
        %2126 = vmatpush1.msra.mxu0 0.0
        %2127 = vmatprep.subr.mxu0 0.0
        %2128 = vmatpush1.msra.mxu0 0.0
        %2129 = vmatprep.subr.mxu0 0.0
        %2130 = vmatpush1.msra.mxu0 0.0
        %2131 = vmatprep.subr.mxu0 0.0
        %2132 = vmatpush1.msra.mxu0 0.0
        %2133 = vmatprep.subr.mxu0 0.0
        %2134 = vmatpush1.msra.mxu0 0.0
        %2135 = vmatprep.subr.mxu0 0.0
        %2136 = vmatpush1.msra.mxu0 0.0
        %2137 = vmatprep.subr.mxu0 0.0
        %2138 = vmatpush1.msra.mxu0 0.0
        %2139 = vmatprep.subr.mxu0 0.0
        %2140 = vmatpush1.msra.mxu0 0.0
        %2141 = vmatprep.subr.mxu0 0.0
        %2142 = vmatpush1.msra.mxu0 0.0
        %2143 = vmatprep.subr.mxu0 0.0
        %2144 = vmatpush1.msra.mxu0 0.0
        %2145 = vmatprep.subr.mxu0 0.0
        %2146 = vmatpush1.msra.mxu0 0.0
        %2147 = vmatprep.mubr.f32.mxu0 0.0
        %2148 = vmatmul.mubr.f32.gmra.mrb[0].mxu0 %v2081
        %v2149 = vpop.f32.mrb[0].mxu0
        %v2150 = vadd.f32 0.0, %v2149
        %v2151 = vpop.f32.mrb[0].mxu0
        %2152 = vdwg.mxu0
        %v2153 = vadd.f32 %v1931, %v2004
        %v2154 = vadd.f32 %v2153, %v2077
        %v2155 = vadd.f32 %v2154, %v2150
        %v2156 = vadd.f32 %v296, %v2155
        %v2157 = vlaneseq
        %v2158 = vshrl.u32 %v2157, 7
        %v2159 = vsub.s32 2, %v2158
        %v2160 = vrot.slane %v297, %v2159
        %v2161 = vadd.f32 %v2156, %v2160
        %v2162 = vsel %vm298, %v2161, 0.0
        %2163 = vadd.xlane.f32.xlu0 %v2162
        %v2164 = vpop.xlane.xlu0 %2163
        %v2165 = vmul.f32 %v2164, %v302
        %v2166 = vsub.f32 %v2161, %v2165
        %v2167 = vmul.f32 %v2166, %v2166
        %v2168 = vsel %vm298, %v2167, 0.0
        %2169 = vadd.xlane.f32.xlu0 %v2168
        %v2170 = vpop.xlane.xlu0 %2169
        %v2171 = vmul.f32 %v2170, %v302
        %v2172 = vadd.f32 %v2171, 1e-05
        %v2173 = vrsqrt.pop %v2172
        %v2174 = vmul.f32 %v2166, %v2173
        %v2175 = vlaneseq
        %v2176 = vshrl.u32 %v2175, 7
        %v2177 = vsub.s32 3, %v2176
        %v2178 = vrot.slane %v297, %v2177
        %v2179 = vmul.f32 %v2174, %v2178
        %v2180 = vlaneseq
        %v2181 = vshrl.u32 %v2180, 7
        %v2182 = vsub.s32 4, %v2181
        %v2183 = vrot.slane %v297, %v2182
        %v2184 = vadd.f32 %v2179, %v2183
        %v2185 = vld [vmem:[#allocation7] sm:$0xff]
        %v2186 = vld [vmem:[#allocation7 + $0x8] sm:$0xff]
        %v2187 = vld [vmem:[#allocation7 + $0x10] sm:$0xff]
        %v2188 = vld [vmem:[#allocation7 + $0x18] sm:$0xff]
        %v2189 = vlaneseq
        %v2190 = vshrl.u32 %v2189, 7
        %v2191 = vsub.s32 5, %v2190
        %v2192 = vrot.slane %v297, %v2191
        %v2194 = vsel %vm298, %v2184, 0
        %2196 = vmatprep.subr.mxu0 0.0
        %2197 = vmatpush1.msra.mxu0 %v2185
        %2198 = vmatprep.subr.mxu0 0.0
        %2199 = vmatpush1.msra.mxu0 %v2186
        %2200 = vmatprep.subr.mxu0 0.0
        %2201 = vmatpush1.msra.mxu0 %v2187
        %2202 = vmatprep.subr.mxu0 0.0
        %2203 = vmatpush1.msra.mxu0 %v2188
        %2204 = vmatprep.subr.mxu0 0.0
        %2205 = vmatpush1.msra.mxu0 0.0
        %2206 = vmatprep.subr.mxu0 0.0
        %2207 = vmatpush1.msra.mxu0 0.0
        %2208 = vmatprep.subr.mxu0 0.0
        %2209 = vmatpush1.msra.mxu0 0.0
        %2210 = vmatprep.subr.mxu0 0.0
        %2211 = vmatpush1.msra.mxu0 0.0
        %2212 = vmatprep.subr.mxu0 0.0
        %2213 = vmatpush1.msra.mxu0 0.0
        %2214 = vmatprep.subr.mxu0 0.0
        %2215 = vmatpush1.msra.mxu0 0.0
        %2216 = vmatprep.subr.mxu0 0.0
        %2217 = vmatpush1.msra.mxu0 0.0
        %2218 = vmatprep.subr.mxu0 0.0
        %2219 = vmatpush1.msra.mxu0 0.0
        %2220 = vmatprep.subr.mxu0 0.0
        %2221 = vmatpush1.msra.mxu0 0.0
        %2222 = vmatprep.subr.mxu0 0.0
        %2223 = vmatpush1.msra.mxu0 0.0
        %2224 = vmatprep.subr.mxu0 0.0
        %2225 = vmatpush1.msra.mxu0 0.0
        %2226 = vmatprep.subr.mxu0 0.0
        %2227 = vmatpush1.msra.mxu0 0.0
        %2228 = vmatprep.subr.mxu0 0.0
        %2229 = vmatpush1.msra.mxu0 0.0
        %2230 = vmatprep.subr.mxu0 0.0
        %2231 = vmatpush1.msra.mxu0 0.0
        %2232 = vmatprep.subr.mxu0 0.0
        %2233 = vmatpush1.msra.mxu0 0.0
        %2234 = vmatprep.subr.mxu0 0.0
        %2235 = vmatpush1.msra.mxu0 0.0
        %2236 = vmatprep.subr.mxu0 0.0
        %2237 = vmatpush1.msra.mxu0 0.0
        %2238 = vmatprep.subr.mxu0 0.0
        %2239 = vmatpush1.msra.mxu0 0.0
        %2240 = vmatprep.subr.mxu0 0.0
        %2241 = vmatpush1.msra.mxu0 0.0
        %2242 = vmatprep.subr.mxu0 0.0
        %2243 = vmatpush1.msra.mxu0 0.0
        %2244 = vmatprep.subr.mxu0 0.0
        %2245 = vmatpush1.msra.mxu0 0.0
        %2246 = vmatprep.subr.mxu0 0.0
        %2247 = vmatpush1.msra.mxu0 0.0
        %2248 = vmatprep.subr.mxu0 0.0
        %2249 = vmatpush1.msra.mxu0 0.0
        %2250 = vmatprep.subr.mxu0 0.0
        %2251 = vmatpush1.msra.mxu0 0.0
        %2252 = vmatprep.subr.mxu0 0.0
        %2253 = vmatpush1.msra.mxu0 0.0
        %2254 = vmatprep.subr.mxu0 0.0
        %2255 = vmatpush1.msra.mxu0 0.0
        %2256 = vmatprep.subr.mxu0 0.0
        %2257 = vmatpush1.msra.mxu0 0.0
        %2258 = vmatprep.subr.mxu0 0.0
        %2259 = vmatpush1.msra.mxu0 0.0
        %2260 = vmatprep.mubr.f32.mxu0 0.0
        %2261 = vmatmul.mubr.f32.gmra.mrb[0].mxu0 %v2194
        %v2262 = vpop.f32.mrb[0].mxu0
        %v2263 = vadd.f32 %v2192, %v2262
        %v2264 = vpop.f32.mrb[0].mxu0
        %2265 = vdwg.mxu0
        %v2266 = vmul.f32 %v2263, 0.5
        %v2267 = vmul.f32 %v2263, 0.044715
        %v2268 = vmul.f32 %v2267, %v2263
        %v2269 = vmul.f32 %v2268, %v2263
        %v2270 = vadd.f32 %v2263, %v2269
        %v2271 = vmul.f32 %v2270, 0.7978846
        %v2272 = vtanh.pop %v2271
        %v2273 = vadd.f32 %v2272, 1.0
        %v2274 = vmul.f32 %v2266, %v2273
        %v2275 = vmul.f32 %v2274, %v2274
        %vm2276 = vcmask 523264
        %v2277 = vsel %vm2276, %v2275, 0.0
        %v2278 = vrot.slane %v2277, 4
        %v2279 = vadd.f32 %v2277, %v2278
        %v2280 = vrot.slane %v2279, 2
        %v2281 = vadd.f32 %v2279, %v2280
        %v2282 = vrot.slane %v2281, 1
        %v2283 = vadd.f32 %v2281, %v2282
        %v2284 = vadd.f32 %v2283, 1e-06
        %v2285 = vrsqrt.pop %v2284
        %v2286 = vmul.f32 %v2274, %v2285
        %2287 = vxpose.xlu0.b32.start [1/16] %v2286, 128
        %2288 = vxpose.xlu0.b32.cont [2/16] 0.0, 128
        %2289 = vxpose.xlu0.b32.cont [3/16] 0.0, 128
        %2290 = vxpose.xlu0.b32.cont [4/16] 0.0, 128
        %2291 = vxpose.xlu0.b32.cont [5/16] 0.0, 128
        %2292 = vxpose.xlu0.b32.cont [6/16] 0.0, 128
        %2293 = vxpose.xlu0.b32.cont [7/16] 0.0, 128
        %2294 = vxpose.xlu0.b32.cont [8/16] 0.0, 128
        %2295 = vxpose.xlu0.b32.cont [9/16] 0.0, 128
        %2296 = vxpose.xlu0.b32.cont [10/16] 0.0, 128
        %2297 = vxpose.xlu0.b32.cont [11/16] 0.0, 128
        %2298 = vxpose.xlu0.b32.cont [12/16] 0.0, 128
        %2299 = vxpose.xlu0.b32.cont [13/16] 0.0, 128
        %2300 = vxpose.xlu0.b32.cont [14/16] 0.0, 128
        %2301 = vxpose.xlu0.b32.cont [15/16] 0.0, 128
        %2302 = vxpose.xlu0.b32.end [16/16] 0.0, 128
        %v2303 = vpop.trf.xlu0
        %v2304 = vpop.trf.xlu0
        %v2305 = vpop.trf.xlu0
        %v2306 = vpop.trf.xlu0
        %v2307 = vpop.trf.xlu0
        %v2308 = vpop.trf.xlu0
        %v2309 = vpop.trf.xlu0
        %v2310 = vpop.trf.xlu0
        %v2311 = vpop.trf.xlu0
        %v2312 = vpop.trf.xlu0
        %v2313 = vpop.trf.xlu0
        %v2314 = vpop.trf.xlu0
        %v2315 = vpop.trf.xlu0
        %v2316 = vpop.trf.xlu0
        %v2317 = vpop.trf.xlu0
        %v2318 = vpop.trf.xlu0
        %v2320 = vsel %vm1216, %v2303, 0
        %v2323 = vsel %vm1216, %v2304, 0
        %v2326 = vsel %vm1216, %v2305, 0
        %v2329 = vsel %vm1216, %v2306, 0
        %v2332 = vsel %vm1216, %v2307, 0
        %v2335 = vsel %vm1216, %v2308, 0
        %v2338 = vsel %vm1216, %v2309, 0
        %v2341 = vsel %vm1216, %v2310, 0
        %2343 = vmatprep.subr.mxu0 0.0
        %2344 = vmatpush1.msra.mxu0 %v2286
        %2345 = vmatprep.subr.mxu0 0.0
        %2346 = vmatpush1.msra.mxu0 0.0
        %2347 = vmatprep.subr.mxu0 0.0
        %2348 = vmatpush1.msra.mxu0 0.0
        %2349 = vmatprep.subr.mxu0 0.0
        %2350 = vmatpush1.msra.mxu0 0.0
        %2351 = vmatprep.subr.mxu0 0.0
        %2352 = vmatpush1.msra.mxu0 0.0
        %2353 = vmatprep.subr.mxu0 0.0
        %2354 = vmatpush1.msra.mxu0 0.0
        %2355 = vmatprep.subr.mxu0 0.0
        %2356 = vmatpush1.msra.mxu0 0.0
        %2357 = vmatprep.subr.mxu0 0.0
        %2358 = vmatpush1.msra.mxu0 0.0
        %2359 = vmatprep.subr.mxu0 0.0
        %2360 = vmatpush1.msra.mxu0 0.0
        %2361 = vmatprep.subr.mxu0 0.0
        %2362 = vmatpush1.msra.mxu0 0.0
        %2363 = vmatprep.subr.mxu0 0.0
        %2364 = vmatpush1.msra.mxu0 0.0
        %2365 = vmatprep.subr.mxu0 0.0
        %2366 = vmatpush1.msra.mxu0 0.0
        %2367 = vmatprep.subr.mxu0 0.0
        %2368 = vmatpush1.msra.mxu0 0.0
        %2369 = vmatprep.subr.mxu0 0.0
        %2370 = vmatpush1.msra.mxu0 0.0
        %2371 = vmatprep.subr.mxu0 0.0
        %2372 = vmatpush1.msra.mxu0 0.0
        %2373 = vmatprep.subr.mxu0 0.0
        %2374 = vmatpush1.msra.mxu0 0.0
        %2375 = vmatprep.subr.mxu0 0.0
        %2376 = vmatpush1.msra.mxu0 0.0
        %2377 = vmatprep.subr.mxu0 0.0
        %2378 = vmatpush1.msra.mxu0 0.0
        %2379 = vmatprep.subr.mxu0 0.0
        %2380 = vmatpush1.msra.mxu0 0.0
        %2381 = vmatprep.subr.mxu0 0.0
        %2382 = vmatpush1.msra.mxu0 0.0
        %2383 = vmatprep.subr.mxu0 0.0
        %2384 = vmatpush1.msra.mxu0 0.0
        %2385 = vmatprep.subr.mxu0 0.0
        %2386 = vmatpush1.msra.mxu0 0.0
        %2387 = vmatprep.subr.mxu0 0.0
        %2388 = vmatpush1.msra.mxu0 0.0
        %2389 = vmatprep.subr.mxu0 0.0
        %2390 = vmatpush1.msra.mxu0 0.0
        %2391 = vmatprep.subr.mxu0 0.0
        %2392 = vmatpush1.msra.mxu0 0.0
        %2393 = vmatprep.subr.mxu0 0.0
        %2394 = vmatpush1.msra.mxu0 0.0
        %2395 = vmatprep.subr.mxu0 0.0
        %2396 = vmatpush1.msra.mxu0 0.0
        %2397 = vmatprep.subr.mxu0 0.0
        %2398 = vmatpush1.msra.mxu0 0.0
        %2399 = vmatprep.subr.mxu0 0.0
        %2400 = vmatpush1.msra.mxu0 0.0
        %2401 = vmatprep.subr.mxu0 0.0
        %2402 = vmatpush1.msra.mxu0 0.0
        %2403 = vmatprep.subr.mxu0 0.0
        %2404 = vmatpush1.msra.mxu0 0.0
        %2405 = vmatprep.subr.mxu0 0.0
        %2406 = vmatpush1.msra.mxu0 0.0
        %2407 = vmatprep.mubr.f32.mxu0 0.0
        %2408 = vmatmul.mubr.f32.gmra.mrb[0].mxu0 %v2320
        %v2409 = vpop.f32.mrb[0].mxu0
        %v2410 = vadd.f32 0.0, %v2409
        %v2411 = vpop.f32.mrb[0].mxu0
        %2412 = vmatprep.mubr.f32.mxu0 0.0
        %2413 = vmatmul.mubr.f32.gmra.mrb[0].mxu0 %v2323
        %v2414 = vpop.f32.mrb[0].mxu0
        %v2415 = vadd.f32 0.0, %v2414
        %v2416 = vpop.f32.mrb[0].mxu0
        %2417 = vmatprep.mubr.f32.mxu0 0.0
        %2418 = vmatmul.mubr.f32.gmra.mrb[0].mxu0 %v2326
        %v2419 = vpop.f32.mrb[0].mxu0
        %v2420 = vadd.f32 0.0, %v2419
        %v2421 = vpop.f32.mrb[0].mxu0
        %2422 = vmatprep.mubr.f32.mxu0 0.0
        %2423 = vmatmul.mubr.f32.gmra.mrb[0].mxu0 %v2329
        %v2424 = vpop.f32.mrb[0].mxu0
        %v2425 = vadd.f32 0.0, %v2424
        %v2426 = vpop.f32.mrb[0].mxu0
        %2427 = vmatprep.mubr.f32.mxu0 0.0
        %2428 = vmatmul.mubr.f32.gmra.mrb[0].mxu0 %v2332
        %v2429 = vpop.f32.mrb[0].mxu0
        %v2430 = vadd.f32 0.0, %v2429
        %v2431 = vpop.f32.mrb[0].mxu0
        %2432 = vmatprep.mubr.f32.mxu0 0.0
        %2433 = vmatmul.mubr.f32.gmra.mrb[0].mxu0 %v2335
        %v2434 = vpop.f32.mrb[0].mxu0
        %v2435 = vadd.f32 0.0, %v2434
        %v2436 = vpop.f32.mrb[0].mxu0
        %2437 = vmatprep.mubr.f32.mxu0 0.0
        %2438 = vmatmul.mubr.f32.gmra.mrb[0].mxu0 %v2338
        %v2439 = vpop.f32.mrb[0].mxu0
        %v2440 = vadd.f32 0.0, %v2439
        %v2441 = vpop.f32.mrb[0].mxu0
        %2442 = vmatprep.mubr.f32.mxu0 0.0
        %2443 = vmatmul.mubr.f32.gmra.mrb[0].mxu0 %v2341
        %v2444 = vpop.f32.mrb[0].mxu0
        %v2445 = vadd.f32 0.0, %v2444
        %v2446 = vpop.f32.mrb[0].mxu0
        %2447 = vdwg.mxu0
        %v2448 = vsel %vm2276, %v2410, -inf
        %2449 = vmax.xlane.f32.xlu0 %v2448
        %v2450 = vpop.xlane.xlu0 %2449
        %v2451 = vsel %vm2276, %v2415, -inf
        %2452 = vmax.xlane.f32.xlu0 %v2451
        %v2453 = vpop.xlane.xlu0 %2452
        %v2454 = vsel %vm2276, %v2420, -inf
        %2455 = vmax.xlane.f32.xlu0 %v2454
        %v2456 = vpop.xlane.xlu0 %2455
        %v2457 = vsel %vm2276, %v2425, -inf
        %2458 = vmax.xlane.f32.xlu0 %v2457
        %v2459 = vpop.xlane.xlu0 %2458
        %v2460 = vsel %vm2276, %v2430, -inf
        %2461 = vmax.xlane.f32.xlu0 %v2460
        %v2462 = vpop.xlane.xlu0 %2461
        %v2463 = vsel %vm2276, %v2435, -inf
        %2464 = vmax.xlane.f32.xlu0 %v2463
        %v2465 = vpop.xlane.xlu0 %2464
        %v2466 = vsel %vm2276, %v2440, -inf
        %2467 = vmax.xlane.f32.xlu0 %v2466
        %v2468 = vpop.xlane.xlu0 %2467
        %v2469 = vsel %vm2276, %v2445, -inf
        %2470 = vmax.xlane.f32.xlu0 %v2469
        %v2471 = vpop.xlane.xlu0 %2470
        %v2472 = vsub.f32 %v2410, %v2450
        %v2473 = vsub.f32 %v2415, %v2453
        %v2474 = vsub.f32 %v2420, %v2456
        %v2475 = vsub.f32 %v2425, %v2459
        %v2476 = vsub.f32 %v2430, %v2462
        %v2477 = vsub.f32 %v2435, %v2465
        %v2478 = vsub.f32 %v2440, %v2468
        %v2479 = vsub.f32 %v2445, %v2471
        %v2480 = vmul.f32 %v2472, 1.442695
        %v2481 = vpow.pop %v2480
        %v2482 = vmul.f32 %v2473, 1.442695
        %v2483 = vpow.pop %v2482
        %v2484 = vmul.f32 %v2474, 1.442695
        %v2485 = vpow.pop %v2484
        %v2486 = vmul.f32 %v2475, 1.442695
        %v2487 = vpow.pop %v2486
        %v2488 = vmul.f32 %v2476, 1.442695
        %v2489 = vpow.pop %v2488
        %v2490 = vmul.f32 %v2477, 1.442695
        %v2491 = vpow.pop %v2490
        %v2492 = vmul.f32 %v2478, 1.442695
        %v2493 = vpow.pop %v2492
        %v2494 = vmul.f32 %v2479, 1.442695
        %v2495 = vpow.pop %v2494
        %v2496 = vsel %vm2276, %v2481, 0.0
        %2497 = vadd.xlane.f32.xlu0 %v2496
        %v2498 = vpop.xlane.xlu0 %2497
        %v2499 = vsel %vm2276, %v2483, 0.0
        %2500 = vadd.xlane.f32.xlu0 %v2499
        %v2501 = vpop.xlane.xlu0 %2500
        %v2502 = vsel %vm2276, %v2485, 0.0
        %2503 = vadd.xlane.f32.xlu0 %v2502
        %v2504 = vpop.xlane.xlu0 %2503
        %v2505 = vsel %vm2276, %v2487, 0.0
        %2506 = vadd.xlane.f32.xlu0 %v2505
        %v2507 = vpop.xlane.xlu0 %2506
        %v2508 = vsel %vm2276, %v2489, 0.0
        %2509 = vadd.xlane.f32.xlu0 %v2508
        %v2510 = vpop.xlane.xlu0 %2509
        %v2511 = vsel %vm2276, %v2491, 0.0
        %2512 = vadd.xlane.f32.xlu0 %v2511
        %v2513 = vpop.xlane.xlu0 %2512
        %v2514 = vsel %vm2276, %v2493, 0.0
        %2515 = vadd.xlane.f32.xlu0 %v2514
        %v2516 = vpop.xlane.xlu0 %2515
        %v2517 = vsel %vm2276, %v2495, 0.0
        %2518 = vadd.xlane.f32.xlu0 %v2517
        %v2519 = vpop.xlane.xlu0 %2518
        %v2520 = vrcp.pop %v2498
        %v2521 = vmul.f32 %v2481, %v2520
        %v2522 = vrcp.pop %v2501
        %v2523 = vmul.f32 %v2483, %v2522
        %v2524 = vrcp.pop %v2504
        %v2525 = vmul.f32 %v2485, %v2524
        %v2526 = vrcp.pop %v2507
        %v2527 = vmul.f32 %v2487, %v2526
        %v2528 = vrcp.pop %v2510
        %v2529 = vmul.f32 %v2489, %v2528
        %v2530 = vrcp.pop %v2513
        %v2531 = vmul.f32 %v2491, %v2530
        %v2532 = vrcp.pop %v2516
        %v2533 = vmul.f32 %v2493, %v2532
        %v2534 = vrcp.pop %v2519
        %v2535 = vmul.f32 %v2495, %v2534
        %v2537 = vsel %vm2276, %v2274, 0
        %v2540 = vsel %vm2276, %v2521, 0
        %v2543 = vsel %vm2276, %v2523, 0
        %v2546 = vsel %vm2276, %v2525, 0
        %v2549 = vsel %vm2276, %v2527, 0
        %v2552 = vsel %vm2276, %v2529, 0
        %v2555 = vsel %vm2276, %v2531, 0
        %v2558 = vsel %vm2276, %v2533, 0
        %v2561 = vsel %vm2276, %v2535, 0
        %2563 = vmatprep.subr.mxu0 0.0
        %2564 = vmatpush1.xpose.msra.mxu0 %v2540
        %2565 = vmatprep.subr.mxu0 0.0
        %2566 = vmatpush1.xpose.msra.mxu0 %v2543
        %2567 = vmatprep.subr.mxu0 0.0
        %2568 = vmatpush1.xpose.msra.mxu0 %v2546
        %2569 = vmatprep.subr.mxu0 0.0
        %2570 = vmatpush1.xpose.msra.mxu0 %v2549
        %2571 = vmatprep.subr.mxu0 0.0
        %2572 = vmatpush1.xpose.msra.mxu0 %v2552
        %2573 = vmatprep.subr.mxu0 0.0
        %2574 = vmatpush1.xpose.msra.mxu0 %v2555
        %2575 = vmatprep.subr.mxu0 0.0
        %2576 = vmatpush1.xpose.msra.mxu0 %v2558
        %2577 = vmatprep.subr.mxu0 0.0
        %2578 = vmatpush1.xpose.msra.mxu0 %v2561
        %2579 = vmatprep.subr.mxu0 0.0
        %2580 = vmatpush1.xpose.msra.mxu0 0.0
        %2581 = vmatprep.subr.mxu0 0.0
        %2582 = vmatpush1.xpose.msra.mxu0 0.0
        %2583 = vmatprep.subr.mxu0 0.0
        %2584 = vmatpush1.xpose.msra.mxu0 0.0
        %2585 = vmatprep.subr.mxu0 0.0
        %2586 = vmatpush1.xpose.msra.mxu0 0.0
        %2587 = vmatprep.subr.mxu0 0.0
        %2588 = vmatpush1.xpose.msra.mxu0 0.0
        %2589 = vmatprep.subr.mxu0 0.0
        %2590 = vmatpush1.xpose.msra.mxu0 0.0
        %2591 = vmatprep.subr.mxu0 0.0
        %2592 = vmatpush1.xpose.msra.mxu0 0.0
        %2593 = vmatprep.subr.mxu0 0.0
        %2594 = vmatpush1.xpose.msra.mxu0 0.0
        %2595 = vmatprep.subr.mxu0 0.0
        %2596 = vmatpush1.xpose.msra.mxu0 0.0
        %2597 = vmatprep.subr.mxu0 0.0
        %2598 = vmatpush1.xpose.msra.mxu0 0.0
        %2599 = vmatprep.subr.mxu0 0.0
        %2600 = vmatpush1.xpose.msra.mxu0 0.0
        %2601 = vmatprep.subr.mxu0 0.0
        %2602 = vmatpush1.xpose.msra.mxu0 0.0
        %2603 = vmatprep.subr.mxu0 0.0
        %2604 = vmatpush1.xpose.msra.mxu0 0.0
        %2605 = vmatprep.subr.mxu0 0.0
        %2606 = vmatpush1.xpose.msra.mxu0 0.0
        %2607 = vmatprep.subr.mxu0 0.0
        %2608 = vmatpush1.xpose.msra.mxu0 0.0
        %2609 = vmatprep.subr.mxu0 0.0
        %2610 = vmatpush1.xpose.msra.mxu0 0.0
        %2611 = vmatprep.subr.mxu0 0.0
        %2612 = vmatpush1.xpose.msra.mxu0 0.0
        %2613 = vmatprep.subr.mxu0 0.0
        %2614 = vmatpush1.xpose.msra.mxu0 0.0
        %2615 = vmatprep.subr.mxu0 0.0
        %2616 = vmatpush1.xpose.msra.mxu0 0.0
        %2617 = vmatprep.subr.mxu0 0.0
        %2618 = vmatpush1.xpose.msra.mxu0 0.0
        %2619 = vmatprep.subr.mxu0 0.0
        %2620 = vmatpush1.xpose.msra.mxu0 0.0
        %2621 = vmatprep.subr.mxu0 0.0
        %2622 = vmatpush1.xpose.msra.mxu0 0.0
        %2623 = vmatprep.subr.mxu0 0.0
        %2624 = vmatpush1.xpose.msra.mxu0 0.0
        %2625 = vmatprep.subr.mxu0 0.0
        %2626 = vmatpush1.xpose.msra.mxu0 0.0
        %2627 = vmatprep.mubr.f32.mxu0 0.0
        %2628 = vmatmul.mubr.f32.gmra.mrb[0].mxu0 %v2537
        %v2629 = vpop.f32.mrb[0].mxu0
        %v2630 = vadd.f32 0.0, %v2629
        %v2631 = vpop.f32.mrb[0].mxu0
        %2632 = vdwg.mxu0
        %v2633 = vmul.f32 %v2274, 0.5
        %v2634 = vmul.f32 %v2630, 0.5
        %v2635 = vadd.f32 %v2633, %v2634
        %v2636 = vld [vmem:[%s4] sm:$0xff]
        %v2637 = vld [vmem:[%s4 + $0x8] sm:$0xff]
        %v2638 = vld [vmem:[%s4 + $0x10] sm:$0xff]
        %v2639 = vld [vmem:[%s4 + $0x18] sm:$0xff]
        %v2640 = vld [vmem:[%s4 + $0x20] sm:$0xff]
        %v2641 = vld [vmem:[%s4 + $0x28] sm:$0xff]
        %v2642 = vld [vmem:[%s4 + $0x30] sm:$0xff]
        %v2643 = vld [vmem:[%s4 + $0x38] sm:$0xff]
        %v2644 = vlaneseq
        %v2645 = vshrl.u32 %v2644, 7
        %v2646 = vsub.s32 6, %v2645
        %v2647 = vrot.slane %v297, %v2646
        %v2649 = vsel %vm2276, %v2635, 0
        %2651 = vmatprep.subr.mxu0 0.0
        %2652 = vmatpush1.msra.mxu0 %v2636
        %2653 = vmatprep.subr.mxu0 0.0
        %2654 = vmatpush1.msra.mxu0 %v2637
        %2655 = vmatprep.subr.mxu0 0.0
        %2656 = vmatpush1.msra.mxu0 %v2638
        %2657 = vmatprep.subr.mxu0 0.0
        %2658 = vmatpush1.msra.mxu0 %v2639
        %2659 = vmatprep.subr.mxu0 0.0
        %2660 = vmatpush1.msra.mxu0 %v2640
        %2661 = vmatprep.subr.mxu0 0.0
        %2662 = vmatpush1.msra.mxu0 %v2641
        %2663 = vmatprep.subr.mxu0 0.0
        %2664 = vmatpush1.msra.mxu0 %v2642
        %2665 = vmatprep.subr.mxu0 0.0
        %2666 = vmatpush1.msra.mxu0 %v2643
        %2667 = vmatprep.subr.mxu0 0.0
        %2668 = vmatpush1.msra.mxu0 0.0
        %2669 = vmatprep.subr.mxu0 0.0
        %2670 = vmatpush1.msra.mxu0 0.0
        %2671 = vmatprep.subr.mxu0 0.0
        %2672 = vmatpush1.msra.mxu0 0.0
        %2673 = vmatprep.subr.mxu0 0.0
        %2674 = vmatpush1.msra.mxu0 0.0
        %2675 = vmatprep.subr.mxu0 0.0
        %2676 = vmatpush1.msra.mxu0 0.0
        %2677 = vmatprep.subr.mxu0 0.0
        %2678 = vmatpush1.msra.mxu0 0.0
        %2679 = vmatprep.subr.mxu0 0.0
        %2680 = vmatpush1.msra.mxu0 0.0
        %2681 = vmatprep.subr.mxu0 0.0
        %2682 = vmatpush1.msra.mxu0 0.0
        %2683 = vmatprep.subr.mxu0 0.0
        %2684 = vmatpush1.msra.mxu0 0.0
        %2685 = vmatprep.subr.mxu0 0.0
        %2686 = vmatpush1.msra.mxu0 0.0
        %2687 = vmatprep.subr.mxu0 0.0
        %2688 = vmatpush1.msra.mxu0 0.0
        %2689 = vmatprep.subr.mxu0 0.0
        %2690 = vmatpush1.msra.mxu0 0.0
        %2691 = vmatprep.subr.mxu0 0.0
        %2692 = vmatpush1.msra.mxu0 0.0
        %2693 = vmatprep.subr.mxu0 0.0
        %2694 = vmatpush1.msra.mxu0 0.0
        %2695 = vmatprep.subr.mxu0 0.0
        %2696 = vmatpush1.msra.mxu0 0.0
        %2697 = vmatprep.subr.mxu0 0.0
        %2698 = vmatpush1.msra.mxu0 0.0
        %2699 = vmatprep.subr.mxu0 0.0
        %2700 = vmatpush1.msra.mxu0 0.0
        %2701 = vmatprep.subr.mxu0 0.0
        %2702 = vmatpush1.msra.mxu0 0.0
        %2703 = vmatprep.subr.mxu0 0.0
        %2704 = vmatpush1.msra.mxu0 0.0
        %2705 = vmatprep.subr.mxu0 0.0
        %2706 = vmatpush1.msra.mxu0 0.0
        %2707 = vmatprep.subr.mxu0 0.0
        %2708 = vmatpush1.msra.mxu0 0.0
        %2709 = vmatprep.subr.mxu0 0.0
        %2710 = vmatpush1.msra.mxu0 0.0
        %2711 = vmatprep.subr.mxu0 0.0
        %2712 = vmatpush1.msra.mxu0 0.0
        %2713 = vmatprep.subr.mxu0 0.0
        %2714 = vmatpush1.msra.mxu0 0.0
        %2715 = vmatprep.mubr.f32.mxu0 0.0
        %2716 = vmatmul.mubr.f32.gmra.mrb[0].mxu0 %v2649
        %v2717 = vpop.f32.mrb[0].mxu0
        %v2718 = vadd.f32 %v2647, %v2717
        %v2719 = vpop.f32.mrb[0].mxu0
        %2720 = vdwg.mxu0
        %v2721 = vadd.f32 %v2161, %v2718
        %s2722 = scalar_lea.vmem %s5, 8
        %v2723 = vld [vmem:[%s2722] sm:$0xff]
        %v2724 = vsel %vm298, %v2721, 0.0
        %2725 = vadd.xlane.f32.xlu0 %v2724
        %v2726 = vpop.xlane.xlu0 %2725
        %v2727 = vmul.f32 %v2726, %v302
        %v2728 = vsub.f32 %v2721, %v2727
        %v2729 = vmul.f32 %v2728, %v2728
        %v2730 = vsel %vm298, %v2729, 0.0
        %2731 = vadd.xlane.f32.xlu0 %v2730
        %v2732 = vpop.xlane.xlu0 %2731
        %v2733 = vmul.f32 %v2732, %v302
        %v2734 = vadd.f32 %v2733, 1e-05
        %v2735 = vrsqrt.pop %v2734
        %v2736 = vmul.f32 %v2728, %v2735
        %v2737 = vlaneseq
        %v2738 = vshrl.u32 %v2737, 7
        %v2739 = vsub.s32 0, %v2738
        %v2740 = vrot.slane %v2723, %v2739
        %v2741 = vmul.f32 %v2736, %v2740
        %v2742 = vlaneseq
        %v2743 = vshrl.u32 %v2742, 7
        %v2744 = vsub.s32 1, %v2743
        %v2745 = vrot.slane %v2723, %v2744
        %v2746 = vadd.f32 %v2741, %v2745
        %s2747 = scalar_lea.vmem %s1, 96
        %v2748 = vld [vmem:[%s2747] sm:$0xff]
        %v2749 = vld [vmem:[%s2747 + $0x8] sm:$0xff]
        %v2750 = vld [vmem:[%s2747 + $0x10] sm:$0xff]
        %v2751 = vld [vmem:[%s2747 + $0x18] sm:$0xff]
        %s2752 = scalar_lea.vmem %s1, 128
        %v2753 = vld [vmem:[%s2752] sm:$0xff]
        %v2754 = vld [vmem:[%s2752 + $0x8] sm:$0xff]
        %v2755 = vld [vmem:[%s2752 + $0x10] sm:$0xff]
        %v2756 = vld [vmem:[%s2752 + $0x18] sm:$0xff]
        %s2757 = scalar_lea.vmem %s1, 160
        %v2758 = vld [vmem:[%s2757] sm:$0xff]
        %v2759 = vld [vmem:[%s2757 + $0x8] sm:$0xff]
        %v2760 = vld [vmem:[%s2757 + $0x10] sm:$0xff]
        %v2761 = vld [vmem:[%s2757 + $0x18] sm:$0xff]
        %v2763 = vsel %vm298, %v2746, 0
        %v2766 = vsel %vm298, %v2748, 0
        %2768 = vmatprep.subr.mxu0 0.0
        %2769 = vmatpush1.xpose.msra.mxu0 %v2766
        %2770 = vmatprep.subr.mxu0 0.0
        %2771 = vmatpush1.xpose.msra.mxu0 0.0
        %2772 = vmatprep.subr.mxu0 0.0
        %2773 = vmatpush1.xpose.msra.mxu0 0.0
        %2774 = vmatprep.subr.mxu0 0.0
        %2775 = vmatpush1.xpose.msra.mxu0 0.0
        %2776 = vmatprep.subr.mxu0 0.0
        %2777 = vmatpush1.xpose.msra.mxu0 0.0
        %2778 = vmatprep.subr.mxu0 0.0
        %2779 = vmatpush1.xpose.msra.mxu0 0.0
        %2780 = vmatprep.subr.mxu0 0.0
        %2781 = vmatpush1.xpose.msra.mxu0 0.0
        %2782 = vmatprep.subr.mxu0 0.0
        %2783 = vmatpush1.xpose.msra.mxu0 0.0
        %2784 = vmatprep.subr.mxu0 0.0
        %2785 = vmatpush1.xpose.msra.mxu0 0.0
        %2786 = vmatprep.subr.mxu0 0.0
        %2787 = vmatpush1.xpose.msra.mxu0 0.0
        %2788 = vmatprep.subr.mxu0 0.0
        %2789 = vmatpush1.xpose.msra.mxu0 0.0
        %2790 = vmatprep.subr.mxu0 0.0
        %2791 = vmatpush1.xpose.msra.mxu0 0.0
        %2792 = vmatprep.subr.mxu0 0.0
        %2793 = vmatpush1.xpose.msra.mxu0 0.0
        %2794 = vmatprep.subr.mxu0 0.0
        %2795 = vmatpush1.xpose.msra.mxu0 0.0
        %2796 = vmatprep.subr.mxu0 0.0
        %2797 = vmatpush1.xpose.msra.mxu0 0.0
        %2798 = vmatprep.subr.mxu0 0.0
        %2799 = vmatpush1.xpose.msra.mxu0 0.0
        %2800 = vmatprep.subr.mxu0 0.0
        %2801 = vmatpush1.xpose.msra.mxu0 0.0
        %2802 = vmatprep.subr.mxu0 0.0
        %2803 = vmatpush1.xpose.msra.mxu0 0.0
        %2804 = vmatprep.subr.mxu0 0.0
        %2805 = vmatpush1.xpose.msra.mxu0 0.0
        %2806 = vmatprep.subr.mxu0 0.0
        %2807 = vmatpush1.xpose.msra.mxu0 0.0
        %2808 = vmatprep.subr.mxu0 0.0
        %2809 = vmatpush1.xpose.msra.mxu0 0.0
        %2810 = vmatprep.subr.mxu0 0.0
        %2811 = vmatpush1.xpose.msra.mxu0 0.0
        %2812 = vmatprep.subr.mxu0 0.0
        %2813 = vmatpush1.xpose.msra.mxu0 0.0
        %2814 = vmatprep.subr.mxu0 0.0
        %2815 = vmatpush1.xpose.msra.mxu0 0.0
        %2816 = vmatprep.subr.mxu0 0.0
        %2817 = vmatpush1.xpose.msra.mxu0 0.0
        %2818 = vmatprep.subr.mxu0 0.0
        %2819 = vmatpush1.xpose.msra.mxu0 0.0
        %2820 = vmatprep.subr.mxu0 0.0
        %2821 = vmatpush1.xpose.msra.mxu0 0.0
        %2822 = vmatprep.subr.mxu0 0.0
        %2823 = vmatpush1.xpose.msra.mxu0 0.0
        %2824 = vmatprep.subr.mxu0 0.0
        %2825 = vmatpush1.xpose.msra.mxu0 0.0
        %2826 = vmatprep.subr.mxu0 0.0
        %2827 = vmatpush1.xpose.msra.mxu0 0.0
        %2828 = vmatprep.subr.mxu0 0.0
        %2829 = vmatpush1.xpose.msra.mxu0 0.0
        %2830 = vmatprep.subr.mxu0 0.0
        %2831 = vmatpush1.xpose.msra.mxu0 0.0
        %2832 = vmatprep.mubr.f32.mxu0 0.0
        %2833 = vmatmul.mubr.f32.gmra.mrb[0].mxu0 %v2763
        %v2834 = vpop.f32.mrb[0].mxu0
        %v2835 = vadd.f32 0.0, %v2834
        %v2836 = vpop.f32.mrb[0].mxu0
        %2837 = vdwg.mxu0
        %v2839 = vsel %vm298, %v2749, 0
        %2841 = vmatprep.subr.mxu0 0.0
        %2842 = vmatpush1.xpose.msra.mxu0 %v2839
        %2843 = vmatprep.subr.mxu0 0.0
        %2844 = vmatpush1.xpose.msra.mxu0 0.0
        %2845 = vmatprep.subr.mxu0 0.0
        %2846 = vmatpush1.xpose.msra.mxu0 0.0
        %2847 = vmatprep.subr.mxu0 0.0
        %2848 = vmatpush1.xpose.msra.mxu0 0.0
        %2849 = vmatprep.subr.mxu0 0.0
        %2850 = vmatpush1.xpose.msra.mxu0 0.0
        %2851 = vmatprep.subr.mxu0 0.0
        %2852 = vmatpush1.xpose.msra.mxu0 0.0
        %2853 = vmatprep.subr.mxu0 0.0
        %2854 = vmatpush1.xpose.msra.mxu0 0.0
        %2855 = vmatprep.subr.mxu0 0.0
        %2856 = vmatpush1.xpose.msra.mxu0 0.0
        %2857 = vmatprep.subr.mxu0 0.0
        %2858 = vmatpush1.xpose.msra.mxu0 0.0
        %2859 = vmatprep.subr.mxu0 0.0
        %2860 = vmatpush1.xpose.msra.mxu0 0.0
        %2861 = vmatprep.subr.mxu0 0.0
        %2862 = vmatpush1.xpose.msra.mxu0 0.0
        %2863 = vmatprep.subr.mxu0 0.0
        %2864 = vmatpush1.xpose.msra.mxu0 0.0
        %2865 = vmatprep.subr.mxu0 0.0
        %2866 = vmatpush1.xpose.msra.mxu0 0.0
        %2867 = vmatprep.subr.mxu0 0.0
        %2868 = vmatpush1.xpose.msra.mxu0 0.0
        %2869 = vmatprep.subr.mxu0 0.0
        %2870 = vmatpush1.xpose.msra.mxu0 0.0
        %2871 = vmatprep.subr.mxu0 0.0
        %2872 = vmatpush1.xpose.msra.mxu0 0.0
        %2873 = vmatprep.subr.mxu0 0.0
        %2874 = vmatpush1.xpose.msra.mxu0 0.0
        %2875 = vmatprep.subr.mxu0 0.0
        %2876 = vmatpush1.xpose.msra.mxu0 0.0
        %2877 = vmatprep.subr.mxu0 0.0
        %2878 = vmatpush1.xpose.msra.mxu0 0.0
        %2879 = vmatprep.subr.mxu0 0.0
        %2880 = vmatpush1.xpose.msra.mxu0 0.0
        %2881 = vmatprep.subr.mxu0 0.0
        %2882 = vmatpush1.xpose.msra.mxu0 0.0
        %2883 = vmatprep.subr.mxu0 0.0
        %2884 = vmatpush1.xpose.msra.mxu0 0.0
        %2885 = vmatprep.subr.mxu0 0.0
        %2886 = vmatpush1.xpose.msra.mxu0 0.0
        %2887 = vmatprep.subr.mxu0 0.0
        %2888 = vmatpush1.xpose.msra.mxu0 0.0
        %2889 = vmatprep.subr.mxu0 0.0
        %2890 = vmatpush1.xpose.msra.mxu0 0.0
        %2891 = vmatprep.subr.mxu0 0.0
        %2892 = vmatpush1.xpose.msra.mxu0 0.0
        %2893 = vmatprep.subr.mxu0 0.0
        %2894 = vmatpush1.xpose.msra.mxu0 0.0
        %2895 = vmatprep.subr.mxu0 0.0
        %2896 = vmatpush1.xpose.msra.mxu0 0.0
        %2897 = vmatprep.subr.mxu0 0.0
        %2898 = vmatpush1.xpose.msra.mxu0 0.0
        %2899 = vmatprep.subr.mxu0 0.0
        %2900 = vmatpush1.xpose.msra.mxu0 0.0
        %2901 = vmatprep.subr.mxu0 0.0
        %2902 = vmatpush1.xpose.msra.mxu0 0.0
        %2903 = vmatprep.subr.mxu0 0.0
        %2904 = vmatpush1.xpose.msra.mxu0 0.0
        %2905 = vmatprep.mubr.f32.mxu0 0.0
        %2906 = vmatmul.mubr.f32.gmra.mrb[0].mxu0 %v2763
        %v2907 = vpop.f32.mrb[0].mxu0
        %v2908 = vadd.f32 0.0, %v2907
        %v2909 = vpop.f32.mrb[0].mxu0
        %2910 = vdwg.mxu0
        %v2912 = vsel %vm298, %v2750, 0
        %2914 = vmatprep.subr.mxu0 0.0
        %2915 = vmatpush1.xpose.msra.mxu0 %v2912
        %2916 = vmatprep.subr.mxu0 0.0
        %2917 = vmatpush1.xpose.msra.mxu0 0.0
        %2918 = vmatprep.subr.mxu0 0.0
        %2919 = vmatpush1.xpose.msra.mxu0 0.0
        %2920 = vmatprep.subr.mxu0 0.0
        %2921 = vmatpush1.xpose.msra.mxu0 0.0
        %2922 = vmatprep.subr.mxu0 0.0
        %2923 = vmatpush1.xpose.msra.mxu0 0.0
        %2924 = vmatprep.subr.mxu0 0.0
        %2925 = vmatpush1.xpose.msra.mxu0 0.0
        %2926 = vmatprep.subr.mxu0 0.0
        %2927 = vmatpush1.xpose.msra.mxu0 0.0
        %2928 = vmatprep.subr.mxu0 0.0
        %2929 = vmatpush1.xpose.msra.mxu0 0.0
        %2930 = vmatprep.subr.mxu0 0.0
        %2931 = vmatpush1.xpose.msra.mxu0 0.0
        %2932 = vmatprep.subr.mxu0 0.0
        %2933 = vmatpush1.xpose.msra.mxu0 0.0
        %2934 = vmatprep.subr.mxu0 0.0
        %2935 = vmatpush1.xpose.msra.mxu0 0.0
        %2936 = vmatprep.subr.mxu0 0.0
        %2937 = vmatpush1.xpose.msra.mxu0 0.0
        %2938 = vmatprep.subr.mxu0 0.0
        %2939 = vmatpush1.xpose.msra.mxu0 0.0
        %2940 = vmatprep.subr.mxu0 0.0
        %2941 = vmatpush1.xpose.msra.mxu0 0.0
        %2942 = vmatprep.subr.mxu0 0.0
        %2943 = vmatpush1.xpose.msra.mxu0 0.0
        %2944 = vmatprep.subr.mxu0 0.0
        %2945 = vmatpush1.xpose.msra.mxu0 0.0
        %2946 = vmatprep.subr.mxu0 0.0
        %2947 = vmatpush1.xpose.msra.mxu0 0.0
        %2948 = vmatprep.subr.mxu0 0.0
        %2949 = vmatpush1.xpose.msra.mxu0 0.0
        %2950 = vmatprep.subr.mxu0 0.0
        %2951 = vmatpush1.xpose.msra.mxu0 0.0
        %2952 = vmatprep.subr.mxu0 0.0
        %2953 = vmatpush1.xpose.msra.mxu0 0.0
        %2954 = vmatprep.subr.mxu0 0.0
        %2955 = vmatpush1.xpose.msra.mxu0 0.0
        %2956 = vmatprep.subr.mxu0 0.0
        %2957 = vmatpush1.xpose.msra.mxu0 0.0
        %2958 = vmatprep.subr.mxu0 0.0
        %2959 = vmatpush1.xpose.msra.mxu0 0.0
        %2960 = vmatprep.subr.mxu0 0.0
        %2961 = vmatpush1.xpose.msra.mxu0 0.0
        %2962 = vmatprep.subr.mxu0 0.0
        %2963 = vmatpush1.xpose.msra.mxu0 0.0
        %2964 = vmatprep.subr.mxu0 0.0
        %2965 = vmatpush1.xpose.msra.mxu0 0.0
        %2966 = vmatprep.subr.mxu0 0.0
        %2967 = vmatpush1.xpose.msra.mxu0 0.0
        %2968 = vmatprep.subr.mxu0 0.0
        %2969 = vmatpush1.xpose.msra.mxu0 0.0
        %2970 = vmatprep.subr.mxu0 0.0
        %2971 = vmatpush1.xpose.msra.mxu0 0.0
        %2972 = vmatprep.subr.mxu0 0.0
        %2973 = vmatpush1.xpose.msra.mxu0 0.0
        %2974 = vmatprep.subr.mxu0 0.0
        %2975 = vmatpush1.xpose.msra.mxu0 0.0
        %2976 = vmatprep.subr.mxu0 0.0
        %2977 = vmatpush1.xpose.msra.mxu0 0.0
        %2978 = vmatprep.mubr.f32.mxu0 0.0
        %2979 = vmatmul.mubr.f32.gmra.mrb[0].mxu0 %v2763
        %v2980 = vpop.f32.mrb[0].mxu0
        %v2981 = vadd.f32 0.0, %v2980
        %v2982 = vpop.f32.mrb[0].mxu0
        %2983 = vdwg.mxu0
        %v2985 = vsel %vm298, %v2751, 0
        %2987 = vmatprep.subr.mxu0 0.0
        %2988 = vmatpush1.xpose.msra.mxu0 %v2985
        %2989 = vmatprep.subr.mxu0 0.0
        %2990 = vmatpush1.xpose.msra.mxu0 0.0
        %2991 = vmatprep.subr.mxu0 0.0
        %2992 = vmatpush1.xpose.msra.mxu0 0.0
        %2993 = vmatprep.subr.mxu0 0.0
        %2994 = vmatpush1.xpose.msra.mxu0 0.0
        %2995 = vmatprep.subr.mxu0 0.0
        %2996 = vmatpush1.xpose.msra.mxu0 0.0
        %2997 = vmatprep.subr.mxu0 0.0
        %2998 = vmatpush1.xpose.msra.mxu0 0.0
        %2999 = vmatprep.subr.mxu0 0.0
        %3000 = vmatpush1.xpose.msra.mxu0 0.0
        %3001 = vmatprep.subr.mxu0 0.0
        %3002 = vmatpush1.xpose.msra.mxu0 0.0
        %3003 = vmatprep.subr.mxu0 0.0
        %3004 = vmatpush1.xpose.msra.mxu0 0.0
        %3005 = vmatprep.subr.mxu0 0.0
        %3006 = vmatpush1.xpose.msra.mxu0 0.0
        %3007 = vmatprep.subr.mxu0 0.0
        %3008 = vmatpush1.xpose.msra.mxu0 0.0
        %3009 = vmatprep.subr.mxu0 0.0
        %3010 = vmatpush1.xpose.msra.mxu0 0.0
        %3011 = vmatprep.subr.mxu0 0.0
        %3012 = vmatpush1.xpose.msra.mxu0 0.0
        %3013 = vmatprep.subr.mxu0 0.0
        %3014 = vmatpush1.xpose.msra.mxu0 0.0
        %3015 = vmatprep.subr.mxu0 0.0
        %3016 = vmatpush1.xpose.msra.mxu0 0.0
        %3017 = vmatprep.subr.mxu0 0.0
        %3018 = vmatpush1.xpose.msra.mxu0 0.0
        %3019 = vmatprep.subr.mxu0 0.0
        %3020 = vmatpush1.xpose.msra.mxu0 0.0
        %3021 = vmatprep.subr.mxu0 0.0
        %3022 = vmatpush1.xpose.msra.mxu0 0.0
        %3023 = vmatprep.subr.mxu0 0.0
        %3024 = vmatpush1.xpose.msra.mxu0 0.0
        %3025 = vmatprep.subr.mxu0 0.0
        %3026 = vmatpush1.xpose.msra.mxu0 0.0
        %3027 = vmatprep.subr.mxu0 0.0
        %3028 = vmatpush1.xpose.msra.mxu0 0.0
        %3029 = vmatprep.subr.mxu0 0.0
        %3030 = vmatpush1.xpose.msra.mxu0 0.0
        %3031 = vmatprep.subr.mxu0 0.0
        %3032 = vmatpush1.xpose.msra.mxu0 0.0
        %3033 = vmatprep.subr.mxu0 0.0
        %3034 = vmatpush1.xpose.msra.mxu0 0.0
        %3035 = vmatprep.subr.mxu0 0.0
        %3036 = vmatpush1.xpose.msra.mxu0 0.0
        %3037 = vmatprep.subr.mxu0 0.0
        %3038 = vmatpush1.xpose.msra.mxu0 0.0
        %3039 = vmatprep.subr.mxu0 0.0
        %3040 = vmatpush1.xpose.msra.mxu0 0.0
        %3041 = vmatprep.subr.mxu0 0.0
        %3042 = vmatpush1.xpose.msra.mxu0 0.0
        %3043 = vmatprep.subr.mxu0 0.0
        %3044 = vmatpush1.xpose.msra.mxu0 0.0
        %3045 = vmatprep.subr.mxu0 0.0
        %3046 = vmatpush1.xpose.msra.mxu0 0.0
        %3047 = vmatprep.subr.mxu0 0.0
        %3048 = vmatpush1.xpose.msra.mxu0 0.0
        %3049 = vmatprep.subr.mxu0 0.0
        %3050 = vmatpush1.xpose.msra.mxu0 0.0
        %3051 = vmatprep.mubr.f32.mxu0 0.0
        %3052 = vmatmul.mubr.f32.gmra.mrb[0].mxu0 %v2763
        %v3053 = vpop.f32.mrb[0].mxu0
        %v3054 = vadd.f32 0.0, %v3053
        %v3055 = vpop.f32.mrb[0].mxu0
        %3056 = vdwg.mxu0
        %v3058 = vsel %vm298, %v2753, 0
        %3060 = vmatprep.subr.mxu0 0.0
        %3061 = vmatpush1.xpose.msra.mxu0 %v3058
        %3062 = vmatprep.subr.mxu0 0.0
        %3063 = vmatpush1.xpose.msra.mxu0 0.0
        %3064 = vmatprep.subr.mxu0 0.0
        %3065 = vmatpush1.xpose.msra.mxu0 0.0
        %3066 = vmatprep.subr.mxu0 0.0
        %3067 = vmatpush1.xpose.msra.mxu0 0.0
        %3068 = vmatprep.subr.mxu0 0.0
        %3069 = vmatpush1.xpose.msra.mxu0 0.0
        %3070 = vmatprep.subr.mxu0 0.0
        %3071 = vmatpush1.xpose.msra.mxu0 0.0
        %3072 = vmatprep.subr.mxu0 0.0
        %3073 = vmatpush1.xpose.msra.mxu0 0.0
        %3074 = vmatprep.subr.mxu0 0.0
        %3075 = vmatpush1.xpose.msra.mxu0 0.0
        %3076 = vmatprep.subr.mxu0 0.0
        %3077 = vmatpush1.xpose.msra.mxu0 0.0
        %3078 = vmatprep.subr.mxu0 0.0
        %3079 = vmatpush1.xpose.msra.mxu0 0.0
        %3080 = vmatprep.subr.mxu0 0.0
        %3081 = vmatpush1.xpose.msra.mxu0 0.0
        %3082 = vmatprep.subr.mxu0 0.0
        %3083 = vmatpush1.xpose.msra.mxu0 0.0
        %3084 = vmatprep.subr.mxu0 0.0
        %3085 = vmatpush1.xpose.msra.mxu0 0.0
        %3086 = vmatprep.subr.mxu0 0.0
        %3087 = vmatpush1.xpose.msra.mxu0 0.0
        %3088 = vmatprep.subr.mxu0 0.0
        %3089 = vmatpush1.xpose.msra.mxu0 0.0
        %3090 = vmatprep.subr.mxu0 0.0
        %3091 = vmatpush1.xpose.msra.mxu0 0.0
        %3092 = vmatprep.subr.mxu0 0.0
        %3093 = vmatpush1.xpose.msra.mxu0 0.0
        %3094 = vmatprep.subr.mxu0 0.0
        %3095 = vmatpush1.xpose.msra.mxu0 0.0
        %3096 = vmatprep.subr.mxu0 0.0
        %3097 = vmatpush1.xpose.msra.mxu0 0.0
        %3098 = vmatprep.subr.mxu0 0.0
        %3099 = vmatpush1.xpose.msra.mxu0 0.0
        %3100 = vmatprep.subr.mxu0 0.0
        %3101 = vmatpush1.xpose.msra.mxu0 0.0
        %3102 = vmatprep.subr.mxu0 0.0
        %3103 = vmatpush1.xpose.msra.mxu0 0.0
        %3104 = vmatprep.subr.mxu0 0.0
        %3105 = vmatpush1.xpose.msra.mxu0 0.0
        %3106 = vmatprep.subr.mxu0 0.0
        %3107 = vmatpush1.xpose.msra.mxu0 0.0
        %3108 = vmatprep.subr.mxu0 0.0
        %3109 = vmatpush1.xpose.msra.mxu0 0.0
        %3110 = vmatprep.subr.mxu0 0.0
        %3111 = vmatpush1.xpose.msra.mxu0 0.0
        %3112 = vmatprep.subr.mxu0 0.0
        %3113 = vmatpush1.xpose.msra.mxu0 0.0
        %3114 = vmatprep.subr.mxu0 0.0
        %3115 = vmatpush1.xpose.msra.mxu0 0.0
        %3116 = vmatprep.subr.mxu0 0.0
        %3117 = vmatpush1.xpose.msra.mxu0 0.0
        %3118 = vmatprep.subr.mxu0 0.0
        %3119 = vmatpush1.xpose.msra.mxu0 0.0
        %3120 = vmatprep.subr.mxu0 0.0
        %3121 = vmatpush1.xpose.msra.mxu0 0.0
        %3122 = vmatprep.subr.mxu0 0.0
        %3123 = vmatpush1.xpose.msra.mxu0 0.0
        %3124 = vmatprep.mubr.f32.mxu0 0.0
        %3125 = vmatmul.mubr.f32.gmra.mrb[0].mxu0 %v2763
        %v3126 = vpop.f32.mrb[0].mxu0
        %v3127 = vadd.f32 0.0, %v3126
        %v3128 = vpop.f32.mrb[0].mxu0
        %3129 = vdwg.mxu0
        %v3131 = vsel %vm298, %v2754, 0
        %3133 = vmatprep.subr.mxu0 0.0
        %3134 = vmatpush1.xpose.msra.mxu0 %v3131
        %3135 = vmatprep.subr.mxu0 0.0
        %3136 = vmatpush1.xpose.msra.mxu0 0.0
        %3137 = vmatprep.subr.mxu0 0.0
        %3138 = vmatpush1.xpose.msra.mxu0 0.0
        %3139 = vmatprep.subr.mxu0 0.0
        %3140 = vmatpush1.xpose.msra.mxu0 0.0
        %3141 = vmatprep.subr.mxu0 0.0
        %3142 = vmatpush1.xpose.msra.mxu0 0.0
        %3143 = vmatprep.subr.mxu0 0.0
        %3144 = vmatpush1.xpose.msra.mxu0 0.0
        %3145 = vmatprep.subr.mxu0 0.0
        %3146 = vmatpush1.xpose.msra.mxu0 0.0
        %3147 = vmatprep.subr.mxu0 0.0
        %3148 = vmatpush1.xpose.msra.mxu0 0.0
        %3149 = vmatprep.subr.mxu0 0.0
        %3150 = vmatpush1.xpose.msra.mxu0 0.0
        %3151 = vmatprep.subr.mxu0 0.0
        %3152 = vmatpush1.xpose.msra.mxu0 0.0
        %3153 = vmatprep.subr.mxu0 0.0
        %3154 = vmatpush1.xpose.msra.mxu0 0.0
        %3155 = vmatprep.subr.mxu0 0.0
        %3156 = vmatpush1.xpose.msra.mxu0 0.0
        %3157 = vmatprep.subr.mxu0 0.0
        %3158 = vmatpush1.xpose.msra.mxu0 0.0
        %3159 = vmatprep.subr.mxu0 0.0
        %3160 = vmatpush1.xpose.msra.mxu0 0.0
        %3161 = vmatprep.subr.mxu0 0.0
        %3162 = vmatpush1.xpose.msra.mxu0 0.0
        %3163 = vmatprep.subr.mxu0 0.0
        %3164 = vmatpush1.xpose.msra.mxu0 0.0
        %3165 = vmatprep.subr.mxu0 0.0
        %3166 = vmatpush1.xpose.msra.mxu0 0.0
        %3167 = vmatprep.subr.mxu0 0.0
        %3168 = vmatpush1.xpose.msra.mxu0 0.0
        %3169 = vmatprep.subr.mxu0 0.0
        %3170 = vmatpush1.xpose.msra.mxu0 0.0
        %3171 = vmatprep.subr.mxu0 0.0
        %3172 = vmatpush1.xpose.msra.mxu0 0.0
        %3173 = vmatprep.subr.mxu0 0.0
        %3174 = vmatpush1.xpose.msra.mxu0 0.0
        %3175 = vmatprep.subr.mxu0 0.0
        %3176 = vmatpush1.xpose.msra.mxu0 0.0
        %3177 = vmatprep.subr.mxu0 0.0
        %3178 = vmatpush1.xpose.msra.mxu0 0.0
        %3179 = vmatprep.subr.mxu0 0.0
        %3180 = vmatpush1.xpose.msra.mxu0 0.0
        %3181 = vmatprep.subr.mxu0 0.0
        %3182 = vmatpush1.xpose.msra.mxu0 0.0
        %3183 = vmatprep.subr.mxu0 0.0
        %3184 = vmatpush1.xpose.msra.mxu0 0.0
        %3185 = vmatprep.subr.mxu0 0.0
        %3186 = vmatpush1.xpose.msra.mxu0 0.0
        %3187 = vmatprep.subr.mxu0 0.0
        %3188 = vmatpush1.xpose.msra.mxu0 0.0
        %3189 = vmatprep.subr.mxu0 0.0
        %3190 = vmatpush1.xpose.msra.mxu0 0.0
        %3191 = vmatprep.subr.mxu0 0.0
        %3192 = vmatpush1.xpose.msra.mxu0 0.0
        %3193 = vmatprep.subr.mxu0 0.0
        %3194 = vmatpush1.xpose.msra.mxu0 0.0
        %3195 = vmatprep.subr.mxu0 0.0
        %3196 = vmatpush1.xpose.msra.mxu0 0.0
        %3197 = vmatprep.mubr.f32.mxu0 0.0
        %3198 = vmatmul.mubr.f32.gmra.mrb[0].mxu0 %v2763
        %v3199 = vpop.f32.mrb[0].mxu0
        %v3200 = vadd.f32 0.0, %v3199
        %v3201 = vpop.f32.mrb[0].mxu0
        %3202 = vdwg.mxu0
        %v3204 = vsel %vm298, %v2755, 0
        %3206 = vmatprep.subr.mxu0 0.0
        %3207 = vmatpush1.xpose.msra.mxu0 %v3204
        %3208 = vmatprep.subr.mxu0 0.0
        %3209 = vmatpush1.xpose.msra.mxu0 0.0
        %3210 = vmatprep.subr.mxu0 0.0
        %3211 = vmatpush1.xpose.msra.mxu0 0.0
        %3212 = vmatprep.subr.mxu0 0.0
        %3213 = vmatpush1.xpose.msra.mxu0 0.0
        %3214 = vmatprep.subr.mxu0 0.0
        %3215 = vmatpush1.xpose.msra.mxu0 0.0
        %3216 = vmatprep.subr.mxu0 0.0
        %3217 = vmatpush1.xpose.msra.mxu0 0.0
        %3218 = vmatprep.subr.mxu0 0.0
        %3219 = vmatpush1.xpose.msra.mxu0 0.0
        %3220 = vmatprep.subr.mxu0 0.0
        %3221 = vmatpush1.xpose.msra.mxu0 0.0
        %3222 = vmatprep.subr.mxu0 0.0
        %3223 = vmatpush1.xpose.msra.mxu0 0.0
        %3224 = vmatprep.subr.mxu0 0.0
        %3225 = vmatpush1.xpose.msra.mxu0 0.0
        %3226 = vmatprep.subr.mxu0 0.0
        %3227 = vmatpush1.xpose.msra.mxu0 0.0
        %3228 = vmatprep.subr.mxu0 0.0
        %3229 = vmatpush1.xpose.msra.mxu0 0.0
        %3230 = vmatprep.subr.mxu0 0.0
        %3231 = vmatpush1.xpose.msra.mxu0 0.0
        %3232 = vmatprep.subr.mxu0 0.0
        %3233 = vmatpush1.xpose.msra.mxu0 0.0
        %3234 = vmatprep.subr.mxu0 0.0
        %3235 = vmatpush1.xpose.msra.mxu0 0.0
        %3236 = vmatprep.subr.mxu0 0.0
        %3237 = vmatpush1.xpose.msra.mxu0 0.0
        %3238 = vmatprep.subr.mxu0 0.0
        %3239 = vmatpush1.xpose.msra.mxu0 0.0
        %3240 = vmatprep.subr.mxu0 0.0
        %3241 = vmatpush1.xpose.msra.mxu0 0.0
        %3242 = vmatprep.subr.mxu0 0.0
        %3243 = vmatpush1.xpose.msra.mxu0 0.0
        %3244 = vmatprep.subr.mxu0 0.0
        %3245 = vmatpush1.xpose.msra.mxu0 0.0
        %3246 = vmatprep.subr.mxu0 0.0
        %3247 = vmatpush1.xpose.msra.mxu0 0.0
        %3248 = vmatprep.subr.mxu0 0.0
        %3249 = vmatpush1.xpose.msra.mxu0 0.0
        %3250 = vmatprep.subr.mxu0 0.0
        %3251 = vmatpush1.xpose.msra.mxu0 0.0
        %3252 = vmatprep.subr.mxu0 0.0
        %3253 = vmatpush1.xpose.msra.mxu0 0.0
        %3254 = vmatprep.subr.mxu0 0.0
        %3255 = vmatpush1.xpose.msra.mxu0 0.0
        %3256 = vmatprep.subr.mxu0 0.0
        %3257 = vmatpush1.xpose.msra.mxu0 0.0
        %3258 = vmatprep.subr.mxu0 0.0
        %3259 = vmatpush1.xpose.msra.mxu0 0.0
        %3260 = vmatprep.subr.mxu0 0.0
        %3261 = vmatpush1.xpose.msra.mxu0 0.0
        %3262 = vmatprep.subr.mxu0 0.0
        %3263 = vmatpush1.xpose.msra.mxu0 0.0
        %3264 = vmatprep.subr.mxu0 0.0
        %3265 = vmatpush1.xpose.msra.mxu0 0.0
        %3266 = vmatprep.subr.mxu0 0.0
        %3267 = vmatpush1.xpose.msra.mxu0 0.0
        %3268 = vmatprep.subr.mxu0 0.0
        %3269 = vmatpush1.xpose.msra.mxu0 0.0
        %3270 = vmatprep.mubr.f32.mxu0 0.0
        %3271 = vmatmul.mubr.f32.gmra.mrb[0].mxu0 %v2763
        %v3272 = vpop.f32.mrb[0].mxu0
        %v3273 = vadd.f32 0.0, %v3272
        %v3274 = vpop.f32.mrb[0].mxu0
        %3275 = vdwg.mxu0
        %v3277 = vsel %vm298, %v2756, 0
        %3279 = vmatprep.subr.mxu0 0.0
        %3280 = vmatpush1.xpose.msra.mxu0 %v3277
        %3281 = vmatprep.subr.mxu0 0.0
        %3282 = vmatpush1.xpose.msra.mxu0 0.0
        %3283 = vmatprep.subr.mxu0 0.0
        %3284 = vmatpush1.xpose.msra.mxu0 0.0
        %3285 = vmatprep.subr.mxu0 0.0
        %3286 = vmatpush1.xpose.msra.mxu0 0.0
        %3287 = vmatprep.subr.mxu0 0.0
        %3288 = vmatpush1.xpose.msra.mxu0 0.0
        %3289 = vmatprep.subr.mxu0 0.0
        %3290 = vmatpush1.xpose.msra.mxu0 0.0
        %3291 = vmatprep.subr.mxu0 0.0
        %3292 = vmatpush1.xpose.msra.mxu0 0.0
        %3293 = vmatprep.subr.mxu0 0.0
        %3294 = vmatpush1.xpose.msra.mxu0 0.0
        %3295 = vmatprep.subr.mxu0 0.0
        %3296 = vmatpush1.xpose.msra.mxu0 0.0
        %3297 = vmatprep.subr.mxu0 0.0
        %3298 = vmatpush1.xpose.msra.mxu0 0.0
        %3299 = vmatprep.subr.mxu0 0.0
        %3300 = vmatpush1.xpose.msra.mxu0 0.0
        %3301 = vmatprep.subr.mxu0 0.0
        %3302 = vmatpush1.xpose.msra.mxu0 0.0
        %3303 = vmatprep.subr.mxu0 0.0
        %3304 = vmatpush1.xpose.msra.mxu0 0.0
        %3305 = vmatprep.subr.mxu0 0.0
        %3306 = vmatpush1.xpose.msra.mxu0 0.0
        %3307 = vmatprep.subr.mxu0 0.0
        %3308 = vmatpush1.xpose.msra.mxu0 0.0
        %3309 = vmatprep.subr.mxu0 0.0
        %3310 = vmatpush1.xpose.msra.mxu0 0.0
        %3311 = vmatprep.subr.mxu0 0.0
        %3312 = vmatpush1.xpose.msra.mxu0 0.0
        %3313 = vmatprep.subr.mxu0 0.0
        %3314 = vmatpush1.xpose.msra.mxu0 0.0
        %3315 = vmatprep.subr.mxu0 0.0
        %3316 = vmatpush1.xpose.msra.mxu0 0.0
        %3317 = vmatprep.subr.mxu0 0.0
        %3318 = vmatpush1.xpose.msra.mxu0 0.0
        %3319 = vmatprep.subr.mxu0 0.0
        %3320 = vmatpush1.xpose.msra.mxu0 0.0
        %3321 = vmatprep.subr.mxu0 0.0
        %3322 = vmatpush1.xpose.msra.mxu0 0.0
        %3323 = vmatprep.subr.mxu0 0.0
        %3324 = vmatpush1.xpose.msra.mxu0 0.0
        %3325 = vmatprep.subr.mxu0 0.0
        %3326 = vmatpush1.xpose.msra.mxu0 0.0
        %3327 = vmatprep.subr.mxu0 0.0
        %3328 = vmatpush1.xpose.msra.mxu0 0.0
        %3329 = vmatprep.subr.mxu0 0.0
        %3330 = vmatpush1.xpose.msra.mxu0 0.0
        %3331 = vmatprep.subr.mxu0 0.0
        %3332 = vmatpush1.xpose.msra.mxu0 0.0
        %3333 = vmatprep.subr.mxu0 0.0
        %3334 = vmatpush1.xpose.msra.mxu0 0.0
        %3335 = vmatprep.subr.mxu0 0.0
        %3336 = vmatpush1.xpose.msra.mxu0 0.0
        %3337 = vmatprep.subr.mxu0 0.0
        %3338 = vmatpush1.xpose.msra.mxu0 0.0
        %3339 = vmatprep.subr.mxu0 0.0
        %3340 = vmatpush1.xpose.msra.mxu0 0.0
        %3341 = vmatprep.subr.mxu0 0.0
        %3342 = vmatpush1.xpose.msra.mxu0 0.0
        %3343 = vmatprep.mubr.f32.mxu0 0.0
        %3344 = vmatmul.mubr.f32.gmra.mrb[0].mxu0 %v2763
        %v3345 = vpop.f32.mrb[0].mxu0
        %v3346 = vadd.f32 0.0, %v3345
        %v3347 = vpop.f32.mrb[0].mxu0
        %3348 = vdwg.mxu0
        %v3350 = vsel %vm298, %v2758, 0
        %3352 = vmatprep.subr.mxu0 0.0
        %3353 = vmatpush1.xpose.msra.mxu0 %v3350
        %3354 = vmatprep.subr.mxu0 0.0
        %3355 = vmatpush1.xpose.msra.mxu0 0.0
        %3356 = vmatprep.subr.mxu0 0.0
        %3357 = vmatpush1.xpose.msra.mxu0 0.0
        %3358 = vmatprep.subr.mxu0 0.0
        %3359 = vmatpush1.xpose.msra.mxu0 0.0
        %3360 = vmatprep.subr.mxu0 0.0
        %3361 = vmatpush1.xpose.msra.mxu0 0.0
        %3362 = vmatprep.subr.mxu0 0.0
        %3363 = vmatpush1.xpose.msra.mxu0 0.0
        %3364 = vmatprep.subr.mxu0 0.0
        %3365 = vmatpush1.xpose.msra.mxu0 0.0
        %3366 = vmatprep.subr.mxu0 0.0
        %3367 = vmatpush1.xpose.msra.mxu0 0.0
        %3368 = vmatprep.subr.mxu0 0.0
        %3369 = vmatpush1.xpose.msra.mxu0 0.0
        %3370 = vmatprep.subr.mxu0 0.0
        %3371 = vmatpush1.xpose.msra.mxu0 0.0
        %3372 = vmatprep.subr.mxu0 0.0
        %3373 = vmatpush1.xpose.msra.mxu0 0.0
        %3374 = vmatprep.subr.mxu0 0.0
        %3375 = vmatpush1.xpose.msra.mxu0 0.0
        %3376 = vmatprep.subr.mxu0 0.0
        %3377 = vmatpush1.xpose.msra.mxu0 0.0
        %3378 = vmatprep.subr.mxu0 0.0
        %3379 = vmatpush1.xpose.msra.mxu0 0.0
        %3380 = vmatprep.subr.mxu0 0.0
        %3381 = vmatpush1.xpose.msra.mxu0 0.0
        %3382 = vmatprep.subr.mxu0 0.0
        %3383 = vmatpush1.xpose.msra.mxu0 0.0
        %3384 = vmatprep.subr.mxu0 0.0
        %3385 = vmatpush1.xpose.msra.mxu0 0.0
        %3386 = vmatprep.subr.mxu0 0.0
        %3387 = vmatpush1.xpose.msra.mxu0 0.0
        %3388 = vmatprep.subr.mxu0 0.0
        %3389 = vmatpush1.xpose.msra.mxu0 0.0
        %3390 = vmatprep.subr.mxu0 0.0
        %3391 = vmatpush1.xpose.msra.mxu0 0.0
        %3392 = vmatprep.subr.mxu0 0.0
        %3393 = vmatpush1.xpose.msra.mxu0 0.0
        %3394 = vmatprep.subr.mxu0 0.0
        %3395 = vmatpush1.xpose.msra.mxu0 0.0
        %3396 = vmatprep.subr.mxu0 0.0
        %3397 = vmatpush1.xpose.msra.mxu0 0.0
        %3398 = vmatprep.subr.mxu0 0.0
        %3399 = vmatpush1.xpose.msra.mxu0 0.0
        %3400 = vmatprep.subr.mxu0 0.0
        %3401 = vmatpush1.xpose.msra.mxu0 0.0
        %3402 = vmatprep.subr.mxu0 0.0
        %3403 = vmatpush1.xpose.msra.mxu0 0.0
        %3404 = vmatprep.subr.mxu0 0.0
        %3405 = vmatpush1.xpose.msra.mxu0 0.0
        %3406 = vmatprep.subr.mxu0 0.0
        %3407 = vmatpush1.xpose.msra.mxu0 0.0
        %3408 = vmatprep.subr.mxu0 0.0
        %3409 = vmatpush1.xpose.msra.mxu0 0.0
        %3410 = vmatprep.subr.mxu0 0.0
        %3411 = vmatpush1.xpose.msra.mxu0 0.0
        %3412 = vmatprep.subr.mxu0 0.0
        %3413 = vmatpush1.xpose.msra.mxu0 0.0
        %3414 = vmatprep.subr.mxu0 0.0
        %3415 = vmatpush1.xpose.msra.mxu0 0.0
        %3416 = vmatprep.mubr.f32.mxu0 0.0
        %3417 = vmatmul.mubr.f32.gmra.mrb[0].mxu0 %v2763
        %v3418 = vpop.f32.mrb[0].mxu0
        %v3419 = vadd.f32 0.0, %v3418
        %v3420 = vpop.f32.mrb[0].mxu0
        %3421 = vdwg.mxu0
        %v3423 = vsel %vm298, %v2759, 0
        %3425 = vmatprep.subr.mxu0 0.0
        %3426 = vmatpush1.xpose.msra.mxu0 %v3423
        %3427 = vmatprep.subr.mxu0 0.0
        %3428 = vmatpush1.xpose.msra.mxu0 0.0
        %3429 = vmatprep.subr.mxu0 0.0
        %3430 = vmatpush1.xpose.msra.mxu0 0.0
        %3431 = vmatprep.subr.mxu0 0.0
        %3432 = vmatpush1.xpose.msra.mxu0 0.0
        %3433 = vmatprep.subr.mxu0 0.0
        %3434 = vmatpush1.xpose.msra.mxu0 0.0
        %3435 = vmatprep.subr.mxu0 0.0
        %3436 = vmatpush1.xpose.msra.mxu0 0.0
        %3437 = vmatprep.subr.mxu0 0.0
        %3438 = vmatpush1.xpose.msra.mxu0 0.0
        %3439 = vmatprep.subr.mxu0 0.0
        %3440 = vmatpush1.xpose.msra.mxu0 0.0
        %3441 = vmatprep.subr.mxu0 0.0
        %3442 = vmatpush1.xpose.msra.mxu0 0.0
        %3443 = vmatprep.subr.mxu0 0.0
        %3444 = vmatpush1.xpose.msra.mxu0 0.0
        %3445 = vmatprep.subr.mxu0 0.0
        %3446 = vmatpush1.xpose.msra.mxu0 0.0
        %3447 = vmatprep.subr.mxu0 0.0
        %3448 = vmatpush1.xpose.msra.mxu0 0.0
        %3449 = vmatprep.subr.mxu0 0.0
        %3450 = vmatpush1.xpose.msra.mxu0 0.0
        %3451 = vmatprep.subr.mxu0 0.0
        %3452 = vmatpush1.xpose.msra.mxu0 0.0
        %3453 = vmatprep.subr.mxu0 0.0
        %3454 = vmatpush1.xpose.msra.mxu0 0.0
        %3455 = vmatprep.subr.mxu0 0.0
        %3456 = vmatpush1.xpose.msra.mxu0 0.0
        %3457 = vmatprep.subr.mxu0 0.0
        %3458 = vmatpush1.xpose.msra.mxu0 0.0
        %3459 = vmatprep.subr.mxu0 0.0
        %3460 = vmatpush1.xpose.msra.mxu0 0.0
        %3461 = vmatprep.subr.mxu0 0.0
        %3462 = vmatpush1.xpose.msra.mxu0 0.0
        %3463 = vmatprep.subr.mxu0 0.0
        %3464 = vmatpush1.xpose.msra.mxu0 0.0
        %3465 = vmatprep.subr.mxu0 0.0
        %3466 = vmatpush1.xpose.msra.mxu0 0.0
        %3467 = vmatprep.subr.mxu0 0.0
        %3468 = vmatpush1.xpose.msra.mxu0 0.0
        %3469 = vmatprep.subr.mxu0 0.0
        %3470 = vmatpush1.xpose.msra.mxu0 0.0
        %3471 = vmatprep.subr.mxu0 0.0
        %3472 = vmatpush1.xpose.msra.mxu0 0.0
        %3473 = vmatprep.subr.mxu0 0.0
        %3474 = vmatpush1.xpose.msra.mxu0 0.0
        %3475 = vmatprep.subr.mxu0 0.0
        %3476 = vmatpush1.xpose.msra.mxu0 0.0
        %3477 = vmatprep.subr.mxu0 0.0
        %3478 = vmatpush1.xpose.msra.mxu0 0.0
        %3479 = vmatprep.subr.mxu0 0.0
        %3480 = vmatpush1.xpose.msra.mxu0 0.0
        %3481 = vmatprep.subr.mxu0 0.0
        %3482 = vmatpush1.xpose.msra.mxu0 0.0
        %3483 = vmatprep.subr.mxu0 0.0
        %3484 = vmatpush1.xpose.msra.mxu0 0.0
        %3485 = vmatprep.subr.mxu0 0.0
        %3486 = vmatpush1.xpose.msra.mxu0 0.0
        %3487 = vmatprep.subr.mxu0 0.0
        %3488 = vmatpush1.xpose.msra.mxu0 0.0
        %3489 = vmatprep.mubr.f32.mxu0 0.0
        %3490 = vmatmul.mubr.f32.gmra.mrb[0].mxu0 %v2763
        %v3491 = vpop.f32.mrb[0].mxu0
        %v3492 = vadd.f32 0.0, %v3491
        %v3493 = vpop.f32.mrb[0].mxu0
        %3494 = vdwg.mxu0
        %v3496 = vsel %vm298, %v2760, 0
        %3498 = vmatprep.subr.mxu0 0.0
        %3499 = vmatpush1.xpose.msra.mxu0 %v3496
        %3500 = vmatprep.subr.mxu0 0.0
        %3501 = vmatpush1.xpose.msra.mxu0 0.0
        %3502 = vmatprep.subr.mxu0 0.0
        %3503 = vmatpush1.xpose.msra.mxu0 0.0
        %3504 = vmatprep.subr.mxu0 0.0
        %3505 = vmatpush1.xpose.msra.mxu0 0.0
        %3506 = vmatprep.subr.mxu0 0.0
        %3507 = vmatpush1.xpose.msra.mxu0 0.0
        %3508 = vmatprep.subr.mxu0 0.0
        %3509 = vmatpush1.xpose.msra.mxu0 0.0
        %3510 = vmatprep.subr.mxu0 0.0
        %3511 = vmatpush1.xpose.msra.mxu0 0.0
        %3512 = vmatprep.subr.mxu0 0.0
        %3513 = vmatpush1.xpose.msra.mxu0 0.0
        %3514 = vmatprep.subr.mxu0 0.0
        %3515 = vmatpush1.xpose.msra.mxu0 0.0
        %3516 = vmatprep.subr.mxu0 0.0
        %3517 = vmatpush1.xpose.msra.mxu0 0.0
        %3518 = vmatprep.subr.mxu0 0.0
        %3519 = vmatpush1.xpose.msra.mxu0 0.0
        %3520 = vmatprep.subr.mxu0 0.0
        %3521 = vmatpush1.xpose.msra.mxu0 0.0
        %3522 = vmatprep.subr.mxu0 0.0
        %3523 = vmatpush1.xpose.msra.mxu0 0.0
        %3524 = vmatprep.subr.mxu0 0.0
        %3525 = vmatpush1.xpose.msra.mxu0 0.0
        %3526 = vmatprep.subr.mxu0 0.0
        %3527 = vmatpush1.xpose.msra.mxu0 0.0
        %3528 = vmatprep.subr.mxu0 0.0
        %3529 = vmatpush1.xpose.msra.mxu0 0.0
        %3530 = vmatprep.subr.mxu0 0.0
        %3531 = vmatpush1.xpose.msra.mxu0 0.0
        %3532 = vmatprep.subr.mxu0 0.0
        %3533 = vmatpush1.xpose.msra.mxu0 0.0
        %3534 = vmatprep.subr.mxu0 0.0
        %3535 = vmatpush1.xpose.msra.mxu0 0.0
        %3536 = vmatprep.subr.mxu0 0.0
        %3537 = vmatpush1.xpose.msra.mxu0 0.0
        %3538 = vmatprep.subr.mxu0 0.0
        %3539 = vmatpush1.xpose.msra.mxu0 0.0
        %3540 = vmatprep.subr.mxu0 0.0
        %3541 = vmatpush1.xpose.msra.mxu0 0.0
        %3542 = vmatprep.subr.mxu0 0.0
        %3543 = vmatpush1.xpose.msra.mxu0 0.0
        %3544 = vmatprep.subr.mxu0 0.0
        %3545 = vmatpush1.xpose.msra.mxu0 0.0
        %3546 = vmatprep.subr.mxu0 0.0
        %3547 = vmatpush1.xpose.msra.mxu0 0.0
        %3548 = vmatprep.subr.mxu0 0.0
        %3549 = vmatpush1.xpose.msra.mxu0 0.0
        %3550 = vmatprep.subr.mxu0 0.0
        %3551 = vmatpush1.xpose.msra.mxu0 0.0
        %3552 = vmatprep.subr.mxu0 0.0
        %3553 = vmatpush1.xpose.msra.mxu0 0.0
        %3554 = vmatprep.subr.mxu0 0.0
        %3555 = vmatpush1.xpose.msra.mxu0 0.0
        %3556 = vmatprep.subr.mxu0 0.0
        %3557 = vmatpush1.xpose.msra.mxu0 0.0
        %3558 = vmatprep.subr.mxu0 0.0
        %3559 = vmatpush1.xpose.msra.mxu0 0.0
        %3560 = vmatprep.subr.mxu0 0.0
        %3561 = vmatpush1.xpose.msra.mxu0 0.0
        %3562 = vmatprep.mubr.f32.mxu0 0.0
        %3563 = vmatmul.mubr.f32.gmra.mrb[0].mxu0 %v2763
        %v3564 = vpop.f32.mrb[0].mxu0
        %v3565 = vadd.f32 0.0, %v3564
        %v3566 = vpop.f32.mrb[0].mxu0
        %3567 = vdwg.mxu0
        %v3569 = vsel %vm298, %v2761, 0
        %3571 = vmatprep.subr.mxu0 0.0
        %3572 = vmatpush1.xpose.msra.mxu0 %v3569
        %3573 = vmatprep.subr.mxu0 0.0
        %3574 = vmatpush1.xpose.msra.mxu0 0.0
        %3575 = vmatprep.subr.mxu0 0.0
        %3576 = vmatpush1.xpose.msra.mxu0 0.0
        %3577 = vmatprep.subr.mxu0 0.0
        %3578 = vmatpush1.xpose.msra.mxu0 0.0
        %3579 = vmatprep.subr.mxu0 0.0
        %3580 = vmatpush1.xpose.msra.mxu0 0.0
        %3581 = vmatprep.subr.mxu0 0.0
        %3582 = vmatpush1.xpose.msra.mxu0 0.0
        %3583 = vmatprep.subr.mxu0 0.0
        %3584 = vmatpush1.xpose.msra.mxu0 0.0
        %3585 = vmatprep.subr.mxu0 0.0
        %3586 = vmatpush1.xpose.msra.mxu0 0.0
        %3587 = vmatprep.subr.mxu0 0.0
        %3588 = vmatpush1.xpose.msra.mxu0 0.0
        %3589 = vmatprep.subr.mxu0 0.0
        %3590 = vmatpush1.xpose.msra.mxu0 0.0
        %3591 = vmatprep.subr.mxu0 0.0
        %3592 = vmatpush1.xpose.msra.mxu0 0.0
        %3593 = vmatprep.subr.mxu0 0.0
        %3594 = vmatpush1.xpose.msra.mxu0 0.0
        %3595 = vmatprep.subr.mxu0 0.0
        %3596 = vmatpush1.xpose.msra.mxu0 0.0
        %3597 = vmatprep.subr.mxu0 0.0
        %3598 = vmatpush1.xpose.msra.mxu0 0.0
        %3599 = vmatprep.subr.mxu0 0.0
        %3600 = vmatpush1.xpose.msra.mxu0 0.0
        %3601 = vmatprep.subr.mxu0 0.0
        %3602 = vmatpush1.xpose.msra.mxu0 0.0
        %3603 = vmatprep.subr.mxu0 0.0
        %3604 = vmatpush1.xpose.msra.mxu0 0.0
        %3605 = vmatprep.subr.mxu0 0.0
        %3606 = vmatpush1.xpose.msra.mxu0 0.0
        %3607 = vmatprep.subr.mxu0 0.0
        %3608 = vmatpush1.xpose.msra.mxu0 0.0
        %3609 = vmatprep.subr.mxu0 0.0
        %3610 = vmatpush1.xpose.msra.mxu0 0.0
        %3611 = vmatprep.subr.mxu0 0.0
        %3612 = vmatpush1.xpose.msra.mxu0 0.0
        %3613 = vmatprep.subr.mxu0 0.0
        %3614 = vmatpush1.xpose.msra.mxu0 0.0
        %3615 = vmatprep.subr.mxu0 0.0
        %3616 = vmatpush1.xpose.msra.mxu0 0.0
        %3617 = vmatprep.subr.mxu0 0.0
        %3618 = vmatpush1.xpose.msra.mxu0 0.0
        %3619 = vmatprep.subr.mxu0 0.0
        %3620 = vmatpush1.xpose.msra.mxu0 0.0
        %3621 = vmatprep.subr.mxu0 0.0
        %3622 = vmatpush1.xpose.msra.mxu0 0.0
        %3623 = vmatprep.subr.mxu0 0.0
        %3624 = vmatpush1.xpose.msra.mxu0 0.0
        %3625 = vmatprep.subr.mxu0 0.0
        %3626 = vmatpush1.xpose.msra.mxu0 0.0
        %3627 = vmatprep.subr.mxu0 0.0
        %3628 = vmatpush1.xpose.msra.mxu0 0.0
        %3629 = vmatprep.subr.mxu0 0.0
        %3630 = vmatpush1.xpose.msra.mxu0 0.0
        %3631 = vmatprep.subr.mxu0 0.0
        %3632 = vmatpush1.xpose.msra.mxu0 0.0
        %3633 = vmatprep.subr.mxu0 0.0
        %3634 = vmatpush1.xpose.msra.mxu0 0.0
        %3635 = vmatprep.mubr.f32.mxu0 0.0
        %3636 = vmatmul.mubr.f32.gmra.mrb[0].mxu0 %v2763
        %v3637 = vpop.f32.mrb[0].mxu0
        %v3638 = vadd.f32 0.0, %v3637
        %v3639 = vpop.f32.mrb[0].mxu0
        %3640 = vdwg.mxu0
        %v3642 = vsel %vm1216, %v2835, 0
        %v3645 = vsel %vm1216, %v3127, 0
        %3647 = vmatprep.subr.mxu0 0.0
        %3648 = vmatpush1.xpose.msra.mxu0 %v3645
        %3649 = vmatprep.subr.mxu0 0.0
        %3650 = vmatpush1.xpose.msra.mxu0 0.0
        %3651 = vmatprep.subr.mxu0 0.0
        %3652 = vmatpush1.xpose.msra.mxu0 0.0
        %3653 = vmatprep.subr.mxu0 0.0
        %3654 = vmatpush1.xpose.msra.mxu0 0.0
        %3655 = vmatprep.subr.mxu0 0.0
        %3656 = vmatpush1.xpose.msra.mxu0 0.0
        %3657 = vmatprep.subr.mxu0 0.0
        %3658 = vmatpush1.xpose.msra.mxu0 0.0
        %3659 = vmatprep.subr.mxu0 0.0
        %3660 = vmatpush1.xpose.msra.mxu0 0.0
        %3661 = vmatprep.subr.mxu0 0.0
        %3662 = vmatpush1.xpose.msra.mxu0 0.0
        %3663 = vmatprep.subr.mxu0 0.0
        %3664 = vmatpush1.xpose.msra.mxu0 0.0
        %3665 = vmatprep.subr.mxu0 0.0
        %3666 = vmatpush1.xpose.msra.mxu0 0.0
        %3667 = vmatprep.subr.mxu0 0.0
        %3668 = vmatpush1.xpose.msra.mxu0 0.0
        %3669 = vmatprep.subr.mxu0 0.0
        %3670 = vmatpush1.xpose.msra.mxu0 0.0
        %3671 = vmatprep.subr.mxu0 0.0
        %3672 = vmatpush1.xpose.msra.mxu0 0.0
        %3673 = vmatprep.subr.mxu0 0.0
        %3674 = vmatpush1.xpose.msra.mxu0 0.0
        %3675 = vmatprep.subr.mxu0 0.0
        %3676 = vmatpush1.xpose.msra.mxu0 0.0
        %3677 = vmatprep.subr.mxu0 0.0
        %3678 = vmatpush1.xpose.msra.mxu0 0.0
        %3679 = vmatprep.subr.mxu0 0.0
        %3680 = vmatpush1.xpose.msra.mxu0 0.0
        %3681 = vmatprep.subr.mxu0 0.0
        %3682 = vmatpush1.xpose.msra.mxu0 0.0
        %3683 = vmatprep.subr.mxu0 0.0
        %3684 = vmatpush1.xpose.msra.mxu0 0.0
        %3685 = vmatprep.subr.mxu0 0.0
        %3686 = vmatpush1.xpose.msra.mxu0 0.0
        %3687 = vmatprep.subr.mxu0 0.0
        %3688 = vmatpush1.xpose.msra.mxu0 0.0
        %3689 = vmatprep.subr.mxu0 0.0
        %3690 = vmatpush1.xpose.msra.mxu0 0.0
        %3691 = vmatprep.subr.mxu0 0.0
        %3692 = vmatpush1.xpose.msra.mxu0 0.0
        %3693 = vmatprep.subr.mxu0 0.0
        %3694 = vmatpush1.xpose.msra.mxu0 0.0
        %3695 = vmatprep.subr.mxu0 0.0
        %3696 = vmatpush1.xpose.msra.mxu0 0.0
        %3697 = vmatprep.subr.mxu0 0.0
        %3698 = vmatpush1.xpose.msra.mxu0 0.0
        %3699 = vmatprep.subr.mxu0 0.0
        %3700 = vmatpush1.xpose.msra.mxu0 0.0
        %3701 = vmatprep.subr.mxu0 0.0
        %3702 = vmatpush1.xpose.msra.mxu0 0.0
        %3703 = vmatprep.subr.mxu0 0.0
        %3704 = vmatpush1.xpose.msra.mxu0 0.0
        %3705 = vmatprep.subr.mxu0 0.0
        %3706 = vmatpush1.xpose.msra.mxu0 0.0
        %3707 = vmatprep.subr.mxu0 0.0
        %3708 = vmatpush1.xpose.msra.mxu0 0.0
        %3709 = vmatprep.subr.mxu0 0.0
        %3710 = vmatpush1.xpose.msra.mxu0 0.0
        %3711 = vmatprep.mubr.f32.mxu0 0.0
        %3712 = vmatmul.mubr.f32.gmra.mrb[0].mxu0 %v3642
        %v3713 = vpop.f32.mrb[0].mxu0
        %v3714 = vadd.f32 0.0, %v3713
        %v3715 = vpop.f32.mrb[0].mxu0
        %3716 = vdwg.mxu0
        %v3718 = vsel %vm1216, %v2908, 0
        %v3721 = vsel %vm1216, %v3200, 0
        %3723 = vmatprep.subr.mxu0 0.0
        %3724 = vmatpush1.xpose.msra.mxu0 %v3721
        %3725 = vmatprep.subr.mxu0 0.0
        %3726 = vmatpush1.xpose.msra.mxu0 0.0
        %3727 = vmatprep.subr.mxu0 0.0
        %3728 = vmatpush1.xpose.msra.mxu0 0.0
        %3729 = vmatprep.subr.mxu0 0.0
        %3730 = vmatpush1.xpose.msra.mxu0 0.0
        %3731 = vmatprep.subr.mxu0 0.0
        %3732 = vmatpush1.xpose.msra.mxu0 0.0
        %3733 = vmatprep.subr.mxu0 0.0
        %3734 = vmatpush1.xpose.msra.mxu0 0.0
        %3735 = vmatprep.subr.mxu0 0.0
        %3736 = vmatpush1.xpose.msra.mxu0 0.0
        %3737 = vmatprep.subr.mxu0 0.0
        %3738 = vmatpush1.xpose.msra.mxu0 0.0
        %3739 = vmatprep.subr.mxu0 0.0
        %3740 = vmatpush1.xpose.msra.mxu0 0.0
        %3741 = vmatprep.subr.mxu0 0.0
        %3742 = vmatpush1.xpose.msra.mxu0 0.0
        %3743 = vmatprep.subr.mxu0 0.0
        %3744 = vmatpush1.xpose.msra.mxu0 0.0
        %3745 = vmatprep.subr.mxu0 0.0
        %3746 = vmatpush1.xpose.msra.mxu0 0.0
        %3747 = vmatprep.subr.mxu0 0.0
        %3748 = vmatpush1.xpose.msra.mxu0 0.0
        %3749 = vmatprep.subr.mxu0 0.0
        %3750 = vmatpush1.xpose.msra.mxu0 0.0
        %3751 = vmatprep.subr.mxu0 0.0
        %3752 = vmatpush1.xpose.msra.mxu0 0.0
        %3753 = vmatprep.subr.mxu0 0.0
        %3754 = vmatpush1.xpose.msra.mxu0 0.0
        %3755 = vmatprep.subr.mxu0 0.0
        %3756 = vmatpush1.xpose.msra.mxu0 0.0
        %3757 = vmatprep.subr.mxu0 0.0
        %3758 = vmatpush1.xpose.msra.mxu0 0.0
        %3759 = vmatprep.subr.mxu0 0.0
        %3760 = vmatpush1.xpose.msra.mxu0 0.0
        %3761 = vmatprep.subr.mxu0 0.0
        %3762 = vmatpush1.xpose.msra.mxu0 0.0
        %3763 = vmatprep.subr.mxu0 0.0
        %3764 = vmatpush1.xpose.msra.mxu0 0.0
        %3765 = vmatprep.subr.mxu0 0.0
        %3766 = vmatpush1.xpose.msra.mxu0 0.0
        %3767 = vmatprep.subr.mxu0 0.0
        %3768 = vmatpush1.xpose.msra.mxu0 0.0
        %3769 = vmatprep.subr.mxu0 0.0
        %3770 = vmatpush1.xpose.msra.mxu0 0.0
        %3771 = vmatprep.subr.mxu0 0.0
        %3772 = vmatpush1.xpose.msra.mxu0 0.0
        %3773 = vmatprep.subr.mxu0 0.0
        %3774 = vmatpush1.xpose.msra.mxu0 0.0
        %3775 = vmatprep.subr.mxu0 0.0
        %3776 = vmatpush1.xpose.msra.mxu0 0.0
        %3777 = vmatprep.subr.mxu0 0.0
        %3778 = vmatpush1.xpose.msra.mxu0 0.0
        %3779 = vmatprep.subr.mxu0 0.0
        %3780 = vmatpush1.xpose.msra.mxu0 0.0
        %3781 = vmatprep.subr.mxu0 0.0
        %3782 = vmatpush1.xpose.msra.mxu0 0.0
        %3783 = vmatprep.subr.mxu0 0.0
        %3784 = vmatpush1.xpose.msra.mxu0 0.0
        %3785 = vmatprep.subr.mxu0 0.0
        %3786 = vmatpush1.xpose.msra.mxu0 0.0
        %3787 = vmatprep.mubr.f32.mxu0 0.0
        %3788 = vmatmul.mubr.f32.gmra.mrb[0].mxu0 %v3718
        %v3789 = vpop.f32.mrb[0].mxu0
        %v3790 = vadd.f32 0.0, %v3789
        %v3791 = vpop.f32.mrb[0].mxu0
        %3792 = vdwg.mxu0
        %v3794 = vsel %vm1216, %v2981, 0
        %v3797 = vsel %vm1216, %v3273, 0
        %3799 = vmatprep.subr.mxu0 0.0
        %3800 = vmatpush1.xpose.msra.mxu0 %v3797
        %3801 = vmatprep.subr.mxu0 0.0
        %3802 = vmatpush1.xpose.msra.mxu0 0.0
        %3803 = vmatprep.subr.mxu0 0.0
        %3804 = vmatpush1.xpose.msra.mxu0 0.0
        %3805 = vmatprep.subr.mxu0 0.0
        %3806 = vmatpush1.xpose.msra.mxu0 0.0
        %3807 = vmatprep.subr.mxu0 0.0
        %3808 = vmatpush1.xpose.msra.mxu0 0.0
        %3809 = vmatprep.subr.mxu0 0.0
        %3810 = vmatpush1.xpose.msra.mxu0 0.0
        %3811 = vmatprep.subr.mxu0 0.0
        %3812 = vmatpush1.xpose.msra.mxu0 0.0
        %3813 = vmatprep.subr.mxu0 0.0
        %3814 = vmatpush1.xpose.msra.mxu0 0.0
        %3815 = vmatprep.subr.mxu0 0.0
        %3816 = vmatpush1.xpose.msra.mxu0 0.0
        %3817 = vmatprep.subr.mxu0 0.0
        %3818 = vmatpush1.xpose.msra.mxu0 0.0
        %3819 = vmatprep.subr.mxu0 0.0
        %3820 = vmatpush1.xpose.msra.mxu0 0.0
        %3821 = vmatprep.subr.mxu0 0.0
        %3822 = vmatpush1.xpose.msra.mxu0 0.0
        %3823 = vmatprep.subr.mxu0 0.0
        %3824 = vmatpush1.xpose.msra.mxu0 0.0
        %3825 = vmatprep.subr.mxu0 0.0
        %3826 = vmatpush1.xpose.msra.mxu0 0.0
        %3827 = vmatprep.subr.mxu0 0.0
        %3828 = vmatpush1.xpose.msra.mxu0 0.0
        %3829 = vmatprep.subr.mxu0 0.0
        %3830 = vmatpush1.xpose.msra.mxu0 0.0
        %3831 = vmatprep.subr.mxu0 0.0
        %3832 = vmatpush1.xpose.msra.mxu0 0.0
        %3833 = vmatprep.subr.mxu0 0.0
        %3834 = vmatpush1.xpose.msra.mxu0 0.0
        %3835 = vmatprep.subr.mxu0 0.0
        %3836 = vmatpush1.xpose.msra.mxu0 0.0
        %3837 = vmatprep.subr.mxu0 0.0
        %3838 = vmatpush1.xpose.msra.mxu0 0.0
        %3839 = vmatprep.subr.mxu0 0.0
        %3840 = vmatpush1.xpose.msra.mxu0 0.0
        %3841 = vmatprep.subr.mxu0 0.0
        %3842 = vmatpush1.xpose.msra.mxu0 0.0
        %3843 = vmatprep.subr.mxu0 0.0
        %3844 = vmatpush1.xpose.msra.mxu0 0.0
        %3845 = vmatprep.subr.mxu0 0.0
        %3846 = vmatpush1.xpose.msra.mxu0 0.0
        %3847 = vmatprep.subr.mxu0 0.0
        %3848 = vmatpush1.xpose.msra.mxu0 0.0
        %3849 = vmatprep.subr.mxu0 0.0
        %3850 = vmatpush1.xpose.msra.mxu0 0.0
        %3851 = vmatprep.subr.mxu0 0.0
        %3852 = vmatpush1.xpose.msra.mxu0 0.0
        %3853 = vmatprep.subr.mxu0 0.0
        %3854 = vmatpush1.xpose.msra.mxu0 0.0
        %3855 = vmatprep.subr.mxu0 0.0
        %3856 = vmatpush1.xpose.msra.mxu0 0.0
        %3857 = vmatprep.subr.mxu0 0.0
        %3858 = vmatpush1.xpose.msra.mxu0 0.0
        %3859 = vmatprep.subr.mxu0 0.0
        %3860 = vmatpush1.xpose.msra.mxu0 0.0
        %3861 = vmatprep.subr.mxu0 0.0
        %3862 = vmatpush1.xpose.msra.mxu0 0.0
        %3863 = vmatprep.mubr.f32.mxu0 0.0
        %3864 = vmatmul.mubr.f32.gmra.mrb[0].mxu0 %v3794
        %v3865 = vpop.f32.mrb[0].mxu0
        %v3866 = vadd.f32 0.0, %v3865
        %v3867 = vpop.f32.mrb[0].mxu0
        %3868 = vdwg.mxu0
        %v3870 = vsel %vm1216, %v3054, 0
        %v3873 = vsel %vm1216, %v3346, 0
        %3875 = vmatprep.subr.mxu0 0.0
        %3876 = vmatpush1.xpose.msra.mxu0 %v3873
        %3877 = vmatprep.subr.mxu0 0.0
        %3878 = vmatpush1.xpose.msra.mxu0 0.0
        %3879 = vmatprep.subr.mxu0 0.0
        %3880 = vmatpush1.xpose.msra.mxu0 0.0
        %3881 = vmatprep.subr.mxu0 0.0
        %3882 = vmatpush1.xpose.msra.mxu0 0.0
        %3883 = vmatprep.subr.mxu0 0.0
        %3884 = vmatpush1.xpose.msra.mxu0 0.0
        %3885 = vmatprep.subr.mxu0 0.0
        %3886 = vmatpush1.xpose.msra.mxu0 0.0
        %3887 = vmatprep.subr.mxu0 0.0
        %3888 = vmatpush1.xpose.msra.mxu0 0.0
        %3889 = vmatprep.subr.mxu0 0.0
        %3890 = vmatpush1.xpose.msra.mxu0 0.0
        %3891 = vmatprep.subr.mxu0 0.0
        %3892 = vmatpush1.xpose.msra.mxu0 0.0
        %3893 = vmatprep.subr.mxu0 0.0
        %3894 = vmatpush1.xpose.msra.mxu0 0.0
        %3895 = vmatprep.subr.mxu0 0.0
        %3896 = vmatpush1.xpose.msra.mxu0 0.0
        %3897 = vmatprep.subr.mxu0 0.0
        %3898 = vmatpush1.xpose.msra.mxu0 0.0
        %3899 = vmatprep.subr.mxu0 0.0
        %3900 = vmatpush1.xpose.msra.mxu0 0.0
        %3901 = vmatprep.subr.mxu0 0.0
        %3902 = vmatpush1.xpose.msra.mxu0 0.0
        %3903 = vmatprep.subr.mxu0 0.0
        %3904 = vmatpush1.xpose.msra.mxu0 0.0
        %3905 = vmatprep.subr.mxu0 0.0
        %3906 = vmatpush1.xpose.msra.mxu0 0.0
        %3907 = vmatprep.subr.mxu0 0.0
        %3908 = vmatpush1.xpose.msra.mxu0 0.0
        %3909 = vmatprep.subr.mxu0 0.0
        %3910 = vmatpush1.xpose.msra.mxu0 0.0
        %3911 = vmatprep.subr.mxu0 0.0
        %3912 = vmatpush1.xpose.msra.mxu0 0.0
        %3913 = vmatprep.subr.mxu0 0.0
        %3914 = vmatpush1.xpose.msra.mxu0 0.0
        %3915 = vmatprep.subr.mxu0 0.0
        %3916 = vmatpush1.xpose.msra.mxu0 0.0
        %3917 = vmatprep.subr.mxu0 0.0
        %3918 = vmatpush1.xpose.msra.mxu0 0.0
        %3919 = vmatprep.subr.mxu0 0.0
        %3920 = vmatpush1.xpose.msra.mxu0 0.0
        %3921 = vmatprep.subr.mxu0 0.0
        %3922 = vmatpush1.xpose.msra.mxu0 0.0
        %3923 = vmatprep.subr.mxu0 0.0
        %3924 = vmatpush1.xpose.msra.mxu0 0.0
        %3925 = vmatprep.subr.mxu0 0.0
        %3926 = vmatpush1.xpose.msra.mxu0 0.0
        %3927 = vmatprep.subr.mxu0 0.0
        %3928 = vmatpush1.xpose.msra.mxu0 0.0
        %3929 = vmatprep.subr.mxu0 0.0
        %3930 = vmatpush1.xpose.msra.mxu0 0.0
        %3931 = vmatprep.subr.mxu0 0.0
        %3932 = vmatpush1.xpose.msra.mxu0 0.0
        %3933 = vmatprep.subr.mxu0 0.0
        %3934 = vmatpush1.xpose.msra.mxu0 0.0
        %3935 = vmatprep.subr.mxu0 0.0
        %3936 = vmatpush1.xpose.msra.mxu0 0.0
        %3937 = vmatprep.subr.mxu0 0.0
        %3938 = vmatpush1.xpose.msra.mxu0 0.0
        %3939 = vmatprep.mubr.f32.mxu0 0.0
        %3940 = vmatmul.mubr.f32.gmra.mrb[0].mxu0 %v3870
        %v3941 = vpop.f32.mrb[0].mxu0
        %v3942 = vadd.f32 0.0, %v3941
        %v3943 = vpop.f32.mrb[0].mxu0
        %3944 = vdwg.mxu0
        %v3945 = vsel %vm1216, %v3714, -inf
        %3946 = vmax.xlane.f32.xlu0 %v3945
        %v3947 = vpop.xlane.xlu0 %3946
        %v3948 = vsel %vm1216, %v3790, -inf
        %3949 = vmax.xlane.f32.xlu0 %v3948
        %v3950 = vpop.xlane.xlu0 %3949
        %v3951 = vsel %vm1216, %v3866, -inf
        %3952 = vmax.xlane.f32.xlu0 %v3951
        %v3953 = vpop.xlane.xlu0 %3952
        %v3954 = vsel %vm1216, %v3942, -inf
        %3955 = vmax.xlane.f32.xlu0 %v3954
        %v3956 = vpop.xlane.xlu0 %3955
        %v3957 = vsub.f32 %v3714, %v3947
        %v3958 = vsub.f32 %v3790, %v3950
        %v3959 = vsub.f32 %v3866, %v3953
        %v3960 = vsub.f32 %v3942, %v3956
        %v3961 = vmul.f32 %v3957, 1.442695
        %v3962 = vpow.pop %v3961
        %v3963 = vmul.f32 %v3958, 1.442695
        %v3964 = vpow.pop %v3963
        %v3965 = vmul.f32 %v3959, 1.442695
        %v3966 = vpow.pop %v3965
        %v3967 = vmul.f32 %v3960, 1.442695
        %v3968 = vpow.pop %v3967
        %v3969 = vsel %vm1216, %v3962, 0.0
        %3970 = vadd.xlane.f32.xlu0 %v3969
        %v3971 = vpop.xlane.xlu0 %3970
        %v3972 = vsel %vm1216, %v3964, 0.0
        %3973 = vadd.xlane.f32.xlu0 %v3972
        %v3974 = vpop.xlane.xlu0 %3973
        %v3975 = vsel %vm1216, %v3966, 0.0
        %3976 = vadd.xlane.f32.xlu0 %v3975
        %v3977 = vpop.xlane.xlu0 %3976
        %v3978 = vsel %vm1216, %v3968, 0.0
        %3979 = vadd.xlane.f32.xlu0 %v3978
        %v3980 = vpop.xlane.xlu0 %3979
        %v3981 = vrcp.pop %v3971
        %v3982 = vmul.f32 %v3962, %v3981
        %v3983 = vrcp.pop %v3974
        %v3984 = vmul.f32 %v3964, %v3983
        %v3985 = vrcp.pop %v3977
        %v3986 = vmul.f32 %v3966, %v3985
        %v3987 = vrcp.pop %v3980
        %v3988 = vmul.f32 %v3968, %v3987
        %v3990 = vsel %vm1216, %v3982, 0
        %3992 = vmatprep.subr.mxu0 0.0
        %3993 = vmatpush1.msra.mxu0 %v3419
        %3994 = vmatprep.subr.mxu0 0.0
        %3995 = vmatpush1.msra.mxu0 0.0
        %3996 = vmatprep.subr.mxu0 0.0
        %3997 = vmatpush1.msra.mxu0 0.0
        %3998 = vmatprep.subr.mxu0 0.0
        %3999 = vmatpush1.msra.mxu0 0.0
        %4000 = vmatprep.subr.mxu0 0.0
        %4001 = vmatpush1.msra.mxu0 0.0
        %4002 = vmatprep.subr.mxu0 0.0
        %4003 = vmatpush1.msra.mxu0 0.0
        %4004 = vmatprep.subr.mxu0 0.0
        %4005 = vmatpush1.msra.mxu0 0.0
        %4006 = vmatprep.subr.mxu0 0.0
        %4007 = vmatpush1.msra.mxu0 0.0
        %4008 = vmatprep.subr.mxu0 0.0
        %4009 = vmatpush1.msra.mxu0 0.0
        %4010 = vmatprep.subr.mxu0 0.0
        %4011 = vmatpush1.msra.mxu0 0.0
        %4012 = vmatprep.subr.mxu0 0.0
        %4013 = vmatpush1.msra.mxu0 0.0
        %4014 = vmatprep.subr.mxu0 0.0
        %4015 = vmatpush1.msra.mxu0 0.0
        %4016 = vmatprep.subr.mxu0 0.0
        %4017 = vmatpush1.msra.mxu0 0.0
        %4018 = vmatprep.subr.mxu0 0.0
        %4019 = vmatpush1.msra.mxu0 0.0
        %4020 = vmatprep.subr.mxu0 0.0
        %4021 = vmatpush1.msra.mxu0 0.0
        %4022 = vmatprep.subr.mxu0 0.0
        %4023 = vmatpush1.msra.mxu0 0.0
        %4024 = vmatprep.subr.mxu0 0.0
        %4025 = vmatpush1.msra.mxu0 0.0
        %4026 = vmatprep.subr.mxu0 0.0
        %4027 = vmatpush1.msra.mxu0 0.0
        %4028 = vmatprep.subr.mxu0 0.0
        %4029 = vmatpush1.msra.mxu0 0.0
        %4030 = vmatprep.subr.mxu0 0.0
        %4031 = vmatpush1.msra.mxu0 0.0
        %4032 = vmatprep.subr.mxu0 0.0
        %4033 = vmatpush1.msra.mxu0 0.0
        %4034 = vmatprep.subr.mxu0 0.0
        %4035 = vmatpush1.msra.mxu0 0.0
        %4036 = vmatprep.subr.mxu0 0.0
        %4037 = vmatpush1.msra.mxu0 0.0
        %4038 = vmatprep.subr.mxu0 0.0
        %4039 = vmatpush1.msra.mxu0 0.0
        %4040 = vmatprep.subr.mxu0 0.0
        %4041 = vmatpush1.msra.mxu0 0.0
        %4042 = vmatprep.subr.mxu0 0.0
        %4043 = vmatpush1.msra.mxu0 0.0
        %4044 = vmatprep.subr.mxu0 0.0
        %4045 = vmatpush1.msra.mxu0 0.0
        %4046 = vmatprep.subr.mxu0 0.0
        %4047 = vmatpush1.msra.mxu0 0.0
        %4048 = vmatprep.subr.mxu0 0.0
        %4049 = vmatpush1.msra.mxu0 0.0
        %4050 = vmatprep.subr.mxu0 0.0
        %4051 = vmatpush1.msra.mxu0 0.0
        %4052 = vmatprep.subr.mxu0 0.0
        %4053 = vmatpush1.msra.mxu0 0.0
        %4054 = vmatprep.subr.mxu0 0.0
        %4055 = vmatpush1.msra.mxu0 0.0
        %4056 = vmatprep.mubr.f32.mxu0 0.0
        %4057 = vmatmul.mubr.f32.gmra.mrb[0].mxu0 %v3990
        %v4058 = vpop.f32.mrb[0].mxu0
        %v4059 = vadd.f32 0.0, %v4058
        %v4060 = vpop.f32.mrb[0].mxu0
        %4061 = vdwg.mxu0
        %v4063 = vsel %vm1216, %v3984, 0
        %4065 = vmatprep.subr.mxu0 0.0
        %4066 = vmatpush1.msra.mxu0 %v3492
        %4067 = vmatprep.subr.mxu0 0.0
        %4068 = vmatpush1.msra.mxu0 0.0
        %4069 = vmatprep.subr.mxu0 0.0
        %4070 = vmatpush1.msra.mxu0 0.0
        %4071 = vmatprep.subr.mxu0 0.0
        %4072 = vmatpush1.msra.mxu0 0.0
        %4073 = vmatprep.subr.mxu0 0.0
        %4074 = vmatpush1.msra.mxu0 0.0
        %4075 = vmatprep.subr.mxu0 0.0
        %4076 = vmatpush1.msra.mxu0 0.0
        %4077 = vmatprep.subr.mxu0 0.0
        %4078 = vmatpush1.msra.mxu0 0.0
        %4079 = vmatprep.subr.mxu0 0.0
        %4080 = vmatpush1.msra.mxu0 0.0
        %4081 = vmatprep.subr.mxu0 0.0
        %4082 = vmatpush1.msra.mxu0 0.0
        %4083 = vmatprep.subr.mxu0 0.0
        %4084 = vmatpush1.msra.mxu0 0.0
        %4085 = vmatprep.subr.mxu0 0.0
        %4086 = vmatpush1.msra.mxu0 0.0
        %4087 = vmatprep.subr.mxu0 0.0
        %4088 = vmatpush1.msra.mxu0 0.0
        %4089 = vmatprep.subr.mxu0 0.0
        %4090 = vmatpush1.msra.mxu0 0.0
        %4091 = vmatprep.subr.mxu0 0.0
        %4092 = vmatpush1.msra.mxu0 0.0
        %4093 = vmatprep.subr.mxu0 0.0
        %4094 = vmatpush1.msra.mxu0 0.0
        %4095 = vmatprep.subr.mxu0 0.0
        %4096 = vmatpush1.msra.mxu0 0.0
        %4097 = vmatprep.subr.mxu0 0.0
        %4098 = vmatpush1.msra.mxu0 0.0
        %4099 = vmatprep.subr.mxu0 0.0
        %4100 = vmatpush1.msra.mxu0 0.0
        %4101 = vmatprep.subr.mxu0 0.0
        %4102 = vmatpush1.msra.mxu0 0.0
        %4103 = vmatprep.subr.mxu0 0.0
        %4104 = vmatpush1.msra.mxu0 0.0
        %4105 = vmatprep.subr.mxu0 0.0
        %4106 = vmatpush1.msra.mxu0 0.0
        %4107 = vmatprep.subr.mxu0 0.0
        %4108 = vmatpush1.msra.mxu0 0.0
        %4109 = vmatprep.subr.mxu0 0.0
        %4110 = vmatpush1.msra.mxu0 0.0
        %4111 = vmatprep.subr.mxu0 0.0
        %4112 = vmatpush1.msra.mxu0 0.0
        %4113 = vmatprep.subr.mxu0 0.0
        %4114 = vmatpush1.msra.mxu0 0.0
        %4115 = vmatprep.subr.mxu0 0.0
        %4116 = vmatpush1.msra.mxu0 0.0
        %4117 = vmatprep.subr.mxu0 0.0
        %4118 = vmatpush1.msra.mxu0 0.0
        %4119 = vmatprep.subr.mxu0 0.0
        %4120 = vmatpush1.msra.mxu0 0.0
        %4121 = vmatprep.subr.mxu0 0.0
        %4122 = vmatpush1.msra.mxu0 0.0
        %4123 = vmatprep.subr.mxu0 0.0
        %4124 = vmatpush1.msra.mxu0 0.0
        %4125 = vmatprep.subr.mxu0 0.0
        %4126 = vmatpush1.msra.mxu0 0.0
        %4127 = vmatprep.subr.mxu0 0.0
        %4128 = vmatpush1.msra.mxu0 0.0
        %4129 = vmatprep.mubr.f32.mxu0 0.0
        %4130 = vmatmul.mubr.f32.gmra.mrb[0].mxu0 %v4063
        %v4131 = vpop.f32.mrb[0].mxu0
        %v4132 = vadd.f32 0.0, %v4131
        %v4133 = vpop.f32.mrb[0].mxu0
        %4134 = vdwg.mxu0
        %v4136 = vsel %vm1216, %v3986, 0
        %4138 = vmatprep.subr.mxu0 0.0
        %4139 = vmatpush1.msra.mxu0 %v3565
        %4140 = vmatprep.subr.mxu0 0.0
        %4141 = vmatpush1.msra.mxu0 0.0
        %4142 = vmatprep.subr.mxu0 0.0
        %4143 = vmatpush1.msra.mxu0 0.0
        %4144 = vmatprep.subr.mxu0 0.0
        %4145 = vmatpush1.msra.mxu0 0.0
        %4146 = vmatprep.subr.mxu0 0.0
        %4147 = vmatpush1.msra.mxu0 0.0
        %4148 = vmatprep.subr.mxu0 0.0
        %4149 = vmatpush1.msra.mxu0 0.0
        %4150 = vmatprep.subr.mxu0 0.0
        %4151 = vmatpush1.msra.mxu0 0.0
        %4152 = vmatprep.subr.mxu0 0.0
        %4153 = vmatpush1.msra.mxu0 0.0
        %4154 = vmatprep.subr.mxu0 0.0
        %4155 = vmatpush1.msra.mxu0 0.0
        %4156 = vmatprep.subr.mxu0 0.0
        %4157 = vmatpush1.msra.mxu0 0.0
        %4158 = vmatprep.subr.mxu0 0.0
        %4159 = vmatpush1.msra.mxu0 0.0
        %4160 = vmatprep.subr.mxu0 0.0
        %4161 = vmatpush1.msra.mxu0 0.0
        %4162 = vmatprep.subr.mxu0 0.0
        %4163 = vmatpush1.msra.mxu0 0.0
        %4164 = vmatprep.subr.mxu0 0.0
        %4165 = vmatpush1.msra.mxu0 0.0
        %4166 = vmatprep.subr.mxu0 0.0
        %4167 = vmatpush1.msra.mxu0 0.0
        %4168 = vmatprep.subr.mxu0 0.0
        %4169 = vmatpush1.msra.mxu0 0.0
        %4170 = vmatprep.subr.mxu0 0.0
        %4171 = vmatpush1.msra.mxu0 0.0
        %4172 = vmatprep.subr.mxu0 0.0
        %4173 = vmatpush1.msra.mxu0 0.0
        %4174 = vmatprep.subr.mxu0 0.0
        %4175 = vmatpush1.msra.mxu0 0.0
        %4176 = vmatprep.subr.mxu0 0.0
        %4177 = vmatpush1.msra.mxu0 0.0
        %4178 = vmatprep.subr.mxu0 0.0
        %4179 = vmatpush1.msra.mxu0 0.0
        %4180 = vmatprep.subr.mxu0 0.0
        %4181 = vmatpush1.msra.mxu0 0.0
        %4182 = vmatprep.subr.mxu0 0.0
        %4183 = vmatpush1.msra.mxu0 0.0
        %4184 = vmatprep.subr.mxu0 0.0
        %4185 = vmatpush1.msra.mxu0 0.0
        %4186 = vmatprep.subr.mxu0 0.0
        %4187 = vmatpush1.msra.mxu0 0.0
        %4188 = vmatprep.subr.mxu0 0.0
        %4189 = vmatpush1.msra.mxu0 0.0
        %4190 = vmatprep.subr.mxu0 0.0
        %4191 = vmatpush1.msra.mxu0 0.0
        %4192 = vmatprep.subr.mxu0 0.0
        %4193 = vmatpush1.msra.mxu0 0.0
        %4194 = vmatprep.subr.mxu0 0.0
        %4195 = vmatpush1.msra.mxu0 0.0
        %4196 = vmatprep.subr.mxu0 0.0
        %4197 = vmatpush1.msra.mxu0 0.0
        %4198 = vmatprep.subr.mxu0 0.0
        %4199 = vmatpush1.msra.mxu0 0.0
        %4200 = vmatprep.subr.mxu0 0.0
        %4201 = vmatpush1.msra.mxu0 0.0
        %4202 = vmatprep.mubr.f32.mxu0 0.0
        %4203 = vmatmul.mubr.f32.gmra.mrb[0].mxu0 %v4136
        %v4204 = vpop.f32.mrb[0].mxu0
        %v4205 = vadd.f32 0.0, %v4204
        %v4206 = vpop.f32.mrb[0].mxu0
        %4207 = vdwg.mxu0
        %v4209 = vsel %vm1216, %v3988, 0
        %4211 = vmatprep.subr.mxu0 0.0
        %4212 = vmatpush1.msra.mxu0 %v3638
        %4213 = vmatprep.subr.mxu0 0.0
        %4214 = vmatpush1.msra.mxu0 0.0
        %4215 = vmatprep.subr.mxu0 0.0
        %4216 = vmatpush1.msra.mxu0 0.0
        %4217 = vmatprep.subr.mxu0 0.0
        %4218 = vmatpush1.msra.mxu0 0.0
        %4219 = vmatprep.subr.mxu0 0.0
        %4220 = vmatpush1.msra.mxu0 0.0
        %4221 = vmatprep.subr.mxu0 0.0
        %4222 = vmatpush1.msra.mxu0 0.0
        %4223 = vmatprep.subr.mxu0 0.0
        %4224 = vmatpush1.msra.mxu0 0.0
        %4225 = vmatprep.subr.mxu0 0.0
        %4226 = vmatpush1.msra.mxu0 0.0
        %4227 = vmatprep.subr.mxu0 0.0
        %4228 = vmatpush1.msra.mxu0 0.0
        %4229 = vmatprep.subr.mxu0 0.0
        %4230 = vmatpush1.msra.mxu0 0.0
        %4231 = vmatprep.subr.mxu0 0.0
        %4232 = vmatpush1.msra.mxu0 0.0
        %4233 = vmatprep.subr.mxu0 0.0
        %4234 = vmatpush1.msra.mxu0 0.0
        %4235 = vmatprep.subr.mxu0 0.0
        %4236 = vmatpush1.msra.mxu0 0.0
        %4237 = vmatprep.subr.mxu0 0.0
        %4238 = vmatpush1.msra.mxu0 0.0
        %4239 = vmatprep.subr.mxu0 0.0
        %4240 = vmatpush1.msra.mxu0 0.0
        %4241 = vmatprep.subr.mxu0 0.0
        %4242 = vmatpush1.msra.mxu0 0.0
        %4243 = vmatprep.subr.mxu0 0.0
        %4244 = vmatpush1.msra.mxu0 0.0
        %4245 = vmatprep.subr.mxu0 0.0
        %4246 = vmatpush1.msra.mxu0 0.0
        %4247 = vmatprep.subr.mxu0 0.0
        %4248 = vmatpush1.msra.mxu0 0.0
        %4249 = vmatprep.subr.mxu0 0.0
        %4250 = vmatpush1.msra.mxu0 0.0
        %4251 = vmatprep.subr.mxu0 0.0
        %4252 = vmatpush1.msra.mxu0 0.0
        %4253 = vmatprep.subr.mxu0 0.0
        %4254 = vmatpush1.msra.mxu0 0.0
        %4255 = vmatprep.subr.mxu0 0.0
        %4256 = vmatpush1.msra.mxu0 0.0
        %4257 = vmatprep.subr.mxu0 0.0
        %4258 = vmatpush1.msra.mxu0 0.0
        %4259 = vmatprep.subr.mxu0 0.0
        %4260 = vmatpush1.msra.mxu0 0.0
        %4261 = vmatprep.subr.mxu0 0.0
        %4262 = vmatpush1.msra.mxu0 0.0
        %4263 = vmatprep.subr.mxu0 0.0
        %4264 = vmatpush1.msra.mxu0 0.0
        %4265 = vmatprep.subr.mxu0 0.0
        %4266 = vmatpush1.msra.mxu0 0.0
        %4267 = vmatprep.subr.mxu0 0.0
        %4268 = vmatpush1.msra.mxu0 0.0
        %4269 = vmatprep.subr.mxu0 0.0
        %4270 = vmatpush1.msra.mxu0 0.0
        %4271 = vmatprep.subr.mxu0 0.0
        %4272 = vmatpush1.msra.mxu0 0.0
        %4273 = vmatprep.subr.mxu0 0.0
        %4274 = vmatpush1.msra.mxu0 0.0
        %4275 = vmatprep.mubr.f32.mxu0 0.0
        %4276 = vmatmul.mubr.f32.gmra.mrb[0].mxu0 %v4209
        %v4277 = vpop.f32.mrb[0].mxu0
        %v4278 = vadd.f32 0.0, %v4277
        %v4279 = vpop.f32.mrb[0].mxu0
        %4280 = vdwg.mxu0
        %s4281 = scalar_lea.vmem [#allocation5], 32
        %v4282 = vld [vmem:[%s4281] sm:$0xff]
        %v4283 = vld [vmem:[%s4281 + $0x8] sm:$0xff]
        %v4284 = vld [vmem:[%s4281 + $0x10] sm:$0xff]
        %v4285 = vld [vmem:[%s4281 + $0x18] sm:$0xff]
        %v4287 = vsel %vm1216, %v4059, 0
        %4289 = vmatprep.subr.mxu0 0.0
        %4290 = vmatpush1.msra.mxu0 %v4282
        %4291 = vmatprep.subr.mxu0 0.0
        %4292 = vmatpush1.msra.mxu0 0.0
        %4293 = vmatprep.subr.mxu0 0.0
        %4294 = vmatpush1.msra.mxu0 0.0
        %4295 = vmatprep.subr.mxu0 0.0
        %4296 = vmatpush1.msra.mxu0 0.0
        %4297 = vmatprep.subr.mxu0 0.0
        %4298 = vmatpush1.msra.mxu0 0.0
        %4299 = vmatprep.subr.mxu0 0.0
        %4300 = vmatpush1.msra.mxu0 0.0
        %4301 = vmatprep.subr.mxu0 0.0
        %4302 = vmatpush1.msra.mxu0 0.0
        %4303 = vmatprep.subr.mxu0 0.0
        %4304 = vmatpush1.msra.mxu0 0.0
        %4305 = vmatprep.subr.mxu0 0.0
        %4306 = vmatpush1.msra.mxu0 0.0
        %4307 = vmatprep.subr.mxu0 0.0
        %4308 = vmatpush1.msra.mxu0 0.0
        %4309 = vmatprep.subr.mxu0 0.0
        %4310 = vmatpush1.msra.mxu0 0.0
        %4311 = vmatprep.subr.mxu0 0.0
        %4312 = vmatpush1.msra.mxu0 0.0
        %4313 = vmatprep.subr.mxu0 0.0
        %4314 = vmatpush1.msra.mxu0 0.0
        %4315 = vmatprep.subr.mxu0 0.0
        %4316 = vmatpush1.msra.mxu0 0.0
        %4317 = vmatprep.subr.mxu0 0.0
        %4318 = vmatpush1.msra.mxu0 0.0
        %4319 = vmatprep.subr.mxu0 0.0
        %4320 = vmatpush1.msra.mxu0 0.0
        %4321 = vmatprep.subr.mxu0 0.0
        %4322 = vmatpush1.msra.mxu0 0.0
        %4323 = vmatprep.subr.mxu0 0.0
        %4324 = vmatpush1.msra.mxu0 0.0
        %4325 = vmatprep.subr.mxu0 0.0
        %4326 = vmatpush1.msra.mxu0 0.0
        %4327 = vmatprep.subr.mxu0 0.0
        %4328 = vmatpush1.msra.mxu0 0.0
        %4329 = vmatprep.subr.mxu0 0.0
        %4330 = vmatpush1.msra.mxu0 0.0
        %4331 = vmatprep.subr.mxu0 0.0
        %4332 = vmatpush1.msra.mxu0 0.0
        %4333 = vmatprep.subr.mxu0 0.0
        %4334 = vmatpush1.msra.mxu0 0.0
        %4335 = vmatprep.subr.mxu0 0.0
        %4336 = vmatpush1.msra.mxu0 0.0
        %4337 = vmatprep.subr.mxu0 0.0
        %4338 = vmatpush1.msra.mxu0 0.0
        %4339 = vmatprep.subr.mxu0 0.0
        %4340 = vmatpush1.msra.mxu0 0.0
        %4341 = vmatprep.subr.mxu0 0.0
        %4342 = vmatpush1.msra.mxu0 0.0
        %4343 = vmatprep.subr.mxu0 0.0
        %4344 = vmatpush1.msra.mxu0 0.0
        %4345 = vmatprep.subr.mxu0 0.0
        %4346 = vmatpush1.msra.mxu0 0.0
        %4347 = vmatprep.subr.mxu0 0.0
        %4348 = vmatpush1.msra.mxu0 0.0
        %4349 = vmatprep.subr.mxu0 0.0
        %4350 = vmatpush1.msra.mxu0 0.0
        %4351 = vmatprep.subr.mxu0 0.0
        %4352 = vmatpush1.msra.mxu0 0.0
        %4353 = vmatprep.mubr.f32.mxu0 0.0
        %4354 = vmatmul.mubr.f32.gmra.mrb[0].mxu0 %v4287
        %v4355 = vpop.f32.mrb[0].mxu0
        %v4356 = vadd.f32 0.0, %v4355
        %v4357 = vpop.f32.mrb[0].mxu0
        %4358 = vdwg.mxu0
        %v4360 = vsel %vm1216, %v4132, 0
        %4362 = vmatprep.subr.mxu0 0.0
        %4363 = vmatpush1.msra.mxu0 %v4283
        %4364 = vmatprep.subr.mxu0 0.0
        %4365 = vmatpush1.msra.mxu0 0.0
        %4366 = vmatprep.subr.mxu0 0.0
        %4367 = vmatpush1.msra.mxu0 0.0
        %4368 = vmatprep.subr.mxu0 0.0
        %4369 = vmatpush1.msra.mxu0 0.0
        %4370 = vmatprep.subr.mxu0 0.0
        %4371 = vmatpush1.msra.mxu0 0.0
        %4372 = vmatprep.subr.mxu0 0.0
        %4373 = vmatpush1.msra.mxu0 0.0
        %4374 = vmatprep.subr.mxu0 0.0
        %4375 = vmatpush1.msra.mxu0 0.0
        %4376 = vmatprep.subr.mxu0 0.0
        %4377 = vmatpush1.msra.mxu0 0.0
        %4378 = vmatprep.subr.mxu0 0.0
        %4379 = vmatpush1.msra.mxu0 0.0
        %4380 = vmatprep.subr.mxu0 0.0
        %4381 = vmatpush1.msra.mxu0 0.0
        %4382 = vmatprep.subr.mxu0 0.0
        %4383 = vmatpush1.msra.mxu0 0.0
        %4384 = vmatprep.subr.mxu0 0.0
        %4385 = vmatpush1.msra.mxu0 0.0
        %4386 = vmatprep.subr.mxu0 0.0
        %4387 = vmatpush1.msra.mxu0 0.0
        %4388 = vmatprep.subr.mxu0 0.0
        %4389 = vmatpush1.msra.mxu0 0.0
        %4390 = vmatprep.subr.mxu0 0.0
        %4391 = vmatpush1.msra.mxu0 0.0
        %4392 = vmatprep.subr.mxu0 0.0
        %4393 = vmatpush1.msra.mxu0 0.0
        %4394 = vmatprep.subr.mxu0 0.0
        %4395 = vmatpush1.msra.mxu0 0.0
        %4396 = vmatprep.subr.mxu0 0.0
        %4397 = vmatpush1.msra.mxu0 0.0
        %4398 = vmatprep.subr.mxu0 0.0
        %4399 = vmatpush1.msra.mxu0 0.0
        %4400 = vmatprep.subr.mxu0 0.0
        %4401 = vmatpush1.msra.mxu0 0.0
        %4402 = vmatprep.subr.mxu0 0.0
        %4403 = vmatpush1.msra.mxu0 0.0
        %4404 = vmatprep.subr.mxu0 0.0
        %4405 = vmatpush1.msra.mxu0 0.0
        %4406 = vmatprep.subr.mxu0 0.0
        %4407 = vmatpush1.msra.mxu0 0.0
        %4408 = vmatprep.subr.mxu0 0.0
        %4409 = vmatpush1.msra.mxu0 0.0
        %4410 = vmatprep.subr.mxu0 0.0
        %4411 = vmatpush1.msra.mxu0 0.0
        %4412 = vmatprep.subr.mxu0 0.0
        %4413 = vmatpush1.msra.mxu0 0.0
        %4414 = vmatprep.subr.mxu0 0.0
        %4415 = vmatpush1.msra.mxu0 0.0
        %4416 = vmatprep.subr.mxu0 0.0
        %4417 = vmatpush1.msra.mxu0 0.0
        %4418 = vmatprep.subr.mxu0 0.0
        %4419 = vmatpush1.msra.mxu0 0.0
        %4420 = vmatprep.subr.mxu0 0.0
        %4421 = vmatpush1.msra.mxu0 0.0
        %4422 = vmatprep.subr.mxu0 0.0
        %4423 = vmatpush1.msra.mxu0 0.0
        %4424 = vmatprep.subr.mxu0 0.0
        %4425 = vmatpush1.msra.mxu0 0.0
        %4426 = vmatprep.mubr.f32.mxu0 0.0
        %4427 = vmatmul.mubr.f32.gmra.mrb[0].mxu0 %v4360
        %v4428 = vpop.f32.mrb[0].mxu0
        %v4429 = vadd.f32 0.0, %v4428
        %v4430 = vpop.f32.mrb[0].mxu0
        %4431 = vdwg.mxu0
        %v4433 = vsel %vm1216, %v4205, 0
        %4435 = vmatprep.subr.mxu0 0.0
        %4436 = vmatpush1.msra.mxu0 %v4284
        %4437 = vmatprep.subr.mxu0 0.0
        %4438 = vmatpush1.msra.mxu0 0.0
        %4439 = vmatprep.subr.mxu0 0.0
        %4440 = vmatpush1.msra.mxu0 0.0
        %4441 = vmatprep.subr.mxu0 0.0
        %4442 = vmatpush1.msra.mxu0 0.0
        %4443 = vmatprep.subr.mxu0 0.0
        %4444 = vmatpush1.msra.mxu0 0.0
        %4445 = vmatprep.subr.mxu0 0.0
        %4446 = vmatpush1.msra.mxu0 0.0
        %4447 = vmatprep.subr.mxu0 0.0
        %4448 = vmatpush1.msra.mxu0 0.0
        %4449 = vmatprep.subr.mxu0 0.0
        %4450 = vmatpush1.msra.mxu0 0.0
        %4451 = vmatprep.subr.mxu0 0.0
        %4452 = vmatpush1.msra.mxu0 0.0
        %4453 = vmatprep.subr.mxu0 0.0
        %4454 = vmatpush1.msra.mxu0 0.0
        %4455 = vmatprep.subr.mxu0 0.0
        %4456 = vmatpush1.msra.mxu0 0.0
        %4457 = vmatprep.subr.mxu0 0.0
        %4458 = vmatpush1.msra.mxu0 0.0
        %4459 = vmatprep.subr.mxu0 0.0
        %4460 = vmatpush1.msra.mxu0 0.0
        %4461 = vmatprep.subr.mxu0 0.0
        %4462 = vmatpush1.msra.mxu0 0.0
        %4463 = vmatprep.subr.mxu0 0.0
        %4464 = vmatpush1.msra.mxu0 0.0
        %4465 = vmatprep.subr.mxu0 0.0
        %4466 = vmatpush1.msra.mxu0 0.0
        %4467 = vmatprep.subr.mxu0 0.0
        %4468 = vmatpush1.msra.mxu0 0.0
        %4469 = vmatprep.subr.mxu0 0.0
        %4470 = vmatpush1.msra.mxu0 0.0
        %4471 = vmatprep.subr.mxu0 0.0
        %4472 = vmatpush1.msra.mxu0 0.0
        %4473 = vmatprep.subr.mxu0 0.0
        %4474 = vmatpush1.msra.mxu0 0.0
        %4475 = vmatprep.subr.mxu0 0.0
        %4476 = vmatpush1.msra.mxu0 0.0
        %4477 = vmatprep.subr.mxu0 0.0
        %4478 = vmatpush1.msra.mxu0 0.0
        %4479 = vmatprep.subr.mxu0 0.0
        %4480 = vmatpush1.msra.mxu0 0.0
        %4481 = vmatprep.subr.mxu0 0.0
        %4482 = vmatpush1.msra.mxu0 0.0
        %4483 = vmatprep.subr.mxu0 0.0
        %4484 = vmatpush1.msra.mxu0 0.0
        %4485 = vmatprep.subr.mxu0 0.0
        %4486 = vmatpush1.msra.mxu0 0.0
        %4487 = vmatprep.subr.mxu0 0.0
        %4488 = vmatpush1.msra.mxu0 0.0
        %4489 = vmatprep.subr.mxu0 0.0
        %4490 = vmatpush1.msra.mxu0 0.0
        %4491 = vmatprep.subr.mxu0 0.0
        %4492 = vmatpush1.msra.mxu0 0.0
        %4493 = vmatprep.subr.mxu0 0.0
        %4494 = vmatpush1.msra.mxu0 0.0
        %4495 = vmatprep.subr.mxu0 0.0
        %4496 = vmatpush1.msra.mxu0 0.0
        %4497 = vmatprep.subr.mxu0 0.0
        %4498 = vmatpush1.msra.mxu0 0.0
        %4499 = vmatprep.mubr.f32.mxu0 0.0
        %4500 = vmatmul.mubr.f32.gmra.mrb[0].mxu0 %v4433
        %v4501 = vpop.f32.mrb[0].mxu0
        %v4502 = vadd.f32 0.0, %v4501
        %v4503 = vpop.f32.mrb[0].mxu0
        %4504 = vdwg.mxu0
        %v4506 = vsel %vm1216, %v4278, 0
        %4508 = vmatprep.subr.mxu0 0.0
        %4509 = vmatpush1.msra.mxu0 %v4285
        %4510 = vmatprep.subr.mxu0 0.0
        %4511 = vmatpush1.msra.mxu0 0.0
        %4512 = vmatprep.subr.mxu0 0.0
        %4513 = vmatpush1.msra.mxu0 0.0
        %4514 = vmatprep.subr.mxu0 0.0
        %4515 = vmatpush1.msra.mxu0 0.0
        %4516 = vmatprep.subr.mxu0 0.0
        %4517 = vmatpush1.msra.mxu0 0.0
        %4518 = vmatprep.subr.mxu0 0.0
        %4519 = vmatpush1.msra.mxu0 0.0
        %4520 = vmatprep.subr.mxu0 0.0
        %4521 = vmatpush1.msra.mxu0 0.0
        %4522 = vmatprep.subr.mxu0 0.0
        %4523 = vmatpush1.msra.mxu0 0.0
        %4524 = vmatprep.subr.mxu0 0.0
        %4525 = vmatpush1.msra.mxu0 0.0
        %4526 = vmatprep.subr.mxu0 0.0
        %4527 = vmatpush1.msra.mxu0 0.0
        %4528 = vmatprep.subr.mxu0 0.0
        %4529 = vmatpush1.msra.mxu0 0.0
        %4530 = vmatprep.subr.mxu0 0.0
        %4531 = vmatpush1.msra.mxu0 0.0
        %4532 = vmatprep.subr.mxu0 0.0
        %4533 = vmatpush1.msra.mxu0 0.0
        %4534 = vmatprep.subr.mxu0 0.0
        %4535 = vmatpush1.msra.mxu0 0.0
        %4536 = vmatprep.subr.mxu0 0.0
        %4537 = vmatpush1.msra.mxu0 0.0
        %4538 = vmatprep.subr.mxu0 0.0
        %4539 = vmatpush1.msra.mxu0 0.0
        %4540 = vmatprep.subr.mxu0 0.0
        %4541 = vmatpush1.msra.mxu0 0.0
        %4542 = vmatprep.subr.mxu0 0.0
        %4543 = vmatpush1.msra.mxu0 0.0
        %4544 = vmatprep.subr.mxu0 0.0
        %4545 = vmatpush1.msra.mxu0 0.0
        %4546 = vmatprep.subr.mxu0 0.0
        %4547 = vmatpush1.msra.mxu0 0.0
        %4548 = vmatprep.subr.mxu0 0.0
        %4549 = vmatpush1.msra.mxu0 0.0
        %4550 = vmatprep.subr.mxu0 0.0
        %4551 = vmatpush1.msra.mxu0 0.0
        %4552 = vmatprep.subr.mxu0 0.0
        %4553 = vmatpush1.msra.mxu0 0.0
        %4554 = vmatprep.subr.mxu0 0.0
        %4555 = vmatpush1.msra.mxu0 0.0
        %4556 = vmatprep.subr.mxu0 0.0
        %4557 = vmatpush1.msra.mxu0 0.0
        %4558 = vmatprep.subr.mxu0 0.0
        %4559 = vmatpush1.msra.mxu0 0.0
        %4560 = vmatprep.subr.mxu0 0.0
        %4561 = vmatpush1.msra.mxu0 0.0
        %4562 = vmatprep.subr.mxu0 0.0
        %4563 = vmatpush1.msra.mxu0 0.0
        %4564 = vmatprep.subr.mxu0 0.0
        %4565 = vmatpush1.msra.mxu0 0.0
        %4566 = vmatprep.subr.mxu0 0.0
        %4567 = vmatpush1.msra.mxu0 0.0
        %4568 = vmatprep.subr.mxu0 0.0
        %4569 = vmatpush1.msra.mxu0 0.0
        %4570 = vmatprep.subr.mxu0 0.0
        %4571 = vmatpush1.msra.mxu0 0.0
        %4572 = vmatprep.mubr.f32.mxu0 0.0
        %4573 = vmatmul.mubr.f32.gmra.mrb[0].mxu0 %v4506
        %v4574 = vpop.f32.mrb[0].mxu0
        %v4575 = vadd.f32 0.0, %v4574
        %v4576 = vpop.f32.mrb[0].mxu0
        %4577 = vdwg.mxu0
        %v4578 = vadd.f32 %v4356, %v4429
        %v4579 = vadd.f32 %v4578, %v4502
        %v4580 = vadd.f32 %v4579, %v4575
        %v4581 = vadd.f32 %v2721, %v4580
        %v4582 = vlaneseq
        %v4583 = vshrl.u32 %v4582, 7
        %v4584 = vsub.s32 2, %v4583
        %v4585 = vrot.slane %v2723, %v4584
        %v4586 = vadd.f32 %v4581, %v4585
        %v4587 = vsel %vm298, %v4586, 0.0
        %4588 = vadd.xlane.f32.xlu0 %v4587
        %v4589 = vpop.xlane.xlu0 %4588
        %v4590 = vmul.f32 %v4589, %v302
        %v4591 = vsub.f32 %v4586, %v4590
        %v4592 = vmul.f32 %v4591, %v4591
        %v4593 = vsel %vm298, %v4592, 0.0
        %4594 = vadd.xlane.f32.xlu0 %v4593
        %v4595 = vpop.xlane.xlu0 %4594
        %v4596 = vmul.f32 %v4595, %v302
        %v4597 = vadd.f32 %v4596, 1e-05
        %v4598 = vrsqrt.pop %v4597
        %v4599 = vmul.f32 %v4591, %v4598
        %v4600 = vlaneseq
        %v4601 = vshrl.u32 %v4600, 7
        %v4602 = vsub.s32 3, %v4601
        %v4603 = vrot.slane %v2723, %v4602
        %v4604 = vmul.f32 %v4599, %v4603
        %v4605 = vlaneseq
        %v4606 = vshrl.u32 %v4605, 7
        %v4607 = vsub.s32 4, %v4606
        %v4608 = vrot.slane %v2723, %v4607
        %v4609 = vadd.f32 %v4604, %v4608
        %s4610 = scalar_lea.vmem [#allocation7], 32
        %v4611 = vld [vmem:[%s4610] sm:$0xff]
        %v4612 = vld [vmem:[%s4610 + $0x8] sm:$0xff]
        %v4613 = vld [vmem:[%s4610 + $0x10] sm:$0xff]
        %v4614 = vld [vmem:[%s4610 + $0x18] sm:$0xff]
        %v4615 = vlaneseq
        %v4616 = vshrl.u32 %v4615, 7
        %v4617 = vsub.s32 5, %v4616
        %v4618 = vrot.slane %v2723, %v4617
        %v4620 = vsel %vm298, %v4609, 0
        %4622 = vmatprep.subr.mxu0 0.0
        %4623 = vmatpush1.msra.mxu0 %v4611
        %4624 = vmatprep.subr.mxu0 0.0
        %4625 = vmatpush1.msra.mxu0 %v4612
        %4626 = vmatprep.subr.mxu0 0.0
        %4627 = vmatpush1.msra.mxu0 %v4613
        %4628 = vmatprep.subr.mxu0 0.0
        %4629 = vmatpush1.msra.mxu0 %v4614
        %4630 = vmatprep.subr.mxu0 0.0
        %4631 = vmatpush1.msra.mxu0 0.0
        %4632 = vmatprep.subr.mxu0 0.0
        %4633 = vmatpush1.msra.mxu0 0.0
        %4634 = vmatprep.subr.mxu0 0.0
        %4635 = vmatpush1.msra.mxu0 0.0
        %4636 = vmatprep.subr.mxu0 0.0
        %4637 = vmatpush1.msra.mxu0 0.0
        %4638 = vmatprep.subr.mxu0 0.0
        %4639 = vmatpush1.msra.mxu0 0.0
        %4640 = vmatprep.subr.mxu0 0.0
        %4641 = vmatpush1.msra.mxu0 0.0
        %4642 = vmatprep.subr.mxu0 0.0
        %4643 = vmatpush1.msra.mxu0 0.0
        %4644 = vmatprep.subr.mxu0 0.0
        %4645 = vmatpush1.msra.mxu0 0.0
        %4646 = vmatprep.subr.mxu0 0.0
        %4647 = vmatpush1.msra.mxu0 0.0
        %4648 = vmatprep.subr.mxu0 0.0
        %4649 = vmatpush1.msra.mxu0 0.0
        %4650 = vmatprep.subr.mxu0 0.0
        %4651 = vmatpush1.msra.mxu0 0.0
        %4652 = vmatprep.subr.mxu0 0.0
        %4653 = vmatpush1.msra.mxu0 0.0
        %4654 = vmatprep.subr.mxu0 0.0
        %4655 = vmatpush1.msra.mxu0 0.0
        %4656 = vmatprep.subr.mxu0 0.0
        %4657 = vmatpush1.msra.mxu0 0.0
        %4658 = vmatprep.subr.mxu0 0.0
        %4659 = vmatpush1.msra.mxu0 0.0
        %4660 = vmatprep.subr.mxu0 0.0
        %4661 = vmatpush1.msra.mxu0 0.0
        %4662 = vmatprep.subr.mxu0 0.0
        %4663 = vmatpush1.msra.mxu0 0.0
        %4664 = vmatprep.subr.mxu0 0.0
        %4665 = vmatpush1.msra.mxu0 0.0
        %4666 = vmatprep.subr.mxu0 0.0
        %4667 = vmatpush1.msra.mxu0 0.0
        %4668 = vmatprep.subr.mxu0 0.0
        %4669 = vmatpush1.msra.mxu0 0.0
        %4670 = vmatprep.subr.mxu0 0.0
        %4671 = vmatpush1.msra.mxu0 0.0
        %4672 = vmatprep.subr.mxu0 0.0
        %4673 = vmatpush1.msra.mxu0 0.0
        %4674 = vmatprep.subr.mxu0 0.0
        %4675 = vmatpush1.msra.mxu0 0.0
        %4676 = vmatprep.subr.mxu0 0.0
        %4677 = vmatpush1.msra.mxu0 0.0
        %4678 = vmatprep.subr.mxu0 0.0
        %4679 = vmatpush1.msra.mxu0 0.0
        %4680 = vmatprep.subr.mxu0 0.0
        %4681 = vmatpush1.msra.mxu0 0.0
        %4682 = vmatprep.subr.mxu0 0.0
        %4683 = vmatpush1.msra.mxu0 0.0
        %4684 = vmatprep.subr.mxu0 0.0
        %4685 = vmatpush1.msra.mxu0 0.0
        %4686 = vmatprep.mubr.f32.mxu0 0.0
        %4687 = vmatmul.mubr.f32.gmra.mrb[0].mxu0 %v4620
        %v4688 = vpop.f32.mrb[0].mxu0
        %v4689 = vadd.f32 %v4618, %v4688
        %v4690 = vpop.f32.mrb[0].mxu0
        %4691 = vdwg.mxu0
        %v4692 = vmul.f32 %v4689, 0.5
        %v4693 = vmul.f32 %v4689, 0.044715
        %v4694 = vmul.f32 %v4693, %v4689
        %v4695 = vmul.f32 %v4694, %v4689
        %v4696 = vadd.f32 %v4689, %v4695
        %v4697 = vmul.f32 %v4696, 0.7978846
        %v4698 = vtanh.pop %v4697
        %v4699 = vadd.f32 %v4698, 1.0
        %v4700 = vmul.f32 %v4692, %v4699
        %v4701 = vmul.f32 %v4700, %v4700
        %v4702 = vsel %vm2276, %v4701, 0.0
        %v4703 = vrot.slane %v4702, 4
        %v4704 = vadd.f32 %v4702, %v4703
        %v4705 = vrot.slane %v4704, 2
        %v4706 = vadd.f32 %v4704, %v4705
        %v4707 = vrot.slane %v4706, 1
        %v4708 = vadd.f32 %v4706, %v4707
        %v4709 = vadd.f32 %v4708, 1e-06
        %v4710 = vrsqrt.pop %v4709
        %v4711 = vmul.f32 %v4700, %v4710
        %4712 = vxpose.xlu0.b32.start [1/16] %v4711, 128
        %4713 = vxpose.xlu0.b32.cont [2/16] 0.0, 128
        %4714 = vxpose.xlu0.b32.cont [3/16] 0.0, 128
        %4715 = vxpose.xlu0.b32.cont [4/16] 0.0, 128
        %4716 = vxpose.xlu0.b32.cont [5/16] 0.0, 128
        %4717 = vxpose.xlu0.b32.cont [6/16] 0.0, 128
        %4718 = vxpose.xlu0.b32.cont [7/16] 0.0, 128
        %4719 = vxpose.xlu0.b32.cont [8/16] 0.0, 128
        %4720 = vxpose.xlu0.b32.cont [9/16] 0.0, 128
        %4721 = vxpose.xlu0.b32.cont [10/16] 0.0, 128
        %4722 = vxpose.xlu0.b32.cont [11/16] 0.0, 128
        %4723 = vxpose.xlu0.b32.cont [12/16] 0.0, 128
        %4724 = vxpose.xlu0.b32.cont [13/16] 0.0, 128
        %4725 = vxpose.xlu0.b32.cont [14/16] 0.0, 128
        %4726 = vxpose.xlu0.b32.cont [15/16] 0.0, 128
        %4727 = vxpose.xlu0.b32.end [16/16] 0.0, 128
        %v4728 = vpop.trf.xlu0
        %v4729 = vpop.trf.xlu0
        %v4730 = vpop.trf.xlu0
        %v4731 = vpop.trf.xlu0
        %v4732 = vpop.trf.xlu0
        %v4733 = vpop.trf.xlu0
        %v4734 = vpop.trf.xlu0
        %v4735 = vpop.trf.xlu0
        %v4736 = vpop.trf.xlu0
        %v4737 = vpop.trf.xlu0
        %v4738 = vpop.trf.xlu0
        %v4739 = vpop.trf.xlu0
        %v4740 = vpop.trf.xlu0
        %v4741 = vpop.trf.xlu0
        %v4742 = vpop.trf.xlu0
        %v4743 = vpop.trf.xlu0
        %v4745 = vsel %vm1216, %v4728, 0
        %v4748 = vsel %vm1216, %v4729, 0
        %v4751 = vsel %vm1216, %v4730, 0
        %v4754 = vsel %vm1216, %v4731, 0
        %v4757 = vsel %vm1216, %v4732, 0
        %v4760 = vsel %vm1216, %v4733, 0
        %v4763 = vsel %vm1216, %v4734, 0
        %v4766 = vsel %vm1216, %v4735, 0
        %4768 = vmatprep.subr.mxu0 0.0
        %4769 = vmatpush1.msra.mxu0 %v4711
        %4770 = vmatprep.subr.mxu0 0.0
        %4771 = vmatpush1.msra.mxu0 0.0
        %4772 = vmatprep.subr.mxu0 0.0
        %4773 = vmatpush1.msra.mxu0 0.0
        %4774 = vmatprep.subr.mxu0 0.0
        %4775 = vmatpush1.msra.mxu0 0.0
        %4776 = vmatprep.subr.mxu0 0.0
        %4777 = vmatpush1.msra.mxu0 0.0
        %4778 = vmatprep.subr.mxu0 0.0
        %4779 = vmatpush1.msra.mxu0 0.0
        %4780 = vmatprep.subr.mxu0 0.0
        %4781 = vmatpush1.msra.mxu0 0.0
        %4782 = vmatprep.subr.mxu0 0.0
        %4783 = vmatpush1.msra.mxu0 0.0
        %4784 = vmatprep.subr.mxu0 0.0
        %4785 = vmatpush1.msra.mxu0 0.0
        %4786 = vmatprep.subr.mxu0 0.0
        %4787 = vmatpush1.msra.mxu0 0.0
        %4788 = vmatprep.subr.mxu0 0.0
        %4789 = vmatpush1.msra.mxu0 0.0
        %4790 = vmatprep.subr.mxu0 0.0
        %4791 = vmatpush1.msra.mxu0 0.0
        %4792 = vmatprep.subr.mxu0 0.0
        %4793 = vmatpush1.msra.mxu0 0.0
        %4794 = vmatprep.subr.mxu0 0.0
        %4795 = vmatpush1.msra.mxu0 0.0
        %4796 = vmatprep.subr.mxu0 0.0
        %4797 = vmatpush1.msra.mxu0 0.0
        %4798 = vmatprep.subr.mxu0 0.0
        %4799 = vmatpush1.msra.mxu0 0.0
        %4800 = vmatprep.subr.mxu0 0.0
        %4801 = vmatpush1.msra.mxu0 0.0
        %4802 = vmatprep.subr.mxu0 0.0
        %4803 = vmatpush1.msra.mxu0 0.0
        %4804 = vmatprep.subr.mxu0 0.0
        %4805 = vmatpush1.msra.mxu0 0.0
        %4806 = vmatprep.subr.mxu0 0.0
        %4807 = vmatpush1.msra.mxu0 0.0
        %4808 = vmatprep.subr.mxu0 0.0
        %4809 = vmatpush1.msra.mxu0 0.0
        %4810 = vmatprep.subr.mxu0 0.0
        %4811 = vmatpush1.msra.mxu0 0.0
        %4812 = vmatprep.subr.mxu0 0.0
        %4813 = vmatpush1.msra.mxu0 0.0
        %4814 = vmatprep.subr.mxu0 0.0
        %4815 = vmatpush1.msra.mxu0 0.0
        %4816 = vmatprep.subr.mxu0 0.0
        %4817 = vmatpush1.msra.mxu0 0.0
        %4818 = vmatprep.subr.mxu0 0.0
        %4819 = vmatpush1.msra.mxu0 0.0
        %4820 = vmatprep.subr.mxu0 0.0
        %4821 = vmatpush1.msra.mxu0 0.0
        %4822 = vmatprep.subr.mxu0 0.0
        %4823 = vmatpush1.msra.mxu0 0.0
        %4824 = vmatprep.subr.mxu0 0.0
        %4825 = vmatpush1.msra.mxu0 0.0
        %4826 = vmatprep.subr.mxu0 0.0
        %4827 = vmatpush1.msra.mxu0 0.0
        %4828 = vmatprep.subr.mxu0 0.0
        %4829 = vmatpush1.msra.mxu0 0.0
        %4830 = vmatprep.subr.mxu0 0.0
        %4831 = vmatpush1.msra.mxu0 0.0
        %4832 = vmatprep.mubr.f32.mxu0 0.0
        %4833 = vmatmul.mubr.f32.gmra.mrb[0].mxu0 %v4745
        %v4834 = vpop.f32.mrb[0].mxu0
        %v4835 = vadd.f32 0.0, %v4834
        %v4836 = vpop.f32.mrb[0].mxu0
        %4837 = vmatprep.mubr.f32.mxu0 0.0
        %4838 = vmatmul.mubr.f32.gmra.mrb[0].mxu0 %v4748
        %v4839 = vpop.f32.mrb[0].mxu0
        %v4840 = vadd.f32 0.0, %v4839
        %v4841 = vpop.f32.mrb[0].mxu0
        %4842 = vmatprep.mubr.f32.mxu0 0.0
        %4843 = vmatmul.mubr.f32.gmra.mrb[0].mxu0 %v4751
        %v4844 = vpop.f32.mrb[0].mxu0
        %v4845 = vadd.f32 0.0, %v4844
        %v4846 = vpop.f32.mrb[0].mxu0
        %4847 = vmatprep.mubr.f32.mxu0 0.0
        %4848 = vmatmul.mubr.f32.gmra.mrb[0].mxu0 %v4754
        %v4849 = vpop.f32.mrb[0].mxu0
        %v4850 = vadd.f32 0.0, %v4849
        %v4851 = vpop.f32.mrb[0].mxu0
        %4852 = vmatprep.mubr.f32.mxu0 0.0
        %4853 = vmatmul.mubr.f32.gmra.mrb[0].mxu0 %v4757
        %v4854 = vpop.f32.mrb[0].mxu0
        %v4855 = vadd.f32 0.0, %v4854
        %v4856 = vpop.f32.mrb[0].mxu0
        %4857 = vmatprep.mubr.f32.mxu0 0.0
        %4858 = vmatmul.mubr.f32.gmra.mrb[0].mxu0 %v4760
        %v4859 = vpop.f32.mrb[0].mxu0
        %v4860 = vadd.f32 0.0, %v4859
        %v4861 = vpop.f32.mrb[0].mxu0
        %4862 = vmatprep.mubr.f32.mxu0 0.0
        %4863 = vmatmul.mubr.f32.gmra.mrb[0].mxu0 %v4763
        %v4864 = vpop.f32.mrb[0].mxu0
        %v4865 = vadd.f32 0.0, %v4864
        %v4866 = vpop.f32.mrb[0].mxu0
        %4867 = vmatprep.mubr.f32.mxu0 0.0
        %4868 = vmatmul.mubr.f32.gmra.mrb[0].mxu0 %v4766
        %v4869 = vpop.f32.mrb[0].mxu0
        %v4870 = vadd.f32 0.0, %v4869
        %v4871 = vpop.f32.mrb[0].mxu0
        %4872 = vdwg.mxu0
        %v4873 = vsel %vm2276, %v4835, -inf
        %4874 = vmax.xlane.f32.xlu0 %v4873
        %v4875 = vpop.xlane.xlu0 %4874
        %v4876 = vsel %vm2276, %v4840, -inf
        %4877 = vmax.xlane.f32.xlu0 %v4876
        %v4878 = vpop.xlane.xlu0 %4877
        %v4879 = vsel %vm2276, %v4845, -inf
        %4880 = vmax.xlane.f32.xlu0 %v4879
        %v4881 = vpop.xlane.xlu0 %4880
        %v4882 = vsel %vm2276, %v4850, -inf
        %4883 = vmax.xlane.f32.xlu0 %v4882
        %v4884 = vpop.xlane.xlu0 %4883
        %v4885 = vsel %vm2276, %v4855, -inf
        %4886 = vmax.xlane.f32.xlu0 %v4885
        %v4887 = vpop.xlane.xlu0 %4886
        %v4888 = vsel %vm2276, %v4860, -inf
        %4889 = vmax.xlane.f32.xlu0 %v4888
        %v4890 = vpop.xlane.xlu0 %4889
        %v4891 = vsel %vm2276, %v4865, -inf
        %4892 = vmax.xlane.f32.xlu0 %v4891
        %v4893 = vpop.xlane.xlu0 %4892
        %v4894 = vsel %vm2276, %v4870, -inf
        %4895 = vmax.xlane.f32.xlu0 %v4894
        %v4896 = vpop.xlane.xlu0 %4895
        %v4897 = vsub.f32 %v4835, %v4875
        %v4898 = vsub.f32 %v4840, %v4878
        %v4899 = vsub.f32 %v4845, %v4881
        %v4900 = vsub.f32 %v4850, %v4884
        %v4901 = vsub.f32 %v4855, %v4887
        %v4902 = vsub.f32 %v4860, %v4890
        %v4903 = vsub.f32 %v4865, %v4893
        %v4904 = vsub.f32 %v4870, %v4896
        %v4905 = vmul.f32 %v4897, 1.442695
        %v4906 = vpow.pop %v4905
        %v4907 = vmul.f32 %v4898, 1.442695
        %v4908 = vpow.pop %v4907
        %v4909 = vmul.f32 %v4899, 1.442695
        %v4910 = vpow.pop %v4909
        %v4911 = vmul.f32 %v4900, 1.442695
        %v4912 = vpow.pop %v4911
        %v4913 = vmul.f32 %v4901, 1.442695
        %v4914 = vpow.pop %v4913
        %v4915 = vmul.f32 %v4902, 1.442695
        %v4916 = vpow.pop %v4915
        %v4917 = vmul.f32 %v4903, 1.442695
        %v4918 = vpow.pop %v4917
        %v4919 = vmul.f32 %v4904, 1.442695
        %v4920 = vpow.pop %v4919
        %v4921 = vsel %vm2276, %v4906, 0.0
        %4922 = vadd.xlane.f32.xlu0 %v4921
        %v4923 = vpop.xlane.xlu0 %4922
        %v4924 = vsel %vm2276, %v4908, 0.0
        %4925 = vadd.xlane.f32.xlu0 %v4924
        %v4926 = vpop.xlane.xlu0 %4925
        %v4927 = vsel %vm2276, %v4910, 0.0
        %4928 = vadd.xlane.f32.xlu0 %v4927
        %v4929 = vpop.xlane.xlu0 %4928
        %v4930 = vsel %vm2276, %v4912, 0.0
        %4931 = vadd.xlane.f32.xlu0 %v4930
        %v4932 = vpop.xlane.xlu0 %4931
        %v4933 = vsel %vm2276, %v4914, 0.0
        %4934 = vadd.xlane.f32.xlu0 %v4933
        %v4935 = vpop.xlane.xlu0 %4934
        %v4936 = vsel %vm2276, %v4916, 0.0
        %4937 = vadd.xlane.f32.xlu0 %v4936
        %v4938 = vpop.xlane.xlu0 %4937
        %v4939 = vsel %vm2276, %v4918, 0.0
        %4940 = vadd.xlane.f32.xlu0 %v4939
        %v4941 = vpop.xlane.xlu0 %4940
        %v4942 = vsel %vm2276, %v4920, 0.0
        %4943 = vadd.xlane.f32.xlu0 %v4942
        %v4944 = vpop.xlane.xlu0 %4943
        %v4945 = vrcp.pop %v4923
        %v4946 = vmul.f32 %v4906, %v4945
        %v4947 = vrcp.pop %v4926
        %v4948 = vmul.f32 %v4908, %v4947
        %v4949 = vrcp.pop %v4929
        %v4950 = vmul.f32 %v4910, %v4949
        %v4951 = vrcp.pop %v4932
        %v4952 = vmul.f32 %v4912, %v4951
        %v4953 = vrcp.pop %v4935
        %v4954 = vmul.f32 %v4914, %v4953
        %v4955 = vrcp.pop %v4938
        %v4956 = vmul.f32 %v4916, %v4955
        %v4957 = vrcp.pop %v4941
        %v4958 = vmul.f32 %v4918, %v4957
        %v4959 = vrcp.pop %v4944
        %v4960 = vmul.f32 %v4920, %v4959
        %v4962 = vsel %vm2276, %v4700, 0
        %v4965 = vsel %vm2276, %v4946, 0
        %v4968 = vsel %vm2276, %v4948, 0
        %v4971 = vsel %vm2276, %v4950, 0
        %v4974 = vsel %vm2276, %v4952, 0
        %v4977 = vsel %vm2276, %v4954, 0
        %v4980 = vsel %vm2276, %v4956, 0
        %v4983 = vsel %vm2276, %v4958, 0
        %v4986 = vsel %vm2276, %v4960, 0
        %4988 = vmatprep.subr.mxu0 0.0
        %4989 = vmatpush1.xpose.msra.mxu0 %v4965
        %4990 = vmatprep.subr.mxu0 0.0
        %4991 = vmatpush1.xpose.msra.mxu0 %v4968
        %4992 = vmatprep.subr.mxu0 0.0
        %4993 = vmatpush1.xpose.msra.mxu0 %v4971
        %4994 = vmatprep.subr.mxu0 0.0
        %4995 = vmatpush1.xpose.msra.mxu0 %v4974
        %4996 = vmatprep.subr.mxu0 0.0
        %4997 = vmatpush1.xpose.msra.mxu0 %v4977
        %4998 = vmatprep.subr.mxu0 0.0
        %4999 = vmatpush1.xpose.msra.mxu0 %v4980
        %5000 = vmatprep.subr.mxu0 0.0
        %5001 = vmatpush1.xpose.msra.mxu0 %v4983
        %5002 = vmatprep.subr.mxu0 0.0
        %5003 = vmatpush1.xpose.msra.mxu0 %v4986
        %5004 = vmatprep.subr.mxu0 0.0
        %5005 = vmatpush1.xpose.msra.mxu0 0.0
        %5006 = vmatprep.subr.mxu0 0.0
        %5007 = vmatpush1.xpose.msra.mxu0 0.0
        %5008 = vmatprep.subr.mxu0 0.0
        %5009 = vmatpush1.xpose.msra.mxu0 0.0
        %5010 = vmatprep.subr.mxu0 0.0
        %5011 = vmatpush1.xpose.msra.mxu0 0.0
        %5012 = vmatprep.subr.mxu0 0.0
        %5013 = vmatpush1.xpose.msra.mxu0 0.0
        %5014 = vmatprep.subr.mxu0 0.0
        %5015 = vmatpush1.xpose.msra.mxu0 0.0
        %5016 = vmatprep.subr.mxu0 0.0
        %5017 = vmatpush1.xpose.msra.mxu0 0.0
        %5018 = vmatprep.subr.mxu0 0.0
        %5019 = vmatpush1.xpose.msra.mxu0 0.0
        %5020 = vmatprep.subr.mxu0 0.0
        %5021 = vmatpush1.xpose.msra.mxu0 0.0
        %5022 = vmatprep.subr.mxu0 0.0
        %5023 = vmatpush1.xpose.msra.mxu0 0.0
        %5024 = vmatprep.subr.mxu0 0.0
        %5025 = vmatpush1.xpose.msra.mxu0 0.0
        %5026 = vmatprep.subr.mxu0 0.0
        %5027 = vmatpush1.xpose.msra.mxu0 0.0
        %5028 = vmatprep.subr.mxu0 0.0
        %5029 = vmatpush1.xpose.msra.mxu0 0.0
        %5030 = vmatprep.subr.mxu0 0.0
        %5031 = vmatpush1.xpose.msra.mxu0 0.0
        %5032 = vmatprep.subr.mxu0 0.0
        %5033 = vmatpush1.xpose.msra.mxu0 0.0
        %5034 = vmatprep.subr.mxu0 0.0
        %5035 = vmatpush1.xpose.msra.mxu0 0.0
        %5036 = vmatprep.subr.mxu0 0.0
        %5037 = vmatpush1.xpose.msra.mxu0 0.0
        %5038 = vmatprep.subr.mxu0 0.0
        %5039 = vmatpush1.xpose.msra.mxu0 0.0
        %5040 = vmatprep.subr.mxu0 0.0
        %5041 = vmatpush1.xpose.msra.mxu0 0.0
        %5042 = vmatprep.subr.mxu0 0.0
        %5043 = vmatpush1.xpose.msra.mxu0 0.0
        %5044 = vmatprep.subr.mxu0 0.0
        %5045 = vmatpush1.xpose.msra.mxu0 0.0
        %5046 = vmatprep.subr.mxu0 0.0
        %5047 = vmatpush1.xpose.msra.mxu0 0.0
        %5048 = vmatprep.subr.mxu0 0.0
        %5049 = vmatpush1.xpose.msra.mxu0 0.0
        %5050 = vmatprep.subr.mxu0 0.0
        %5051 = vmatpush1.xpose.msra.mxu0 0.0
        %5052 = vmatprep.mubr.f32.mxu0 0.0
        %5053 = vmatmul.mubr.f32.gmra.mrb[0].mxu0 %v4962
        %v5054 = vpop.f32.mrb[0].mxu0
        %v5055 = vadd.f32 0.0, %v5054
        %v5056 = vpop.f32.mrb[0].mxu0
        %5057 = vdwg.mxu0
        %v5058 = vmul.f32 %v4700, 0.5
        %v5059 = vmul.f32 %v5055, 0.5
        %v5060 = vadd.f32 %v5058, %v5059
        %s5061 = scalar_lea.vmem %s4, 64
        %v5062 = vld [vmem:[%s5061] sm:$0xff]
        %v5063 = vld [vmem:[%s5061 + $0x8] sm:$0xff]
        %v5064 = vld [vmem:[%s5061 + $0x10] sm:$0xff]
        %v5065 = vld [vmem:[%s5061 + $0x18] sm:$0xff]
        %v5066 = vld [vmem:[%s5061 + $0x20] sm:$0xff]
        %v5067 = vld [vmem:[%s5061 + $0x28] sm:$0xff]
        %v5068 = vld [vmem:[%s5061 + $0x30] sm:$0xff]
        %v5069 = vld [vmem:[%s5061 + $0x38] sm:$0xff]
        %v5070 = vlaneseq
        %v5071 = vshrl.u32 %v5070, 7
        %v5072 = vsub.s32 6, %v5071
        %v5073 = vrot.slane %v2723, %v5072
        %v5075 = vsel %vm2276, %v5060, 0
        %5077 = vmatprep.subr.mxu0 0.0
        %5078 = vmatpush1.msra.mxu0 %v5062
        %5079 = vmatprep.subr.mxu0 0.0
        %5080 = vmatpush1.msra.mxu0 %v5063
        %5081 = vmatprep.subr.mxu0 0.0
        %5082 = vmatpush1.msra.mxu0 %v5064
        %5083 = vmatprep.subr.mxu0 0.0
        %5084 = vmatpush1.msra.mxu0 %v5065
        %5085 = vmatprep.subr.mxu0 0.0
        %5086 = vmatpush1.msra.mxu0 %v5066
        %5087 = vmatprep.subr.mxu0 0.0
        %5088 = vmatpush1.msra.mxu0 %v5067
        %5089 = vmatprep.subr.mxu0 0.0
        %5090 = vmatpush1.msra.mxu0 %v5068
        %5091 = vmatprep.subr.mxu0 0.0
        %5092 = vmatpush1.msra.mxu0 %v5069
        %5093 = vmatprep.subr.mxu0 0.0
        %5094 = vmatpush1.msra.mxu0 0.0
        %5095 = vmatprep.subr.mxu0 0.0
        %5096 = vmatpush1.msra.mxu0 0.0
        %5097 = vmatprep.subr.mxu0 0.0
        %5098 = vmatpush1.msra.mxu0 0.0
        %5099 = vmatprep.subr.mxu0 0.0
        %5100 = vmatpush1.msra.mxu0 0.0
        %5101 = vmatprep.subr.mxu0 0.0
        %5102 = vmatpush1.msra.mxu0 0.0
        %5103 = vmatprep.subr.mxu0 0.0
        %5104 = vmatpush1.msra.mxu0 0.0
        %5105 = vmatprep.subr.mxu0 0.0
        %5106 = vmatpush1.msra.mxu0 0.0
        %5107 = vmatprep.subr.mxu0 0.0
        %5108 = vmatpush1.msra.mxu0 0.0
        %5109 = vmatprep.subr.mxu0 0.0
        %5110 = vmatpush1.msra.mxu0 0.0
        %5111 = vmatprep.subr.mxu0 0.0
        %5112 = vmatpush1.msra.mxu0 0.0
        %5113 = vmatprep.subr.mxu0 0.0
        %5114 = vmatpush1.msra.mxu0 0.0
        %5115 = vmatprep.subr.mxu0 0.0
        %5116 = vmatpush1.msra.mxu0 0.0
        %5117 = vmatprep.subr.mxu0 0.0
        %5118 = vmatpush1.msra.mxu0 0.0
        %5119 = vmatprep.subr.mxu0 0.0
        %5120 = vmatpush1.msra.mxu0 0.0
        %5121 = vmatprep.subr.mxu0 0.0
        %5122 = vmatpush1.msra.mxu0 0.0
        %5123 = vmatprep.subr.mxu0 0.0
        %5124 = vmatpush1.msra.mxu0 0.0
        %5125 = vmatprep.subr.mxu0 0.0
        %5126 = vmatpush1.msra.mxu0 0.0
        %5127 = vmatprep.subr.mxu0 0.0
        %5128 = vmatpush1.msra.mxu0 0.0
        %5129 = vmatprep.subr.mxu0 0.0
        %5130 = vmatpush1.msra.mxu0 0.0
        %5131 = vmatprep.subr.mxu0 0.0
        %5132 = vmatpush1.msra.mxu0 0.0
        %5133 = vmatprep.subr.mxu0 0.0
        %5134 = vmatpush1.msra.mxu0 0.0
        %5135 = vmatprep.subr.mxu0 0.0
        %5136 = vmatpush1.msra.mxu0 0.0
        %5137 = vmatprep.subr.mxu0 0.0
        %5138 = vmatpush1.msra.mxu0 0.0
        %5139 = vmatprep.subr.mxu0 0.0
        %5140 = vmatpush1.msra.mxu0 0.0
        %5141 = vmatprep.mubr.f32.mxu0 0.0
        %5142 = vmatmul.mubr.f32.gmra.mrb[0].mxu0 %v5075
        %v5143 = vpop.f32.mrb[0].mxu0
        %v5144 = vadd.f32 %v5073, %v5143
        %v5145 = vpop.f32.mrb[0].mxu0
        %5146 = vdwg.mxu0
        %v5147 = vadd.f32 %v4586, %v5144
        %5148 = vst.msk [vmem:[%s295] sm:$0xff] %vm298, %v5147
        %s5149 = sand.u32 %s163, 1
        %s5150 = scalar_lea.sflag [#allocation4], %s5149
        %s5151 = sand.u32 %s163, 1
        %s5152 = smul.addr %s5151, 8
        %s5153 = scalar_lea.vmem [#allocation8], %s5152
        // Predicated region
        $region57: #{tpu_custom_call.1} parent=43 // pred_check
          %p5154 = pneg %p173
        $region58: #{tpu_custom_call.1} parent=43 // pred_check_branch
          %5156 = sbr.rel (%p5154) target = $region60
        $region59: #{tpu_custom_call.1} parent=43 // pred_region
          %s5158 = ssub.s32 128, 128
          %5159 = vsyncadd %s5150, %s5158
          %s5160 = smul.addr %s24, 128
          %s5161 = scalar_lea.hbm %s6, %s5160
          %s5163 = sshll.u32 %s5153, 4
          %s5164 = int_to_ptr.vmem [resolvable:$true] %s5163
          %5166 = dma.vmem_to_hbm [thread:$0]  %s5164, 128, %s5161, %s5150
        $region60: #{tpu_custom_call.1} parent=43 // pred_fallthru
          _
      $region44: #{tpu_custom_call.1} parent=5 // pred_fallthru
        _
      %p5167 = scmp.le.s32.totalorder 2, %s19
      // Predicated region
      $region61: #{tpu_custom_call.1} parent=5 // pred_check
        %p5168 = pneg %p5167
      $region62: #{tpu_custom_call.1} parent=5 // pred_check_branch
        %5170 = sbr.rel (%p5168) target = $region64
      $region63: #{tpu_custom_call.1} parent=5 // pred_region
        %s5171 = ssub.s32 %s19, 2
        // Predicated region
        $region65: #{tpu_custom_call.1} parent=63 // pred_check
          %p5172 = pneg %p179
        $region66: #{tpu_custom_call.1} parent=63 // pred_check_branch
          %5174 = sbr.rel (%p5172) target = $region68
        $region67: #{tpu_custom_call.1} parent=63 // pred_region
          %s5175 = sand.u32 %s164, 1
          %s5176 = scalar_lea.sflag [#allocation4], %s5175
          %s5177 = sand.u32 %s164, 1
          %s5178 = smul.addr %s5177, 8
          %s5179 = scalar_lea.vmem [#allocation8], %s5178
          %5180 = dma.done %s5176, 128
        $region68: #{tpu_custom_call.1} parent=63 // pred_fallthru
          _
      $region64: #{tpu_custom_call.1} parent=5 // pred_fallthru
        _
    $region6: #{tpu_custom_call.1} parent=1 // loop_footer
      %s23 = sadd.s32 1, %s19
    $region7: #{tpu_custom_call.1} parent=1 // loop_footer_branch
      %18 = sbr.rel target = $region3
    $region8: #{tpu_custom_call.1} parent=1 // loop_exit
      _
    %5181 = vsyncpa [#allocation3], 1
    %s5182 = scalar_lea.sflag [#allocation3], 1
    %5183 = vsyncpa %s5182, 1
    %5184 = vsyncpa [#allocation6], 1
    %5185 = vsyncpa [#allocation4], 1
    %s5186 = scalar_lea.sflag [#allocation4], 1
    %5187 = vsyncpa %s5186, 1

</llo_original>
